<compile_context>
chip_gen: v6e
topology: v6e:2x2x1
jax: 0.10.0
libtpu: 0.0.40
codegen_flags: <defaults>
</compile_context>

<pallas_src>
import jax
import jax.numpy as jnp
from jax.experimental import pallas as pl
from jax.experimental.pallas import tpu as pltpu


def _round_up(x, m):
    return ((x + m - 1) // m) * m


def afm_kernel(emb_ref,     # (TB, F*D)          bf16  feat_emb * feat_value, flattened per example
               yf_ref,      # (1, TB)            f32   first-order + pair_bias + global bias
               sel_ref,     # (2, F*D, P_pad*D)  bf16  0/1 gather selectors: [rows ; cols]
               wproj_ref,   # (P_pad*D, P_pad*A_pad) f32  block-diagonal attention W^T
               abias_ref,   # (1, P_pad*A_pad)   f32   att_bias[p] replicated per pair block
               hsel_ref,    # (P_pad*A_pad, P_pad) f32  block-diagonal att_h reduction
               psel_ref,    # (P_pad*D, P_pad)   f32   0/1 sum-over-D pooling
               wrow_ref,    # (2, P_pad)         f32   [pair_w ; pad mask (0 / -1e30)]
               out_ref):    # (1, TB)            f32
    emb = emb_ref[...]                                                   # (TB, F*D) bf16

    # ---- pair construction fused in-kernel: two 0/1 selector matmuls + multiply ----
    p = jnp.dot(emb, sel_ref[0], preferred_element_type=jnp.float32)     # (TB, P_pad*D)
    q = jnp.dot(emb, sel_ref[1], preferred_element_type=jnp.float32)     # (TB, P_pad*D)
    pw = p * q                                                           # pair-wise interactions, f32

    # ---- attention projection: lane-dense (TB, P_pad*D) @ block-diag -> (TB, P_pad*A_pad) ----
    att = jnp.dot(pw, wproj_ref[...], preferred_element_type=jnp.float32)
    # literal PyTorch broadcast: bias indexed by the PAIR axis (requires A == P), then ReLU
    att = jnp.maximum(att + abias_ref[...], 0.0)

    # ---- att_signal[b, p] = sum_a h[a] * att[b, p, a] via block-diagonal h selector (MXU) ----
    sig = jnp.dot(att, hsel_ref[...], preferred_element_type=jnp.float32)  # (TB, P_pad)
    sig = sig + wrow_ref[1:2, :]                                           # -1e30 on padded pairs

    # ---- softmax over pairs (pairs on lanes, batch on sublanes) ----
    m = jnp.max(sig, axis=1, keepdims=True)                                # (TB, 1)
    e = jnp.exp(sig - m)
    sig = e * pl.reciprocal(jnp.sum(e, axis=1, keepdims=True), approx=True)

    # ---- attention-weighted pooling: sig[b,p] * sum_d pw[b,p,d] (sum_d as 0/1 matmul) ----
    pwsum = jnp.dot(pw, psel_ref[...], preferred_element_type=jnp.float32)  # (TB, P_pad)
    s = sig * pwsum

    # ---- Linear(num_pairs -> 1): contract pairs; result lands batch-on-lanes (1, TB) ----
    pool = jax.lax.dot_general(wrow_ref[0:1, :], s,
                               dimension_numbers=(((1,), (1,)), ((), ())),
                               preferred_element_type=jnp.float32)          # (1, TB)

    # TODO(synk): OutputLayer undefined in reference; use sigmoid for 'binary'.
    out_ref[...] = jax.nn.sigmoid(yf_ref[...] + pool)


def afm_forward(feat_index, feat_value, params, rows, cols, *, block_b=512):
    """block_b: batch tile per grid step (multiple of 128).
    Guidance: 512-1024 on all generations with the 2-D lane-dense layout
    (per-step live state ~ TB * 10 KiB + ~5 MiB of resident constants, within the
    32 MiB vmem_limit_bytes set below).  Keep nb = B_pad // TB >= 2 (and even) so
    the "parallel" grid axis shards across both v7x TensorCores."""
    B, F = feat_index.shape
    D = params["emb_table"].shape[1]
    A = params["att_weights"].shape[0]
    P = len(rows)
    assert A == P, "literal att_bias broadcast in the reference requires att_weight_dim == num_pairs"

    P_pad = _round_up(max(P, 8), 8)
    A_pad = P_pad                                    # A == P (see assert)
    FD, PD, PA = F * D, P_pad * D, P_pad * A_pad

    tb = max(128, (min(block_b, _round_up(B, 128)) // 128) * 128)   # lane-dense batch tile
    B_pad = _round_up(B, tb)
    nb = B_pad // tb

    # ---- glue (plain JAX): embedding gather + first-order; stream emb (NOT pw) ----
    fv = feat_value.astype(jnp.float32)[:, :, None]                       # (B, F, 1)
    emb = (params["emb_table"][feat_index] * fv).reshape(B, FD)           # (B, F*D) feat_emb * feat_value
    emb = jnp.pad(emb, ((0, B_pad - B), (0, 0))).astype(jnp.bfloat16)     # bf16 stream: 2x less HBM DMA

    y_first = jnp.sum(params["fo_table"][feat_index] * fv, axis=(1, 2))   # (B,)
    yf = y_first + params["pair_bias"].reshape(()) + params["bias"].reshape(())   # fold scalar biases
    yf = jnp.pad(yf, (0, B_pad - B)).reshape(1, B_pad).astype(jnp.float32)

    # ---- constant weight packing (host-side, traced once; all resident in VMEM) ----
    rows_a = jnp.asarray(rows, dtype=jnp.int32)
    cols_a = jnp.asarray(cols, dtype=jnp.int32)
    eyeD = jnp.eye(D, dtype=jnp.float32)
    eyeP = jnp.eye(P_pad, dtype=jnp.float32)

    def gather_sel(idx):
        # sel[f*D + d1, p*D + d2] = 1  iff  f == idx[p] and d1 == d2
        oh = jax.nn.one_hot(idx, F, dtype=jnp.float32)                    # (P, F)
        s = jnp.einsum("pf,de->fdpe", oh, eyeD).reshape(FD, P * D)
        return jnp.pad(s, ((0, 0), (0, PD - P * D)))

    sel = jnp.stack([gather_sel(rows_a), gather_sel(cols_a)], axis=0).astype(jnp.bfloat16)  # (2, FD, PD)

    # block-diagonal attention projection: wproj[p*D+d, p*A_pad+a] = att_weights[a, d]
    WT = jnp.pad(params["att_weights"].astype(jnp.float32).T, ((0, 0), (0, A_pad - A)))     # (D, A_pad)
    wproj = jnp.einsum("pq,da->pdqa", eyeP, WT).reshape(PD, PA)

    # literal bias broadcast: abias[p*A_pad + a] = att_bias[p]
    abias = jnp.repeat(jnp.pad(params["att_bias"].astype(jnp.float32), (0, P_pad - P)),
                       A_pad).reshape(1, PA)

    # block-diagonal h reduction: hsel[p*A_pad + a, p] = att_h[a]
    h_pad = jnp.pad(params["att_h"].astype(jnp.float32), (0, A_pad - A))
    hsel = jnp.einsum("pq,a->paq", eyeP, h_pad).reshape(PA, P_pad)

    # sum-over-D pooling: psel[p*D + d, p] = 1
    psel = jnp.einsum("pq,d->pdq", eyeP, jnp.ones((D,), jnp.float32)).reshape(PD, P_pad)

    pw_row = jnp.pad(params["pair_w"].astype(jnp.float32), (0, P_pad - P))
    mask_row = jnp.where(jnp.arange(P_pad) < P, 0.0, -1e30).astype(jnp.float32)
    wrow = jnp.stack([pw_row, mask_row], axis=0)                          # (2, P_pad)

    out = pl.pallas_call(
        afm_kernel,
        out_shape=jax.ShapeDtypeStruct((1, B_pad), jnp.float32),
        grid=(nb,),
        in_specs=[
            pl.BlockSpec((tb, FD), lambda b: (b, 0)),          # streamed emb (bf16, lane-dense)
            pl.BlockSpec((1, tb), lambda b: (0, b)),           # first-order + biases
            pl.BlockSpec((2, FD, PD), lambda b: (0, 0, 0)),    # pair-gather selectors
            pl.BlockSpec((PD, PA), lambda b: (0, 0)),          # block-diag attention W^T
            pl.BlockSpec((1, PA), lambda b: (0, 0)),           # att_bias row
            pl.BlockSpec((PA, P_pad), lambda b: (0, 0)),       # block-diag h reduction
            pl.BlockSpec((PD, P_pad), lambda b: (0, 0)),       # sum-over-D pooling
            pl.BlockSpec((2, P_pad), lambda b: (0, 0)),        # [pair_w ; pad mask]
        ],
        out_specs=pl.BlockSpec((1, tb), lambda b: (0, b)),
        compiler_params=pltpu.CompilerParams(
            dimension_semantics=("parallel",),
            vmem_limit_bytes=32 * 1024 * 1024),
    )(emb, yf, sel, wproj, abias, hsel, psel, wrow)
    return out[0, :B].reshape(B, 1)


def afm_reference(feat_index, feat_value, params, rows, cols):
    """Pure-JAX mirror of the (literal) PyTorch forward, for verification."""
    HI = jax.lax.Precision.HIGHEST
    fv = feat_value[:, :, None]
    fo = params["fo_table"][feat_index]                                   # (B, F, 1)
    y_first = jnp.sum(fo * fv, axis=1)                                    # (B, 1)
    emb = params["emb_table"][feat_index] * fv                            # (B, F, D)
    p = emb[:, jnp.array(rows), :]
    q = emb[:, jnp.array(cols), :]
    pw = p * q                                                            # (B, P, D)
    att = jnp.einsum("ad,bpd->bap", params["att_weights"], pw, precision=HI)   # (B, A, P)
    att = att + params["att_bias"]                                        # literal last-axis broadcast
    att = jnp.maximum(att, 0.0)
    sig = jnp.einsum("a,bap->bp", params["att_h"], att, precision=HI)     # (B, P)
    sig = jax.nn.softmax(sig, axis=-1)
    s = jnp.sum(sig[:, :, None] * pw, axis=2)                             # (B, P)
    pool = s @ params["pair_w"][:, None] + params["pair_bias"]            # (B, 1)
    y = params["bias"] + y_first + pool
    return jax.nn.sigmoid(y)


if __name__ == "__main__":
    # small shapes consistent with the module
    B, F, D, num_feats = 256, 8, 16, 100
    P = F * (F - 1) // 2          # num_pairs = 28
    A = P                         # att_weight_dim (== num_pairs, see literal bias broadcast)

    key = jax.random.PRNGKey(0)
    ks = jax.random.split(key, 10)
    params = {
        "fo_table":    jax.random.normal(ks[0], (num_feats, 1), jnp.float32) * 0.1,
        "emb_table":   jax.random.normal(ks[1], (num_feats, D), jnp.float32) * 0.1,
        "att_weights": jax.random.normal(ks[2], (A, D), jnp.float32),
        "att_bias":    jax.random.normal(ks[3], (A,), jnp.float32),
        "att_h":       jax.random.normal(ks[4], (A,), jnp.float32),
        "pair_w":      jax.random.normal(ks[5], (P,), jnp.float32) * 0.1,
        "pair_bias":   jax.random.normal(ks[6], (), jnp.float32),
        "bias":        jax.random.normal(ks[7], (), jnp.float32),
    }
    feat_index = jax.random.randint(ks[8], (B, F), 0, num_feats, dtype=jnp.int32)
    feat_value = jax.random.uniform(ks[9], (B, F), jnp.float32)

    pairs = [(i, j) for i in range(F) for j in range(i + 1, F)]
    rows = tuple(i for i, _ in pairs)
    cols = tuple(j for _, j in pairs)

    # block_b=128 -> 2 grid steps at B=256 (keeps both v7x TensorCores busy);
    # for production batches prefer the default block_b=512 (or 1024).
    out = afm_forward(feat_index, feat_value, params, rows, cols, block_b=128)
    out = jax.block_until_ready(out)

    ref = afm_reference(feat_index, feat_value, params, rows, cols)
    assert out.shape == (B, 1)
    # tolerance covers the bf16 input stream + MXU default precision + approx EUP reciprocal
    assert jnp.allclose(out, ref, atol=1e-3, rtol=1e-3), (out, ref)
    print("KERNEL_OK")
</pallas_src>

<mosaic_0001>
module attributes {stable_mosaic.version = 11 : i64} {
  func.func @afm_kernel(%arg0: i32, %arg1: memref<128x128xbf16, #tpu.memory_space<vmem>>, %arg2: memref<1x128xf32, #tpu.memory_space<vmem>>, %arg3: memref<2x128x512xbf16, #tpu.memory_space<vmem>>, %arg4: memref<512x1024xf32, #tpu.memory_space<vmem>>, %arg5: memref<1x1024xf32, #tpu.memory_space<vmem>>, %arg6: memref<1024x32xf32, #tpu.memory_space<vmem>>, %arg7: memref<512x32xf32, #tpu.memory_space<vmem>>, %arg8: memref<2x32xf32, #tpu.memory_space<vmem>>, %arg9: memref<1x128xf32, #tpu.memory_space<vmem>>) attributes {dimension_semantics = [#tpu.dimension_semantics<parallel>], iteration_bounds = array<i64: 2>, scalar_prefetch = 0 : i64, scratch_operands = 0 : i64, tpu.core_type = #tpu.core_type<tc>, window_params = [{transform_indices = @transform_0, window_bounds = array<i64: 128, 128>}, {transform_indices = @transform_1, window_bounds = array<i64: 1, 128>}, {pipeline_mode = #tpu.pipeline_mode<synchronous>, transform_indices = @transform_2, window_bounds = array<i64: 2, 128, 512>}, {pipeline_mode = #tpu.pipeline_mode<synchronous>, transform_indices = @transform_3, window_bounds = array<i64: 512, 1024>}, {pipeline_mode = #tpu.pipeline_mode<synchronous>, transform_indices = @transform_4, window_bounds = array<i64: 1, 1024>}, {pipeline_mode = #tpu.pipeline_mode<synchronous>, transform_indices = @transform_5, window_bounds = array<i64: 1024, 32>}, {pipeline_mode = #tpu.pipeline_mode<synchronous>, transform_indices = @transform_6, window_bounds = array<i64: 512, 32>}, {pipeline_mode = #tpu.pipeline_mode<synchronous>, transform_indices = @transform_7, window_bounds = array<i64: 2, 32>}, {transform_indices = @transform_8, window_bounds = array<i64: 1, 128>}]} {
    %c0 = arith.constant 0 : index
    %c0_0 = arith.constant 0 : index
    %0 = vector.load %arg1[%c0, %c0_0] : memref<128x128xbf16, #tpu.memory_space<vmem>>, vector<128x128xbf16>
    %c0_1 = arith.constant 0 : index
    %c0_2 = arith.constant 0 : index
    %c0_3 = arith.constant 0 : index
    %1 = vector.load %arg3[%c0_1, %c0_2, %c0_3] : memref<2x128x512xbf16, #tpu.memory_space<vmem>>, vector<1x128x512xbf16>
    %2 = vector.shape_cast %1 : vector<1x128x512xbf16> to vector<128x512xbf16>
    %cst = arith.constant dense<0.000000e+00> : vector<128x512xf32>
    %3 = tpu.matmul %0, %2, %cst {dimension_numbers = #tpu.dot_dimension_numbers<[1], [0], [0], [1], [0, 0, 1, 1], [], []>} : vector<128x128xbf16>, vector<128x512xbf16>, vector<128x512xf32> -> vector<128x512xf32>
    %c1 = arith.constant 1 : index
    %c0_4 = arith.constant 0 : index
    %c0_5 = arith.constant 0 : index
    %4 = vector.load %arg3[%c1, %c0_4, %c0_5] : memref<2x128x512xbf16, #tpu.memory_space<vmem>>, vector<1x128x512xbf16>
    %5 = vector.shape_cast %4 : vector<1x128x512xbf16> to vector<128x512xbf16>
    %cst_6 = arith.constant dense<0.000000e+00> : vector<128x512xf32>
    %6 = tpu.matmul %0, %5, %cst_6 {dimension_numbers = #tpu.dot_dimension_numbers<[1], [0], [0], [1], [0, 0, 1, 1], [], []>} : vector<128x128xbf16>, vector<128x512xbf16>, vector<128x512xf32> -> vector<128x512xf32>
    %7 = arith.mulf %3, %6 : vector<128x512xf32>
    %c0_7 = arith.constant 0 : index
    %c0_8 = arith.constant 0 : index
    %8 = vector.load %arg4[%c0_7, %c0_8] : memref<512x1024xf32, #tpu.memory_space<vmem>>, vector<512x1024xf32>
    %cst_9 = arith.constant dense<0.000000e+00> : vector<128x1024xf32>
    %9 = tpu.matmul %7, %8, %cst_9 {dimension_numbers = #tpu.dot_dimension_numbers<[1], [0], [0], [1], [0, 0, 1, 1], [], []>} : vector<128x512xf32>, vector<512x1024xf32>, vector<128x1024xf32> -> vector<128x1024xf32>
    %c0_10 = arith.constant 0 : index
    %c0_11 = arith.constant 0 : index
    %10 = vector.load %arg5[%c0_10, %c0_11] : memref<1x1024xf32, #tpu.memory_space<vmem>>, vector<1x1024xf32>
    %11 = vector.broadcast %10 : vector<1x1024xf32> to vector<128x1024xf32>
    %12 = arith.addf %9, %11 : vector<128x1024xf32>
    %cst_12 = arith.constant 0.000000e+00 : f32
    %13 = vector.broadcast %cst_12 : f32 to vector<128x1024xf32>
    %14 = arith.maximumf %12, %13 : vector<128x1024xf32>
    %c0_13 = arith.constant 0 : index
    %c0_14 = arith.constant 0 : index
    %15 = vector.load %arg6[%c0_13, %c0_14] : memref<1024x32xf32, #tpu.memory_space<vmem>>, vector<1024x32xf32>
    %cst_15 = arith.constant dense<0.000000e+00> : vector<128x32xf32>
    %16 = tpu.matmul %14, %15, %cst_15 {dimension_numbers = #tpu.dot_dimension_numbers<[1], [0], [0], [1], [0, 0, 1, 1], [], []>} : vector<128x1024xf32>, vector<1024x32xf32>, vector<128x32xf32> -> vector<128x32xf32>
    %c1_16 = arith.constant 1 : index
    %c0_17 = arith.constant 0 : index
    %17 = vector.load %arg8[%c1_16, %c0_17] : memref<2x32xf32, #tpu.memory_space<vmem>>, vector<1x32xf32>
    %18 = vector.broadcast %17 : vector<1x32xf32> to vector<128x32xf32>
    %19 = arith.addf %16, %18 : vector<128x32xf32>
    %cst_18 = arith.constant dense<0xFF800000> : vector<128xf32>
    %20 = vector.multi_reduction <maximumf>, %19, %cst_18 [1] : vector<128x32xf32> to vector<128xf32>
    %21 = vector.shape_cast %20 : vector<128xf32> to vector<128x1xf32>
    %22 = vector.broadcast %21 : vector<128x1xf32> to vector<128x32xf32>
    %23 = arith.subf %19, %22 : vector<128x32xf32>
    %24 = math.exp %23 : vector<128x32xf32>
    %cst_19 = arith.constant dense<0.000000e+00> : vector<128xf32>
    %25 = vector.multi_reduction <add>, %24, %cst_19 [1] : vector<128x32xf32> to vector<128xf32>
    %26 = vector.shape_cast %25 : vector<128xf32> to vector<128x1xf32>
    %27 = tpu.reciprocal %26 {approx = true} : vector<128x1xf32> -> vector<128x1xf32>
    %28 = vector.broadcast %27 : vector<128x1xf32> to vector<128x32xf32>
    %29 = arith.mulf %24, %28 : vector<128x32xf32>
    %c0_20 = arith.constant 0 : index
    %c0_21 = arith.constant 0 : index
    %30 = vector.load %arg7[%c0_20, %c0_21] : memref<512x32xf32, #tpu.memory_space<vmem>>, vector<512x32xf32>
    %cst_22 = arith.constant dense<0.000000e+00> : vector<128x32xf32>
    %31 = tpu.matmul %7, %30, %cst_22 {dimension_numbers = #tpu.dot_dimension_numbers<[1], [0], [0], [1], [0, 0, 1, 1], [], []>} : vector<128x512xf32>, vector<512x32xf32>, vector<128x32xf32> -> vector<128x32xf32>
    %32 = arith.mulf %29, %31 : vector<128x32xf32>
    %c0_23 = arith.constant 0 : index
    %c0_24 = arith.constant 0 : index
    %33 = vector.load %arg8[%c0_23, %c0_24] : memref<2x32xf32, #tpu.memory_space<vmem>>, vector<1x32xf32>
    %cst_25 = arith.constant dense<0.000000e+00> : vector<1x128xf32>
    %34 = tpu.matmul %33, %32, %cst_25 {dimension_numbers = #tpu.dot_dimension_numbers<[1], [1], [0], [0], [0, 0, 1, 0], [], []>} : vector<1x32xf32>, vector<128x32xf32>, vector<1x128xf32> -> vector<1x128xf32>
    %c0_26 = arith.constant 0 : index
    %c0_27 = arith.constant 0 : index
    %35 = vector.load %arg2[%c0_26, %c0_27] : memref<1x128xf32, #tpu.memory_space<vmem>>, vector<1x128xf32>
    %36 = arith.addf %35, %34 : vector<1x128xf32>
    %37 = arith.negf %36 : vector<1x128xf32>
    %38 = math.exp %37 : vector<1x128xf32>
    %cst_28 = arith.constant 1.000000e+00 : f32
    %39 = vector.broadcast %cst_28 : f32 to vector<1x128xf32>
    %40 = arith.addf %39, %38 : vector<1x128xf32>
    %41 = arith.divf %39, %40 : vector<1x128xf32>
    %c0_29 = arith.constant 0 : index
    %c0_30 = arith.constant 0 : index
    %42 = vector.load %arg9[%c0_29, %c0_30] : memref<1x128xf32, #tpu.memory_space<vmem>>, vector<1x128xf32>
    tpu.vector_store %arg9[%c0_29, %c0_30], %41 {strides = array<i32>} : memref<1x128xf32, #tpu.memory_space<vmem>>, vector<1x128xf32>,
    return
  }
  func.func @transform_0(%arg0: i32) -> (i32, i32) {
    %c0_i32 = arith.constant 0 : i32
    %c0_i32_0 = arith.constant 0 : i32
    return %arg0, %c0_i32 : i32, i32
  }
  func.func @transform_1(%arg0: i32) -> (i32, i32) {
    %c0_i32 = arith.constant 0 : i32
    %c0_i32_0 = arith.constant 0 : i32
    return %c0_i32, %arg0 : i32, i32
  }
  func.func @transform_2(%arg0: i32) -> (i32, i32, i32) {
    %c0_i32 = arith.constant 0 : i32
    %c0_i32_0 = arith.constant 0 : i32
    %c0_i32_1 = arith.constant 0 : i32
    %c0_i32_2 = arith.constant 0 : i32
    return %c0_i32, %c0_i32_0, %c0_i32_1 : i32, i32, i32
  }
  func.func @transform_3(%arg0: i32) -> (i32, i32) {
    %c0_i32 = arith.constant 0 : i32
    %c0_i32_0 = arith.constant 0 : i32
    %c0_i32_1 = arith.constant 0 : i32
    return %c0_i32, %c0_i32_0 : i32, i32
  }
  func.func @transform_4(%arg0: i32) -> (i32, i32) {
    %c0_i32 = arith.constant 0 : i32
    %c0_i32_0 = arith.constant 0 : i32
    %c0_i32_1 = arith.constant 0 : i32
    return %c0_i32, %c0_i32_0 : i32, i32
  }
  func.func @transform_5(%arg0: i32) -> (i32, i32) {
    %c0_i32 = arith.constant 0 : i32
    %c0_i32_0 = arith.constant 0 : i32
    %c0_i32_1 = arith.constant 0 : i32
    return %c0_i32, %c0_i32_0 : i32, i32
  }
  func.func @transform_6(%arg0: i32) -> (i32, i32) {
    %c0_i32 = arith.constant 0 : i32
    %c0_i32_0 = arith.constant 0 : i32
    %c0_i32_1 = arith.constant 0 : i32
    return %c0_i32, %c0_i32_0 : i32, i32
  }
  func.func @transform_7(%arg0: i32) -> (i32, i32) {
    %c0_i32 = arith.constant 0 : i32
    %c0_i32_0 = arith.constant 0 : i32
    %c0_i32_1 = arith.constant 0 : i32
    return %c0_i32, %c0_i32_0 : i32, i32
  }
  func.func @transform_8(%arg0: i32) -> (i32, i32) {
    %c0_i32 = arith.constant 0 : i32
    %c0_i32_0 = arith.constant 0 : i32
    return %c0_i32, %arg0 : i32, i32
  }
}

</mosaic_0001>

<llo_original>
// kernel: tpu_custom_call.1
$region0: #{tpu_custom_call.1}
  #allocation0 [shape = 'u32[]', space=smem, size = 0x4, offset = 0x4, fixed_abs, tag = 'smem constant byte address 0x4 - core index']
  #allocation1 [shape = 'u32[144,128]{1,0:T(1,128)}', space=vmem, size = 0x12000, scoped, tag = 'internal scratch']
  %s0 = inlined_call_operand.hbm [shape: bf16[256,128], index: 0, kind: input, shape index: {}]
  %s1 = inlined_call_operand.hbm [shape: f32[1,256], index: 1, kind: input, shape index: {}]
  %s2 = inlined_call_operand.hbm [shape: bf16[2,128,512], index: 2, kind: input, shape index: {}]
  %s3 = inlined_call_operand.hbm [shape: f32[512,1024], index: 3, kind: input, shape index: {}]
  %s4 = inlined_call_operand.hbm [shape: f32[1,1024], index: 4, kind: input, shape index: {}]
  %s5 = inlined_call_operand.vmem [shape: f32[1024,32], index: 5, kind: input, shape index: {}]
  %s6 = inlined_call_operand.vmem [shape: f32[512,32], index: 6, kind: input, shape index: {}]
  %s7 = inlined_call_operand.hbm [shape: f32[2,32], index: 7, kind: input, shape index: {}]
  %s8 = inlined_call_operand.hbm [shape: f32[1,256], index: 8, kind: output, shape index: {}]
  %s9 = sld [smem:[#allocation0]]
  $region89: #{tpu_custom_call.1} parent=0
    _
  %s11 = ssub.s32 1, %s9
  %s12 = scalar_select 0, %s11, %s9
  $region1: #{tpu_custom_call.1} parent=0
    #allocation2 [shape = 'u8[65536]{0}', space=vmem, size = 0x10000, scoped, tag = 'input window, operand 0']
    #allocation3 [shape = 's32[2]{0}', space=sflag, size = 0x8, scoped, tag = 'scoped memory for tpu_custom_call.1']
    #allocation4 [shape = 's32[2]{0}', space=sflag, size = 0x8, scoped, tag = 'scoped memory for tpu_custom_call.1']
    #allocation5 [shape = 'u8[1024]{0}', space=vmem, size = 0x400, scoped, tag = 'input window, operand 1']
    #allocation6 [shape = 's32[2]{0}', space=sflag, size = 0x8, scoped, tag = 'scoped memory for tpu_custom_call.1']
    #allocation7 [shape = 'u8[262144]{0}', space=vmem, size = 0x40000, scoped, tag = 'input window, operand 2, single buffered']
    #allocation8 [shape = 'u8[2097152]{0}', space=vmem, size = 0x200000, scoped, tag = 'input window, operand 3, single buffered']
    #allocation9 [shape = 's32[1]{0}', space=sflag, size = 0x4, scoped, tag = 'scoped memory for tpu_custom_call.1']
    #allocation10 [shape = 'u8[4096]{0}', space=vmem, size = 0x1000, scoped, tag = 'input window, operand 4, single buffered']
    #allocation11 [shape = 'u8[1024]{0}', space=vmem, size = 0x400, scoped, tag = 'input window, operand 7, single buffered']
    #allocation12 [shape = 's32[1]{0}', space=sflag, size = 0x4, scoped, tag = 'scoped memory for tpu_custom_call.1']
    #allocation13 [shape = 'u8[1024]{0}', space=vmem, size = 0x400, scoped, tag = 'output window, operand 0']
    %13 = vsyncpa [#allocation3], 0
    %s14 = scalar_lea.sflag [#allocation3], 1
    %15 = vsyncpa %s14, 0
    %16 = vsyncpa [#allocation6], 0
    %s17 = scalar_lea.sflag [#allocation6], 1
    %18 = vsyncpa %s17, 0
    %19 = vsyncpa [#allocation9], 0
    %20 = vsyncpa [#allocation12], 0
    %21 = vsyncpa [#allocation4], 0
    %s22 = scalar_lea.sflag [#allocation4], 1
    %23 = vsyncpa %s22, 0
    loop: start=0, step=1, limit=4
    $region2: #{tpu_custom_call.1} parent=1 // loop_pre_header
      _
    $region3: #{tpu_custom_call.1} parent=1 // loop_header
      %s25 = sphi 0, %s29
      %p26 = scmp.ge.s32.totalorder %s25, 4
      %s35 = sphi 0, %s37
      %s38 = sphi 0, %s35
      %s39 = sphi 0, %s38
      %s55 = sphi 0, %s39
      %s61 = sphi 0, %s63
      %s64 = sphi 0, %s61
      %s65 = sphi 0, %s64
      %s81 = sphi 0, %s65
      %s85 = sphi 0, %s85
      %s87 = sphi 0, %s85
      %s88 = sphi 0, %s87
      %s102 = sphi 0, %s88
      %s106 = sphi 0, %s106
      %s108 = sphi 0, %s106
      %s109 = sphi 0, %s108
      %s123 = sphi 0, %s109
      %s127 = sphi 0, %s127
      %s129 = sphi 0, %s127
      %s130 = sphi 0, %s129
      %s144 = sphi 0, %s130
      %s148 = sphi 0, %s148
      %s150 = sphi 0, %s148
      %s151 = sphi 0, %s150
      %s165 = sphi 0, %s151
      %s169 = sphi 0, %s169
      %s171 = sphi 0, %s169
      %s172 = sphi 0, %s171
      %s186 = sphi 0, %s172
      %s190 = sphi 0, %s190
      %s192 = sphi 0, %s190
      %s193 = sphi 0, %s192
      %s207 = sphi 0, %s193
      %s213 = sphi 0, %s215
      %s216 = sphi 0, %s213
      %s217 = sphi 0, %s216
      %s233 = sphi 0, %s217
    $region4: #{tpu_custom_call.1} parent=1 // loop_header_branch
      %28 = sbr.rel (%p26) target = $region8
    $region5: #{tpu_custom_call.1} parent=1 // loop_body
      %s30 = ssub.s32 %s25, 1
      %s31 = ssub.s32 %s25, 2
      %s32 = sadd.s32 %s25, 1
      %s33 = ssub.s32 %s25, %s32
      %p34 = scmp.eq.s32.totalorder %s33, 0
      %s36 = sadd.s32 %s35, 1
      %s37 = scalar_select %p34, %s35, %s36
      %p40 = pneg %p34
      %p41 = scmp.eq.s32.totalorder %s25, 1
      %p42 = por %p40, %p41
      %p43 = scmp.ne.s32.totalorder %s35, %s38
      %p44 = scmp.eq.s32.totalorder %s25, 0
      %p45 = por %p43, %p44
      %p46 = scmp.ne.s32.totalorder %s35, %s38
      %p47 = scmp.eq.s32.totalorder %s30, 1
      %p48 = por %p46, %p47
      %p49 = scmp.ne.s32.totalorder %s38, %s39
      %p50 = scmp.eq.s32.totalorder %s30, 0
      %p51 = por %p49, %p50
      %p52 = scmp.ne.s32.totalorder %s38, %s39
      %p53 = scmp.eq.s32.totalorder %s31, 1
      %p54 = por %p52, %p53
      %p56 = scmp.ne.s32.totalorder %s39, %s55
      %p57 = scmp.eq.s32.totalorder %s31, 0
      %p58 = por %p56, %p57
      %s59 = ssub.s32 %s25, %s32
      %p60 = scmp.eq.s32.totalorder %s59, 0
      %s62 = sadd.s32 %s61, 1
      %s63 = scalar_select %p60, %s61, %s62
      %p66 = pneg %p60
      %p67 = scmp.eq.s32.totalorder %s25, 1
      %p68 = por %p66, %p67
      %p69 = scmp.ne.s32.totalorder %s61, %s64
      %p70 = scmp.eq.s32.totalorder %s25, 0
      %p71 = por %p69, %p70
      %p72 = scmp.ne.s32.totalorder %s61, %s64
      %p73 = scmp.eq.s32.totalorder %s30, 1
      %p74 = por %p72, %p73
      %p75 = scmp.ne.s32.totalorder %s64, %s65
      %p76 = scmp.eq.s32.totalorder %s30, 0
      %p77 = por %p75, %p76
      %p78 = scmp.ne.s32.totalorder %s64, %s65
      %p79 = scmp.eq.s32.totalorder %s31, 1
      %p80 = por %p78, %p79
      %p82 = scmp.ne.s32.totalorder %s65, %s81
      %p83 = scmp.eq.s32.totalorder %s31, 0
      %p84 = por %p82, %p83
      %s86 = sadd.s32 %s85, 1
      %p89 = scmp.eq.s32.totalorder %s25, 1
      %p90 = scmp.ne.s32.totalorder %s85, %s87
      %p91 = scmp.eq.s32.totalorder %s25, 0
      %p92 = por %p90, %p91
      %p93 = scmp.ne.s32.totalorder %s85, %s87
      %p94 = scmp.eq.s32.totalorder %s30, 1
      %p95 = por %p93, %p94
      %p96 = scmp.ne.s32.totalorder %s87, %s88
      %p97 = scmp.eq.s32.totalorder %s30, 0
      %p98 = por %p96, %p97
      %p99 = scmp.ne.s32.totalorder %s87, %s88
      %p100 = scmp.eq.s32.totalorder %s31, 1
      %p101 = por %p99, %p100
      %p103 = scmp.ne.s32.totalorder %s88, %s102
      %p104 = scmp.eq.s32.totalorder %s31, 0
      %p105 = por %p103, %p104
      %s107 = sadd.s32 %s106, 1
      %p110 = scmp.eq.s32.totalorder %s25, 1
      %p111 = scmp.ne.s32.totalorder %s106, %s108
      %p112 = scmp.eq.s32.totalorder %s25, 0
      %p113 = por %p111, %p112
      %p114 = scmp.ne.s32.totalorder %s106, %s108
      %p115 = scmp.eq.s32.totalorder %s30, 1
      %p116 = por %p114, %p115
      %p117 = scmp.ne.s32.totalorder %s108, %s109
      %p118 = scmp.eq.s32.totalorder %s30, 0
      %p119 = por %p117, %p118
      %p120 = scmp.ne.s32.totalorder %s108, %s109
      %p121 = scmp.eq.s32.totalorder %s31, 1
      %p122 = por %p120, %p121
      %p124 = scmp.ne.s32.totalorder %s109, %s123
      %p125 = scmp.eq.s32.totalorder %s31, 0
      %p126 = por %p124, %p125
      %s128 = sadd.s32 %s127, 1
      %p131 = scmp.eq.s32.totalorder %s25, 1
      %p132 = scmp.ne.s32.totalorder %s127, %s129
      %p133 = scmp.eq.s32.totalorder %s25, 0
      %p134 = por %p132, %p133
      %p135 = scmp.ne.s32.totalorder %s127, %s129
      %p136 = scmp.eq.s32.totalorder %s30, 1
      %p137 = por %p135, %p136
      %p138 = scmp.ne.s32.totalorder %s129, %s130
      %p139 = scmp.eq.s32.totalorder %s30, 0
      %p140 = por %p138, %p139
      %p141 = scmp.ne.s32.totalorder %s129, %s130
      %p142 = scmp.eq.s32.totalorder %s31, 1
      %p143 = por %p141, %p142
      %p145 = scmp.ne.s32.totalorder %s130, %s144
      %p146 = scmp.eq.s32.totalorder %s31, 0
      %p147 = por %p145, %p146
      %s149 = sadd.s32 %s148, 1
      %p152 = scmp.eq.s32.totalorder %s25, 1
      %p153 = scmp.ne.s32.totalorder %s148, %s150
      %p154 = scmp.eq.s32.totalorder %s25, 0
      %p155 = por %p153, %p154
      %p156 = scmp.ne.s32.totalorder %s148, %s150
      %p157 = scmp.eq.s32.totalorder %s30, 1
      %p158 = por %p156, %p157
      %p159 = scmp.ne.s32.totalorder %s150, %s151
      %p160 = scmp.eq.s32.totalorder %s30, 0
      %p161 = por %p159, %p160
      %p162 = scmp.ne.s32.totalorder %s150, %s151
      %p163 = scmp.eq.s32.totalorder %s31, 1
      %p164 = por %p162, %p163
      %p166 = scmp.ne.s32.totalorder %s151, %s165
      %p167 = scmp.eq.s32.totalorder %s31, 0
      %p168 = por %p166, %p167
      %s170 = sadd.s32 %s169, 1
      %p173 = scmp.eq.s32.totalorder %s25, 1
      %p174 = scmp.ne.s32.totalorder %s169, %s171
      %p175 = scmp.eq.s32.totalorder %s25, 0
      %p176 = por %p174, %p175
      %p177 = scmp.ne.s32.totalorder %s169, %s171
      %p178 = scmp.eq.s32.totalorder %s30, 1
      %p179 = por %p177, %p178
      %p180 = scmp.ne.s32.totalorder %s171, %s172
      %p181 = scmp.eq.s32.totalorder %s30, 0
      %p182 = por %p180, %p181
      %p183 = scmp.ne.s32.totalorder %s171, %s172
      %p184 = scmp.eq.s32.totalorder %s31, 1
      %p185 = por %p183, %p184
      %p187 = scmp.ne.s32.totalorder %s172, %s186
      %p188 = scmp.eq.s32.totalorder %s31, 0
      %p189 = por %p187, %p188
      %s191 = sadd.s32 %s190, 1
      %p194 = scmp.eq.s32.totalorder %s25, 1
      %p195 = scmp.ne.s32.totalorder %s190, %s192
      %p196 = scmp.eq.s32.totalorder %s25, 0
      %p197 = por %p195, %p196
      %p198 = scmp.ne.s32.totalorder %s190, %s192
      %p199 = scmp.eq.s32.totalorder %s30, 1
      %p200 = por %p198, %p199
      %p201 = scmp.ne.s32.totalorder %s192, %s193
      %p202 = scmp.eq.s32.totalorder %s30, 0
      %p203 = por %p201, %p202
      %p204 = scmp.ne.s32.totalorder %s192, %s193
      %p205 = scmp.eq.s32.totalorder %s31, 1
      %p206 = por %p204, %p205
      %p208 = scmp.ne.s32.totalorder %s193, %s207
      %p209 = scmp.eq.s32.totalorder %s31, 0
      %p210 = por %p208, %p209
      %s211 = ssub.s32 %s25, %s32
      %p212 = scmp.eq.s32.totalorder %s211, 0
      %s214 = sadd.s32 %s213, 1
      %s215 = scalar_select %p212, %s213, %s214
      %p218 = pneg %p212
      %p219 = scmp.eq.s32.totalorder %s25, 1
      %p220 = por %p218, %p219
      %p221 = scmp.ne.s32.totalorder %s213, %s216
      %p222 = scmp.eq.s32.totalorder %s25, 0
      %p223 = por %p221, %p222
      %p224 = scmp.ne.s32.totalorder %s213, %s216
      %p225 = scmp.eq.s32.totalorder %s30, 1
      %p226 = por %p224, %p225
      %p227 = scmp.ne.s32.totalorder %s216, %s217
      %p228 = scmp.eq.s32.totalorder %s30, 0
      %p229 = por %p227, %p228
      %p230 = scmp.ne.s32.totalorder %s216, %s217
      %p231 = scmp.eq.s32.totalorder %s31, 1
      %p232 = por %p230, %p231
      %p234 = scmp.ne.s32.totalorder %s217, %s233
      %p235 = scmp.eq.s32.totalorder %s31, 0
      %p236 = por %p234, %p235
      %p237 = scmp.le.s32.totalorder 1, %s25
      %p238 = scmp.lt.s32.totalorder %s25, 3
      %p239 = pnand %p237, %p238
      %p240 = pneg %p239
      // Predicated region
      $region9: #{tpu_custom_call.1} parent=5 // pred_check
        _
      $region10: #{tpu_custom_call.1} parent=5 // pred_check_branch
        %242 = sbr.rel (%p239) target = $region12
      $region11: #{tpu_custom_call.1} parent=5 // pred_region
        %s243 = ssub.s32 %s25, 1
        // Predicated region
        $region13: #{tpu_custom_call.1} parent=11 // pred_check
          %p244 = pneg %p98
        $region14: #{tpu_custom_call.1} parent=11 // pred_check_branch
          %246 = sbr.rel (%p244) target = $region16
        $region15: #{tpu_custom_call.1} parent=11 // pred_region
          %s248 = ssub.s32 8192, 8192
          %249 = vsyncadd [#allocation6], %s248
          %s250 = sshll.u32 [#allocation7], 4
          %s251 = int_to_ptr.vmem [resolvable:$true] %s250
          %256 = dma.hbm_to_vmem [thread:$0]  %s2, 8192, %s251, [#allocation6], 256, 256, 16
        $region16: #{tpu_custom_call.1} parent=11 // pred_fallthru
          _
        // Predicated region
        $region17: #{tpu_custom_call.1} parent=11 // pred_check
          %p257 = pneg %p119
        $region18: #{tpu_custom_call.1} parent=11 // pred_check_branch
          %259 = sbr.rel (%p257) target = $region20
        $region19: #{tpu_custom_call.1} parent=11 // pred_region
          %s261 = ssub.s32 65536, 65536
          %262 = vsyncadd [#allocation9], %s261
          %s263 = sshll.u32 [#allocation8], 4
          %s264 = int_to_ptr.vmem [resolvable:$true] %s263
          %269 = dma.hbm_to_vmem [thread:$0]  %s3, 65536, %s264, [#allocation9], 1024, 1024, 64
        $region20: #{tpu_custom_call.1} parent=11 // pred_fallthru
          _
        // Predicated region
        $region21: #{tpu_custom_call.1} parent=11 // pred_check
          %p270 = pneg %p140
        $region22: #{tpu_custom_call.1} parent=11 // pred_check_branch
          %272 = sbr.rel (%p270) target = $region24
        $region23: #{tpu_custom_call.1} parent=11 // pred_region
          %s274 = ssub.s32 128, 128
          %275 = vsyncadd [#allocation9], %s274
          %s277 = sshll.u32 [#allocation10], 4
          %s278 = int_to_ptr.vmem [resolvable:$true] %s277
          %280 = dma.hbm_to_vmem [thread:$0]  %s4, 128, %s278, [#allocation9]
        $region24: #{tpu_custom_call.1} parent=11 // pred_fallthru
          _
        // Predicated region
        $region25: #{tpu_custom_call.1} parent=11 // pred_check
          %p281 = pneg %p161
        $region26: #{tpu_custom_call.1} parent=11 // pred_check_branch
          %283 = sbr.rel (%p281) target = $region28
        $region27: #{tpu_custom_call.1} parent=11 // pred_region
          _
        $region28: #{tpu_custom_call.1} parent=11 // pred_fallthru
          _
        // Predicated region
        $region29: #{tpu_custom_call.1} parent=11 // pred_check
          %p284 = pneg %p182
        $region30: #{tpu_custom_call.1} parent=11 // pred_check_branch
          %286 = sbr.rel (%p284) target = $region32
        $region31: #{tpu_custom_call.1} parent=11 // pred_region
          _
        $region32: #{tpu_custom_call.1} parent=11 // pred_fallthru
          _
        // Predicated region
        $region33: #{tpu_custom_call.1} parent=11 // pred_check
          %p287 = pneg %p203
        $region34: #{tpu_custom_call.1} parent=11 // pred_check_branch
          %289 = sbr.rel (%p287) target = $region36
        $region35: #{tpu_custom_call.1} parent=11 // pred_region
          %s291 = ssub.s32 32, 32
          %292 = vsyncadd [#allocation12], %s291
          %s294 = sshll.u32 [#allocation11], 4
          %s295 = int_to_ptr.vmem [resolvable:$true] %s294
          %297 = dma.hbm_to_vmem [thread:$0]  %s7, 32, %s295, [#allocation12]
        $region36: #{tpu_custom_call.1} parent=11 // pred_fallthru
          _
      $region12: #{tpu_custom_call.1} parent=5 // pred_fallthru
        _
      %p298 = scmp.lt.s32.totalorder %s25, 2
      // Predicated region
      $region37: #{tpu_custom_call.1} parent=5 // pred_check
        %p299 = pneg %p298
      $region38: #{tpu_custom_call.1} parent=5 // pred_check_branch
        %301 = sbr.rel (%p299) target = $region40
      $region39: #{tpu_custom_call.1} parent=5 // pred_region
        // Predicated region
        $region41: #{tpu_custom_call.1} parent=39 // pred_check
          %p302 = pneg %p45
        $region42: #{tpu_custom_call.1} parent=39 // pred_check_branch
          %304 = sbr.rel (%p302) target = $region44
        $region43: #{tpu_custom_call.1} parent=39 // pred_region
          %s305 = sand.u32 %s35, 1
          %s306 = scalar_lea.sflag [#allocation3], %s305
          %s307 = sand.u32 %s35, 1
          %s308 = smul.addr %s307, 64
          %s309 = scalar_lea.vmem [#allocation2], %s308
          %s310 = smul.u32 16, %s25
          %s312 = ssub.s32 1024, 1024
          %313 = vsyncadd %s306, %s312
          %s314 = smul.addr %s310, 64
          %s315 = scalar_lea.hbm %s0, %s314
          %s316 = sshll.u32 %s309, 4
          %s317 = int_to_ptr.vmem [resolvable:$true] %s316
          %322 = dma.hbm_to_vmem [thread:$0]  %s315, 1024, %s317, %s306, 64, 64, 4
        $region44: #{tpu_custom_call.1} parent=39 // pred_fallthru
          _
        // Predicated region
        $region45: #{tpu_custom_call.1} parent=39 // pred_check
          %p323 = pneg %p71
        $region46: #{tpu_custom_call.1} parent=39 // pred_check_branch
          %325 = sbr.rel (%p323) target = $region48
        $region47: #{tpu_custom_call.1} parent=39 // pred_region
          %s326 = sand.u32 %s25, 1
          %s327 = scalar_lea.sflag [#allocation6], %s326
          %s328 = sand.u32 %s61, 1
          %s329 = scalar_lea.vmem [#allocation5], %s328
          %s331 = ssub.s32 16, 16
          %332 = vsyncadd %s327, %s331
          %s333 = smul.addr %s25, 16
          %s334 = scalar_lea.hbm %s1, %s333
          %s336 = sshll.u32 %s329, 4
          %s337 = int_to_ptr.vmem [resolvable:$true] %s336
          %339 = dma.hbm_to_vmem [thread:$0]  %s334, 16, %s337, %s327
        $region48: #{tpu_custom_call.1} parent=39 // pred_fallthru
          _
      $region40: #{tpu_custom_call.1} parent=5 // pred_fallthru
        _
      %p340 = scmp.le.s32.totalorder 1, %s25
      %p341 = scmp.lt.s32.totalorder %s25, 3
      %p342 = pnand %p340, %p341
      %p343 = pneg %p342
      // Predicated region
      $region49: #{tpu_custom_call.1} parent=5 // pred_check
        _
      $region50: #{tpu_custom_call.1} parent=5 // pred_check_branch
        %345 = sbr.rel (%p342) target = $region52
      $region51: #{tpu_custom_call.1} parent=5 // pred_region
        %s346 = ssub.s32 %s25, 1
        %s347 = sand.u32 %s38, 1
        %s348 = scalar_lea.sflag [#allocation3], %s347
        %s349 = sand.u32 %s38, 1
        %s350 = smul.addr %s349, 64
        %s351 = scalar_lea.vmem [#allocation2], %s350
        // Predicated region
        $region53: #{tpu_custom_call.1} parent=51 // pred_check
          %p352 = pneg %p51
        $region54: #{tpu_custom_call.1} parent=51 // pred_check_branch
          %354 = sbr.rel (%p352) target = $region56
        $region55: #{tpu_custom_call.1} parent=51 // pred_region
          %355 = dma.done %s348, 1024
        $region56: #{tpu_custom_call.1} parent=51 // pred_fallthru
          _
        %s356 = sand.u32 %s30, 1
        %s357 = scalar_lea.sflag [#allocation6], %s356
        %s358 = sand.u32 %s64, 1
        %s359 = scalar_lea.vmem [#allocation5], %s358
        // Predicated region
        $region57: #{tpu_custom_call.1} parent=51 // pred_check
          %p360 = pneg %p77
        $region58: #{tpu_custom_call.1} parent=51 // pred_check_branch
          %362 = sbr.rel (%p360) target = $region60
        $region59: #{tpu_custom_call.1} parent=51 // pred_region
          %363 = dma.done %s357, 16
        $region60: #{tpu_custom_call.1} parent=51 // pred_fallthru
          _
        // Predicated region
        $region61: #{tpu_custom_call.1} parent=51 // pred_check
          %p364 = pneg %p98
        $region62: #{tpu_custom_call.1} parent=51 // pred_check_branch
          %366 = sbr.rel (%p364) target = $region64
        $region63: #{tpu_custom_call.1} parent=51 // pred_region
          %367 = dma.done [#allocation6], 8192
        $region64: #{tpu_custom_call.1} parent=51 // pred_fallthru
          _
        // Predicated region
        $region65: #{tpu_custom_call.1} parent=51 // pred_check
          %p368 = pneg %p119
        $region66: #{tpu_custom_call.1} parent=51 // pred_check_branch
          %370 = sbr.rel (%p368) target = $region68
        $region67: #{tpu_custom_call.1} parent=51 // pred_region
          %371 = dma.done [#allocation9], 65536
        $region68: #{tpu_custom_call.1} parent=51 // pred_fallthru
          _
        // Predicated region
        $region69: #{tpu_custom_call.1} parent=51 // pred_check
          %p372 = pneg %p140
        $region70: #{tpu_custom_call.1} parent=51 // pred_check_branch
          %374 = sbr.rel (%p372) target = $region72
        $region71: #{tpu_custom_call.1} parent=51 // pred_region
          %375 = dma.done [#allocation9], 128
        $region72: #{tpu_custom_call.1} parent=51 // pred_fallthru
          _
        // Predicated region
        $region73: #{tpu_custom_call.1} parent=51 // pred_check
          %p376 = pneg %p203
        $region74: #{tpu_custom_call.1} parent=51 // pred_check_branch
          %378 = sbr.rel (%p376) target = $region76
        $region75: #{tpu_custom_call.1} parent=51 // pred_region
          %379 = dma.done [#allocation12], 32
        $region76: #{tpu_custom_call.1} parent=51 // pred_fallthru
          _
        %s380 = sand.u32 %s38, 1
        %s381 = scalar_lea.sflag [#allocation3], %s380
        %s382 = sand.u32 %s38, 1
        %s383 = smul.addr %s382, 64
        %s384 = scalar_lea.vmem [#allocation2], %s383
        %p385 = pneg %p51
        %p386 = pneg %p48
        %s387 = sand.u32 %s30, 1
        %s388 = scalar_lea.sflag [#allocation6], %s387
        %s389 = sand.u32 %s64, 1
        %s390 = scalar_lea.vmem [#allocation5], %s389
        %p391 = pneg %p77
        %p392 = pneg %p74
        %p393 = pneg %p98
        %p394 = pneg %p95
        %p395 = pneg %p119
        %p396 = pneg %p116
        %p397 = pneg %p140
        %p398 = pneg %p137
        %p399 = pneg %p161
        %p400 = pneg %p158
        %p401 = pneg %p182
        %p402 = pneg %p179
        %p403 = pneg %p203
        %p404 = pneg %p200
        %p405 = pneg %p229
        %p406 = pneg %p226
        %s407 = sand.u32 %s216, 1
        %s408 = scalar_lea.sflag [#allocation4], %s407
        %s409 = sand.u32 %s216, 1
        %s410 = scalar_lea.vmem [#allocation13], %s409
        %s411 = smul.u32 16, %s30
        %v413 = vld [vmem:[%s351] sm:$0xf]
        %v414 = vld [vmem:[%s351 + $0x4] sm:$0xf]
        %v415 = vld [vmem:[%s351 + $0x8] sm:$0xf]
        %v416 = vld [vmem:[%s351 + $0xc] sm:$0xf]
        %v417 = vld [vmem:[%s351 + $0x10] sm:$0xf]
        %v418 = vld [vmem:[%s351 + $0x14] sm:$0xf]
        %v419 = vld [vmem:[%s351 + $0x18] sm:$0xf]
        %v420 = vld [vmem:[%s351 + $0x1c] sm:$0xf]
        %v421 = vld [vmem:[%s351 + $0x20] sm:$0xf]
        %v422 = vld [vmem:[%s351 + $0x24] sm:$0xf]
        %v423 = vld [vmem:[%s351 + $0x28] sm:$0xf]
        %v424 = vld [vmem:[%s351 + $0x2c] sm:$0xf]
        %v425 = vld [vmem:[%s351 + $0x30] sm:$0xf]
        %v426 = vld [vmem:[%s351 + $0x34] sm:$0xf]
        %v427 = vld [vmem:[%s351 + $0x38] sm:$0xf]
        %v428 = vld [vmem:[%s351 + $0x3c] sm:$0xf]
        %v429 = vld [vmem:[#allocation7] sm:$0xff]
        %v430 = vld [vmem:[#allocation7 + $0x8] sm:$0xff]
        %v431 = vld [vmem:[#allocation7 + $0x10] sm:$0xff]
        %v432 = vld [vmem:[#allocation7 + $0x18] sm:$0xff]
        %v433 = vld [vmem:[#allocation7 + $0x20] sm:$0xff]
        %v434 = vld [vmem:[#allocation7 + $0x28] sm:$0xff]
        %v435 = vld [vmem:[#allocation7 + $0x30] sm:$0xff]
        %v436 = vld [vmem:[#allocation7 + $0x38] sm:$0xff]
        %v437 = vld [vmem:[#allocation7 + $0x40] sm:$0xff]
        %v438 = vld [vmem:[#allocation7 + $0x48] sm:$0xff]
        %v439 = vld [vmem:[#allocation7 + $0x50] sm:$0xff]
        %v440 = vld [vmem:[#allocation7 + $0x58] sm:$0xff]
        %v441 = vld [vmem:[#allocation7 + $0x60] sm:$0xff]
        %v442 = vld [vmem:[#allocation7 + $0x68] sm:$0xff]
        %v443 = vld [vmem:[#allocation7 + $0x70] sm:$0xff]
        %v444 = vld [vmem:[#allocation7 + $0x78] sm:$0xff]
        %v445 = vld [vmem:[#allocation7 + $0x80] sm:$0xff]
        %v446 = vld [vmem:[#allocation7 + $0x88] sm:$0xff]
        %v447 = vld [vmem:[#allocation7 + $0x90] sm:$0xff]
        %v448 = vld [vmem:[#allocation7 + $0x98] sm:$0xff]
        %v449 = vld [vmem:[#allocation7 + $0xa0] sm:$0xff]
        %v450 = vld [vmem:[#allocation7 + $0xa8] sm:$0xff]
        %v451 = vld [vmem:[#allocation7 + $0xb0] sm:$0xff]
        %v452 = vld [vmem:[#allocation7 + $0xb8] sm:$0xff]
        %v453 = vld [vmem:[#allocation7 + $0xc0] sm:$0xff]
        %v454 = vld [vmem:[#allocation7 + $0xc8] sm:$0xff]
        %v455 = vld [vmem:[#allocation7 + $0xd0] sm:$0xff]
        %v456 = vld [vmem:[#allocation7 + $0xd8] sm:$0xff]
        %v457 = vld [vmem:[#allocation7 + $0xe0] sm:$0xff]
        %v458 = vld [vmem:[#allocation7 + $0xe8] sm:$0xff]
        %v459 = vld [vmem:[#allocation7 + $0xf0] sm:$0xff]
        %v460 = vld [vmem:[#allocation7 + $0xf8] sm:$0xff]
        %v477 = vunpack.c.l.b16 %v413
        %v478 = vunpack.c.l.b16 %v414
        %v479 = vunpack.c.l.b16 %v415
        %v480 = vunpack.c.l.b16 %v416
        %v481 = vunpack.c.l.b16 %v417
        %v482 = vunpack.c.l.b16 %v418
        %v483 = vunpack.c.l.b16 %v419
        %v484 = vunpack.c.l.b16 %v420
        %v485 = vunpack.c.l.b16 %v421
        %v486 = vunpack.c.l.b16 %v422
        %v487 = vunpack.c.l.b16 %v423
        %v488 = vunpack.c.l.b16 %v424
        %v489 = vunpack.c.l.b16 %v425
        %v490 = vunpack.c.l.b16 %v426
        %v491 = vunpack.c.l.b16 %v427
        %v492 = vunpack.c.l.b16 %v428
        %v493 = vpack.c.b16 %v478, %v477
        %v494 = vpack.c.b16 %v480, %v479
        %v495 = vpack.c.b16 %v482, %v481
        %v496 = vpack.c.b16 %v484, %v483
        %v497 = vpack.c.b16 %v486, %v485
        %v498 = vpack.c.b16 %v488, %v487
        %v499 = vpack.c.b16 %v490, %v489
        %v500 = vpack.c.b16 %v492, %v491
        %v541 = vunpack.c.l.b16 %v429
        %v542 = vunpack.c.h.b16 %v429
        %v543 = vunpack.c.l.b16 %v430
        %v544 = vunpack.c.h.b16 %v430
        %v545 = vunpack.c.l.b16 %v431
        %v546 = vunpack.c.h.b16 %v431
        %v547 = vunpack.c.l.b16 %v432
        %v548 = vunpack.c.h.b16 %v432
        %v549 = vunpack.c.l.b16 %v433
        %v550 = vunpack.c.h.b16 %v433
        %v551 = vunpack.c.l.b16 %v434
        %v552 = vunpack.c.h.b16 %v434
        %v553 = vunpack.c.l.b16 %v435
        %v554 = vunpack.c.h.b16 %v435
        %v555 = vunpack.c.l.b16 %v436
        %v556 = vunpack.c.h.b16 %v436
        %v557 = vunpack.c.l.b16 %v437
        %v558 = vunpack.c.h.b16 %v437
        %v559 = vunpack.c.l.b16 %v438
        %v560 = vunpack.c.h.b16 %v438
        %v561 = vunpack.c.l.b16 %v439
        %v562 = vunpack.c.h.b16 %v439
        %v563 = vunpack.c.l.b16 %v440
        %v564 = vunpack.c.h.b16 %v440
        %v565 = vunpack.c.l.b16 %v441
        %v566 = vunpack.c.h.b16 %v441
        %v567 = vunpack.c.l.b16 %v442
        %v568 = vunpack.c.h.b16 %v442
        %v569 = vunpack.c.l.b16 %v443
        %v570 = vunpack.c.h.b16 %v443
        %v571 = vunpack.c.l.b16 %v444
        %v572 = vunpack.c.h.b16 %v444
        %v573 = vunpack.c.l.b16 %v445
        %v574 = vunpack.c.h.b16 %v445
        %v575 = vunpack.c.l.b16 %v446
        %v576 = vunpack.c.h.b16 %v446
        %v577 = vunpack.c.l.b16 %v447
        %v578 = vunpack.c.h.b16 %v447
        %v579 = vunpack.c.l.b16 %v448
        %v580 = vunpack.c.h.b16 %v448
        %v581 = vunpack.c.l.b16 %v449
        %v582 = vunpack.c.h.b16 %v449
        %v583 = vunpack.c.l.b16 %v450
        %v584 = vunpack.c.h.b16 %v450
        %v585 = vunpack.c.l.b16 %v451
        %v586 = vunpack.c.h.b16 %v451
        %v587 = vunpack.c.l.b16 %v452
        %v588 = vunpack.c.h.b16 %v452
        %v589 = vunpack.c.l.b16 %v453
        %v590 = vunpack.c.h.b16 %v453
        %v591 = vunpack.c.l.b16 %v454
        %v592 = vunpack.c.h.b16 %v454
        %v593 = vunpack.c.l.b16 %v455
        %v594 = vunpack.c.h.b16 %v455
        %v595 = vunpack.c.l.b16 %v456
        %v596 = vunpack.c.h.b16 %v456
        %v597 = vunpack.c.l.b16 %v457
        %v598 = vunpack.c.h.b16 %v457
        %v599 = vunpack.c.l.b16 %v458
        %v600 = vunpack.c.h.b16 %v458
        %v601 = vunpack.c.l.b16 %v459
        %v602 = vunpack.c.h.b16 %v459
        %v603 = vunpack.c.l.b16 %v460
        %v604 = vunpack.c.h.b16 %v460
        %v605 = vpack.c.b16 %v545, %v541
        %v606 = vpack.c.b16 %v546, %v542
        %v607 = vpack.c.b16 %v547, %v543
        %v608 = vpack.c.b16 %v548, %v544
        %v609 = vpack.c.b16 %v553, %v549
        %v610 = vpack.c.b16 %v554, %v550
        %v611 = vpack.c.b16 %v555, %v551
        %v612 = vpack.c.b16 %v556, %v552
        %v613 = vpack.c.b16 %v561, %v557
        %v614 = vpack.c.b16 %v562, %v558
        %v615 = vpack.c.b16 %v563, %v559
        %v616 = vpack.c.b16 %v564, %v560
        %v617 = vpack.c.b16 %v569, %v565
        %v618 = vpack.c.b16 %v570, %v566
        %v619 = vpack.c.b16 %v571, %v567
        %v620 = vpack.c.b16 %v572, %v568
        %v621 = vpack.c.b16 %v577, %v573
        %v622 = vpack.c.b16 %v578, %v574
        %v623 = vpack.c.b16 %v579, %v575
        %v624 = vpack.c.b16 %v580, %v576
        %v625 = vpack.c.b16 %v585, %v581
        %v626 = vpack.c.b16 %v586, %v582
        %v627 = vpack.c.b16 %v587, %v583
        %v628 = vpack.c.b16 %v588, %v584
        %v629 = vpack.c.b16 %v593, %v589
        %v630 = vpack.c.b16 %v594, %v590
        %v631 = vpack.c.b16 %v595, %v591
        %v632 = vpack.c.b16 %v596, %v592
        %v633 = vpack.c.b16 %v601, %v597
        %v634 = vpack.c.b16 %v602, %v598
        %v635 = vpack.c.b16 %v603, %v599
        %v636 = vpack.c.b16 %v604, %v600
        %669 = vmatprep.subr.bf16.mxu0 %v634
        %670 = vmatpush1.bf16.msra.mxu0 %v633
        %671 = vmatprep.subr.bf16.mxu0 %v630
        %672 = vmatpush1.bf16.msra.mxu0 %v629
        %673 = vmatprep.subr.bf16.mxu0 %v626
        %674 = vmatpush1.bf16.msra.mxu0 %v625
        %675 = vmatprep.subr.bf16.mxu0 %v622
        %676 = vmatpush1.bf16.msra.mxu0 %v621
        %677 = vmatprep.subr.bf16.mxu0 %v618
        %678 = vmatpush1.bf16.msra.mxu0 %v617
        %679 = vmatprep.subr.bf16.mxu0 %v614
        %680 = vmatpush1.bf16.msra.mxu0 %v613
        %681 = vmatprep.subr.bf16.mxu0 %v610
        %682 = vmatpush1.bf16.msra.mxu0 %v609
        %683 = vmatprep.subr.bf16.mxu0 %v606
        %684 = vmatpush1.bf16.msra.mxu0 %v605
        %685 = vmatprep.subr.bf16.mxu0 0
        %686 = vmatpush2.bf16.msra.mxu0 0
        %687 = vmatprep.subr.bf16.mxu0 0
        %688 = vmatpush2.bf16.msra.mxu0 0
        %689 = vmatprep.subr.bf16.mxu0 0
        %690 = vmatpush2.bf16.msra.mxu0 0
        %691 = vmatprep.subr.bf16.mxu0 0
        %692 = vmatpush2.bf16.msra.mxu0 0
        %693 = vmatprep.subr.bf16.mxu0 0
        %694 = vmatpush2.bf16.msra.mxu0 0
        %695 = vmatprep.subr.bf16.mxu0 0
        %696 = vmatpush2.bf16.msra.mxu0 0
        %697 = vmatprep.subr.bf16.mxu0 0
        %698 = vmatpush2.bf16.msra.mxu0 0
        %699 = vmatprep.subr.bf16.mxu0 0
        %700 = vmatpush2.bf16.msra.mxu0 0
        %701 = vmatprep.mubr.bf16.mxu0 0
        %702 = vmatmul.mubr.bf16.gmra.mxu0 %v493
        %v703 = vpop.f32.mrf.mxu0
        %v704 = vadd.f32 0.0, %v703
        %v705 = vpop.f32.mrf.mxu0
        %v706 = vadd.f32 0.0, %v705
        %v707 = vpop.f32.mrf.mxu0
        %v708 = vadd.f32 0.0, %v707
        %v709 = vpop.f32.mrf.mxu0
        %v710 = vadd.f32 0.0, %v709
        %711 = vmatprep.mubr.bf16.mxu0 0
        %712 = vmatmul.mubr.bf16.gmra.mxu0 %v494
        %v713 = vpop.f32.mrf.mxu0
        %v714 = vadd.f32 0.0, %v713
        %v715 = vpop.f32.mrf.mxu0
        %v716 = vadd.f32 0.0, %v715
        %v717 = vpop.f32.mrf.mxu0
        %v718 = vadd.f32 0.0, %v717
        %v719 = vpop.f32.mrf.mxu0
        %v720 = vadd.f32 0.0, %v719
        %721 = vmatprep.mubr.bf16.mxu0 0
        %722 = vmatmul.mubr.bf16.gmra.mxu0 %v495
        %v723 = vpop.f32.mrf.mxu0
        %v724 = vadd.f32 0.0, %v723
        %v725 = vpop.f32.mrf.mxu0
        %v726 = vadd.f32 0.0, %v725
        %v727 = vpop.f32.mrf.mxu0
        %v728 = vadd.f32 0.0, %v727
        %v729 = vpop.f32.mrf.mxu0
        %v730 = vadd.f32 0.0, %v729
        %731 = vmatprep.mubr.bf16.mxu0 0
        %732 = vmatmul.mubr.bf16.gmra.mxu0 %v496
        %v733 = vpop.f32.mrf.mxu0
        %v734 = vadd.f32 0.0, %v733
        %v735 = vpop.f32.mrf.mxu0
        %v736 = vadd.f32 0.0, %v735
        %v737 = vpop.f32.mrf.mxu0
        %v738 = vadd.f32 0.0, %v737
        %v739 = vpop.f32.mrf.mxu0
        %v740 = vadd.f32 0.0, %v739
        %741 = vmatprep.mubr.bf16.mxu0 0
        %742 = vmatmul.mubr.bf16.gmra.mxu0 %v497
        %v743 = vpop.f32.mrf.mxu0
        %v744 = vadd.f32 0.0, %v743
        %v745 = vpop.f32.mrf.mxu0
        %v746 = vadd.f32 0.0, %v745
        %v747 = vpop.f32.mrf.mxu0
        %v748 = vadd.f32 0.0, %v747
        %v749 = vpop.f32.mrf.mxu0
        %v750 = vadd.f32 0.0, %v749
        %751 = vmatprep.mubr.bf16.mxu0 0
        %752 = vmatmul.mubr.bf16.gmra.mxu0 %v498
        %v753 = vpop.f32.mrf.mxu0
        %v754 = vadd.f32 0.0, %v753
        %v755 = vpop.f32.mrf.mxu0
        %v756 = vadd.f32 0.0, %v755
        %v757 = vpop.f32.mrf.mxu0
        %v758 = vadd.f32 0.0, %v757
        %v759 = vpop.f32.mrf.mxu0
        %v760 = vadd.f32 0.0, %v759
        %761 = vmatprep.mubr.bf16.mxu0 0
        %762 = vmatmul.mubr.bf16.gmra.mxu0 %v499
        %v763 = vpop.f32.mrf.mxu0
        %v764 = vadd.f32 0.0, %v763
        %v765 = vpop.f32.mrf.mxu0
        %v766 = vadd.f32 0.0, %v765
        %v767 = vpop.f32.mrf.mxu0
        %v768 = vadd.f32 0.0, %v767
        %v769 = vpop.f32.mrf.mxu0
        %v770 = vadd.f32 0.0, %v769
        %771 = vmatprep.mubr.bf16.mxu0 0
        %772 = vmatmul.mubr.bf16.gmra.mxu0 %v500
        %v773 = vpop.f32.mrf.mxu0
        %v774 = vadd.f32 0.0, %v773
        %v775 = vpop.f32.mrf.mxu0
        %v776 = vadd.f32 0.0, %v775
        %v777 = vpop.f32.mrf.mxu0
        %v778 = vadd.f32 0.0, %v777
        %v779 = vpop.f32.mrf.mxu0
        %v780 = vadd.f32 0.0, %v779
        %781 = vdwg.mxu0
        %782 = vmatprep.subr.bf16.mxu0 %v636
        %783 = vmatpush1.bf16.msra.mxu0 %v635
        %784 = vmatprep.subr.bf16.mxu0 %v632
        %785 = vmatpush1.bf16.msra.mxu0 %v631
        %786 = vmatprep.subr.bf16.mxu0 %v628
        %787 = vmatpush1.bf16.msra.mxu0 %v627
        %788 = vmatprep.subr.bf16.mxu0 %v624
        %789 = vmatpush1.bf16.msra.mxu0 %v623
        %790 = vmatprep.subr.bf16.mxu0 %v620
        %791 = vmatpush1.bf16.msra.mxu0 %v619
        %792 = vmatprep.subr.bf16.mxu0 %v616
        %793 = vmatpush1.bf16.msra.mxu0 %v615
        %794 = vmatprep.subr.bf16.mxu0 %v612
        %795 = vmatpush1.bf16.msra.mxu0 %v611
        %796 = vmatprep.subr.bf16.mxu0 %v608
        %797 = vmatpush1.bf16.msra.mxu0 %v607
        %798 = vmatprep.subr.bf16.mxu0 0
        %799 = vmatpush2.bf16.msra.mxu0 0
        %800 = vmatprep.subr.bf16.mxu0 0
        %801 = vmatpush2.bf16.msra.mxu0 0
        %802 = vmatprep.subr.bf16.mxu0 0
        %803 = vmatpush2.bf16.msra.mxu0 0
        %804 = vmatprep.subr.bf16.mxu0 0
        %805 = vmatpush2.bf16.msra.mxu0 0
        %806 = vmatprep.subr.bf16.mxu0 0
        %807 = vmatpush2.bf16.msra.mxu0 0
        %808 = vmatprep.subr.bf16.mxu0 0
        %809 = vmatpush2.bf16.msra.mxu0 0
        %810 = vmatprep.subr.bf16.mxu0 0
        %811 = vmatpush2.bf16.msra.mxu0 0
        %812 = vmatprep.subr.bf16.mxu0 0
        %813 = vmatpush2.bf16.msra.mxu0 0
        %814 = vmatprep.mubr.bf16.mxu0 0
        %815 = vmatmul.mubr.bf16.gmra.mxu0 %v493
        %v816 = vpop.f32.mrf.mxu0
        %v817 = vadd.f32 0.0, %v816
        %v818 = vpop.f32.mrf.mxu0
        %v819 = vadd.f32 0.0, %v818
        %v820 = vpop.f32.mrf.mxu0
        %v821 = vadd.f32 0.0, %v820
        %v822 = vpop.f32.mrf.mxu0
        %v823 = vadd.f32 0.0, %v822
        %824 = vmatprep.mubr.bf16.mxu0 0
        %825 = vmatmul.mubr.bf16.gmra.mxu0 %v494
        %v826 = vpop.f32.mrf.mxu0
        %v827 = vadd.f32 0.0, %v826
        %v828 = vpop.f32.mrf.mxu0
        %v829 = vadd.f32 0.0, %v828
        %v830 = vpop.f32.mrf.mxu0
        %v831 = vadd.f32 0.0, %v830
        %v832 = vpop.f32.mrf.mxu0
        %v833 = vadd.f32 0.0, %v832
        %834 = vmatprep.mubr.bf16.mxu0 0
        %835 = vmatmul.mubr.bf16.gmra.mxu0 %v495
        %v836 = vpop.f32.mrf.mxu0
        %v837 = vadd.f32 0.0, %v836
        %v838 = vpop.f32.mrf.mxu0
        %v839 = vadd.f32 0.0, %v838
        %v840 = vpop.f32.mrf.mxu0
        %v841 = vadd.f32 0.0, %v840
        %v842 = vpop.f32.mrf.mxu0
        %v843 = vadd.f32 0.0, %v842
        %844 = vmatprep.mubr.bf16.mxu0 0
        %845 = vmatmul.mubr.bf16.gmra.mxu0 %v496
        %v846 = vpop.f32.mrf.mxu0
        %v847 = vadd.f32 0.0, %v846
        %v848 = vpop.f32.mrf.mxu0
        %v849 = vadd.f32 0.0, %v848
        %v850 = vpop.f32.mrf.mxu0
        %v851 = vadd.f32 0.0, %v850
        %v852 = vpop.f32.mrf.mxu0
        %v853 = vadd.f32 0.0, %v852
        %854 = vmatprep.mubr.bf16.mxu0 0
        %855 = vmatmul.mubr.bf16.gmra.mxu0 %v497
        %v856 = vpop.f32.mrf.mxu0
        %v857 = vadd.f32 0.0, %v856
        %v858 = vpop.f32.mrf.mxu0
        %v859 = vadd.f32 0.0, %v858
        %v860 = vpop.f32.mrf.mxu0
        %v861 = vadd.f32 0.0, %v860
        %v862 = vpop.f32.mrf.mxu0
        %v863 = vadd.f32 0.0, %v862
        %864 = vmatprep.mubr.bf16.mxu0 0
        %865 = vmatmul.mubr.bf16.gmra.mxu0 %v498
        %v866 = vpop.f32.mrf.mxu0
        %v867 = vadd.f32 0.0, %v866
        %v868 = vpop.f32.mrf.mxu0
        %v869 = vadd.f32 0.0, %v868
        %v870 = vpop.f32.mrf.mxu0
        %v871 = vadd.f32 0.0, %v870
        %v872 = vpop.f32.mrf.mxu0
        %v873 = vadd.f32 0.0, %v872
        %874 = vmatprep.mubr.bf16.mxu0 0
        %875 = vmatmul.mubr.bf16.gmra.mxu0 %v499
        %v876 = vpop.f32.mrf.mxu0
        %v877 = vadd.f32 0.0, %v876
        %v878 = vpop.f32.mrf.mxu0
        %v879 = vadd.f32 0.0, %v878
        %v880 = vpop.f32.mrf.mxu0
        %v881 = vadd.f32 0.0, %v880
        %v882 = vpop.f32.mrf.mxu0
        %v883 = vadd.f32 0.0, %v882
        %884 = vmatprep.mubr.bf16.mxu0 0
        %885 = vmatmul.mubr.bf16.gmra.mxu0 %v500
        %v886 = vpop.f32.mrf.mxu0
        %v887 = vadd.f32 0.0, %v886
        %v888 = vpop.f32.mrf.mxu0
        %v889 = vadd.f32 0.0, %v888
        %v890 = vpop.f32.mrf.mxu0
        %v891 = vadd.f32 0.0, %v890
        %v892 = vpop.f32.mrf.mxu0
        %v893 = vadd.f32 0.0, %v892
        %894 = vdwg.mxu0
        %s895 = scalar_lea.vmem [#allocation7], 256
        %v896 = vld [vmem:[%s895] sm:$0xff]
        %v897 = vld [vmem:[%s895 + $0x8] sm:$0xff]
        %v898 = vld [vmem:[%s895 + $0x10] sm:$0xff]
        %v899 = vld [vmem:[%s895 + $0x18] sm:$0xff]
        %v900 = vld [vmem:[%s895 + $0x20] sm:$0xff]
        %v901 = vld [vmem:[%s895 + $0x28] sm:$0xff]
        %v902 = vld [vmem:[%s895 + $0x30] sm:$0xff]
        %v903 = vld [vmem:[%s895 + $0x38] sm:$0xff]
        %v904 = vld [vmem:[%s895 + $0x40] sm:$0xff]
        %v905 = vld [vmem:[%s895 + $0x48] sm:$0xff]
        %v906 = vld [vmem:[%s895 + $0x50] sm:$0xff]
        %v907 = vld [vmem:[%s895 + $0x58] sm:$0xff]
        %v908 = vld [vmem:[%s895 + $0x60] sm:$0xff]
        %v909 = vld [vmem:[%s895 + $0x68] sm:$0xff]
        %v910 = vld [vmem:[%s895 + $0x70] sm:$0xff]
        %v911 = vld [vmem:[%s895 + $0x78] sm:$0xff]
        %v912 = vld [vmem:[%s895 + $0x80] sm:$0xff]
        %v913 = vld [vmem:[%s895 + $0x88] sm:$0xff]
        %v914 = vld [vmem:[%s895 + $0x90] sm:$0xff]
        %v915 = vld [vmem:[%s895 + $0x98] sm:$0xff]
        %v916 = vld [vmem:[%s895 + $0xa0] sm:$0xff]
        %v917 = vld [vmem:[%s895 + $0xa8] sm:$0xff]
        %v918 = vld [vmem:[%s895 + $0xb0] sm:$0xff]
        %v919 = vld [vmem:[%s895 + $0xb8] sm:$0xff]
        %v920 = vld [vmem:[%s895 + $0xc0] sm:$0xff]
        %v921 = vld [vmem:[%s895 + $0xc8] sm:$0xff]
        %v922 = vld [vmem:[%s895 + $0xd0] sm:$0xff]
        %v923 = vld [vmem:[%s895 + $0xd8] sm:$0xff]
        %v924 = vld [vmem:[%s895 + $0xe0] sm:$0xff]
        %v925 = vld [vmem:[%s895 + $0xe8] sm:$0xff]
        %v926 = vld [vmem:[%s895 + $0xf0] sm:$0xff]
        %v927 = vld [vmem:[%s895 + $0xf8] sm:$0xff]
        %v960 = vunpack.c.l.b16 %v896
        %v961 = vunpack.c.h.b16 %v896
        %v962 = vunpack.c.l.b16 %v897
        %v963 = vunpack.c.h.b16 %v897
        %v964 = vunpack.c.l.b16 %v898
        %v965 = vunpack.c.h.b16 %v898
        %v966 = vunpack.c.l.b16 %v899
        %v967 = vunpack.c.h.b16 %v899
        %v968 = vunpack.c.l.b16 %v900
        %v969 = vunpack.c.h.b16 %v900
        %v970 = vunpack.c.l.b16 %v901
        %v971 = vunpack.c.h.b16 %v901
        %v972 = vunpack.c.l.b16 %v902
        %v973 = vunpack.c.h.b16 %v902
        %v974 = vunpack.c.l.b16 %v903
        %v975 = vunpack.c.h.b16 %v903
        %v976 = vunpack.c.l.b16 %v904
        %v977 = vunpack.c.h.b16 %v904
        %v978 = vunpack.c.l.b16 %v905
        %v979 = vunpack.c.h.b16 %v905
        %v980 = vunpack.c.l.b16 %v906
        %v981 = vunpack.c.h.b16 %v906
        %v982 = vunpack.c.l.b16 %v907
        %v983 = vunpack.c.h.b16 %v907
        %v984 = vunpack.c.l.b16 %v908
        %v985 = vunpack.c.h.b16 %v908
        %v986 = vunpack.c.l.b16 %v909
        %v987 = vunpack.c.h.b16 %v909
        %v988 = vunpack.c.l.b16 %v910
        %v989 = vunpack.c.h.b16 %v910
        %v990 = vunpack.c.l.b16 %v911
        %v991 = vunpack.c.h.b16 %v911
        %v992 = vunpack.c.l.b16 %v912
        %v993 = vunpack.c.h.b16 %v912
        %v994 = vunpack.c.l.b16 %v913
        %v995 = vunpack.c.h.b16 %v913
        %v996 = vunpack.c.l.b16 %v914
        %v997 = vunpack.c.h.b16 %v914
        %v998 = vunpack.c.l.b16 %v915
        %v999 = vunpack.c.h.b16 %v915
        %v1000 = vunpack.c.l.b16 %v916
        %v1001 = vunpack.c.h.b16 %v916
        %v1002 = vunpack.c.l.b16 %v917
        %v1003 = vunpack.c.h.b16 %v917
        %v1004 = vunpack.c.l.b16 %v918
        %v1005 = vunpack.c.h.b16 %v918
        %v1006 = vunpack.c.l.b16 %v919
        %v1007 = vunpack.c.h.b16 %v919
        %v1008 = vunpack.c.l.b16 %v920
        %v1009 = vunpack.c.h.b16 %v920
        %v1010 = vunpack.c.l.b16 %v921
        %v1011 = vunpack.c.h.b16 %v921
        %v1012 = vunpack.c.l.b16 %v922
        %v1013 = vunpack.c.h.b16 %v922
        %v1014 = vunpack.c.l.b16 %v923
        %v1015 = vunpack.c.h.b16 %v923
        %v1016 = vunpack.c.l.b16 %v924
        %v1017 = vunpack.c.h.b16 %v924
        %v1018 = vunpack.c.l.b16 %v925
        %v1019 = vunpack.c.h.b16 %v925
        %v1020 = vunpack.c.l.b16 %v926
        %v1021 = vunpack.c.h.b16 %v926
        %v1022 = vunpack.c.l.b16 %v927
        %v1023 = vunpack.c.h.b16 %v927
        %v1024 = vpack.c.b16 %v964, %v960
        %v1025 = vpack.c.b16 %v965, %v961
        %v1026 = vpack.c.b16 %v966, %v962
        %v1027 = vpack.c.b16 %v967, %v963
        %v1028 = vpack.c.b16 %v972, %v968
        %v1029 = vpack.c.b16 %v973, %v969
        %v1030 = vpack.c.b16 %v974, %v970
        %v1031 = vpack.c.b16 %v975, %v971
        %v1032 = vpack.c.b16 %v980, %v976
        %v1033 = vpack.c.b16 %v981, %v977
        %v1034 = vpack.c.b16 %v982, %v978
        %v1035 = vpack.c.b16 %v983, %v979
        %v1036 = vpack.c.b16 %v988, %v984
        %v1037 = vpack.c.b16 %v989, %v985
        %v1038 = vpack.c.b16 %v990, %v986
        %v1039 = vpack.c.b16 %v991, %v987
        %v1040 = vpack.c.b16 %v996, %v992
        %v1041 = vpack.c.b16 %v997, %v993
        %v1042 = vpack.c.b16 %v998, %v994
        %v1043 = vpack.c.b16 %v999, %v995
        %v1044 = vpack.c.b16 %v1004, %v1000
        %v1045 = vpack.c.b16 %v1005, %v1001
        %v1046 = vpack.c.b16 %v1006, %v1002
        %v1047 = vpack.c.b16 %v1007, %v1003
        %v1048 = vpack.c.b16 %v1012, %v1008
        %v1049 = vpack.c.b16 %v1013, %v1009
        %v1050 = vpack.c.b16 %v1014, %v1010
        %v1051 = vpack.c.b16 %v1015, %v1011
        %v1052 = vpack.c.b16 %v1020, %v1016
        %v1053 = vpack.c.b16 %v1021, %v1017
        %v1054 = vpack.c.b16 %v1022, %v1018
        %v1055 = vpack.c.b16 %v1023, %v1019
        %1088 = vmatprep.subr.bf16.mxu0 %v1053
        %1089 = vmatpush1.bf16.msra.mxu0 %v1052
        %1090 = vmatprep.subr.bf16.mxu0 %v1049
        %1091 = vmatpush1.bf16.msra.mxu0 %v1048
        %1092 = vmatprep.subr.bf16.mxu0 %v1045
        %1093 = vmatpush1.bf16.msra.mxu0 %v1044
        %1094 = vmatprep.subr.bf16.mxu0 %v1041
        %1095 = vmatpush1.bf16.msra.mxu0 %v1040
        %1096 = vmatprep.subr.bf16.mxu0 %v1037
        %1097 = vmatpush1.bf16.msra.mxu0 %v1036
        %1098 = vmatprep.subr.bf16.mxu0 %v1033
        %1099 = vmatpush1.bf16.msra.mxu0 %v1032
        %1100 = vmatprep.subr.bf16.mxu0 %v1029
        %1101 = vmatpush1.bf16.msra.mxu0 %v1028
        %1102 = vmatprep.subr.bf16.mxu0 %v1025
        %1103 = vmatpush1.bf16.msra.mxu0 %v1024
        %1104 = vmatprep.subr.bf16.mxu0 0
        %1105 = vmatpush2.bf16.msra.mxu0 0
        %1106 = vmatprep.subr.bf16.mxu0 0
        %1107 = vmatpush2.bf16.msra.mxu0 0
        %1108 = vmatprep.subr.bf16.mxu0 0
        %1109 = vmatpush2.bf16.msra.mxu0 0
        %1110 = vmatprep.subr.bf16.mxu0 0
        %1111 = vmatpush2.bf16.msra.mxu0 0
        %1112 = vmatprep.subr.bf16.mxu0 0
        %1113 = vmatpush2.bf16.msra.mxu0 0
        %1114 = vmatprep.subr.bf16.mxu0 0
        %1115 = vmatpush2.bf16.msra.mxu0 0
        %1116 = vmatprep.subr.bf16.mxu0 0
        %1117 = vmatpush2.bf16.msra.mxu0 0
        %1118 = vmatprep.subr.bf16.mxu0 0
        %1119 = vmatpush2.bf16.msra.mxu0 0
        %1120 = vmatprep.mubr.bf16.mxu0 0
        %1121 = vmatmul.mubr.bf16.gmra.mxu0 %v493
        %v1122 = vpop.f32.mrf.mxu0
        %v1123 = vadd.f32 0.0, %v1122
        %v1124 = vpop.f32.mrf.mxu0
        %v1125 = vadd.f32 0.0, %v1124
        %v1126 = vpop.f32.mrf.mxu0
        %v1127 = vadd.f32 0.0, %v1126
        %v1128 = vpop.f32.mrf.mxu0
        %v1129 = vadd.f32 0.0, %v1128
        %1130 = vmatprep.mubr.bf16.mxu0 0
        %1131 = vmatmul.mubr.bf16.gmra.mxu0 %v494
        %v1132 = vpop.f32.mrf.mxu0
        %v1133 = vadd.f32 0.0, %v1132
        %v1134 = vpop.f32.mrf.mxu0
        %v1135 = vadd.f32 0.0, %v1134
        %v1136 = vpop.f32.mrf.mxu0
        %v1137 = vadd.f32 0.0, %v1136
        %v1138 = vpop.f32.mrf.mxu0
        %v1139 = vadd.f32 0.0, %v1138
        %1140 = vmatprep.mubr.bf16.mxu0 0
        %1141 = vmatmul.mubr.bf16.gmra.mxu0 %v495
        %v1142 = vpop.f32.mrf.mxu0
        %v1143 = vadd.f32 0.0, %v1142
        %v1144 = vpop.f32.mrf.mxu0
        %v1145 = vadd.f32 0.0, %v1144
        %v1146 = vpop.f32.mrf.mxu0
        %v1147 = vadd.f32 0.0, %v1146
        %v1148 = vpop.f32.mrf.mxu0
        %v1149 = vadd.f32 0.0, %v1148
        %1150 = vmatprep.mubr.bf16.mxu0 0
        %1151 = vmatmul.mubr.bf16.gmra.mxu0 %v496
        %v1152 = vpop.f32.mrf.mxu0
        %v1153 = vadd.f32 0.0, %v1152
        %v1154 = vpop.f32.mrf.mxu0
        %v1155 = vadd.f32 0.0, %v1154
        %v1156 = vpop.f32.mrf.mxu0
        %v1157 = vadd.f32 0.0, %v1156
        %v1158 = vpop.f32.mrf.mxu0
        %v1159 = vadd.f32 0.0, %v1158
        %1160 = vmatprep.mubr.bf16.mxu0 0
        %1161 = vmatmul.mubr.bf16.gmra.mxu0 %v497
        %v1162 = vpop.f32.mrf.mxu0
        %v1163 = vadd.f32 0.0, %v1162
        %v1164 = vpop.f32.mrf.mxu0
        %v1165 = vadd.f32 0.0, %v1164
        %v1166 = vpop.f32.mrf.mxu0
        %v1167 = vadd.f32 0.0, %v1166
        %v1168 = vpop.f32.mrf.mxu0
        %v1169 = vadd.f32 0.0, %v1168
        %1170 = vmatprep.mubr.bf16.mxu0 0
        %1171 = vmatmul.mubr.bf16.gmra.mxu0 %v498
        %v1172 = vpop.f32.mrf.mxu0
        %v1173 = vadd.f32 0.0, %v1172
        %v1174 = vpop.f32.mrf.mxu0
        %v1175 = vadd.f32 0.0, %v1174
        %v1176 = vpop.f32.mrf.mxu0
        %v1177 = vadd.f32 0.0, %v1176
        %v1178 = vpop.f32.mrf.mxu0
        %v1179 = vadd.f32 0.0, %v1178
        %1180 = vmatprep.mubr.bf16.mxu0 0
        %1181 = vmatmul.mubr.bf16.gmra.mxu0 %v499
        %v1182 = vpop.f32.mrf.mxu0
        %v1183 = vadd.f32 0.0, %v1182
        %v1184 = vpop.f32.mrf.mxu0
        %v1185 = vadd.f32 0.0, %v1184
        %v1186 = vpop.f32.mrf.mxu0
        %v1187 = vadd.f32 0.0, %v1186
        %v1188 = vpop.f32.mrf.mxu0
        %v1189 = vadd.f32 0.0, %v1188
        %1190 = vmatprep.mubr.bf16.mxu0 0
        %1191 = vmatmul.mubr.bf16.gmra.mxu0 %v500
        %v1192 = vpop.f32.mrf.mxu0
        %v1193 = vadd.f32 0.0, %v1192
        %v1194 = vpop.f32.mrf.mxu0
        %v1195 = vadd.f32 0.0, %v1194
        %v1196 = vpop.f32.mrf.mxu0
        %v1197 = vadd.f32 0.0, %v1196
        %v1198 = vpop.f32.mrf.mxu0
        %v1199 = vadd.f32 0.0, %v1198
        %1200 = vdwg.mxu0
        %1201 = vmatprep.subr.bf16.mxu0 %v1055
        %1202 = vmatpush1.bf16.msra.mxu0 %v1054
        %1203 = vmatprep.subr.bf16.mxu0 %v1051
        %1204 = vmatpush1.bf16.msra.mxu0 %v1050
        %1205 = vmatprep.subr.bf16.mxu0 %v1047
        %1206 = vmatpush1.bf16.msra.mxu0 %v1046
        %1207 = vmatprep.subr.bf16.mxu0 %v1043
        %1208 = vmatpush1.bf16.msra.mxu0 %v1042
        %1209 = vmatprep.subr.bf16.mxu0 %v1039
        %1210 = vmatpush1.bf16.msra.mxu0 %v1038
        %1211 = vmatprep.subr.bf16.mxu0 %v1035
        %1212 = vmatpush1.bf16.msra.mxu0 %v1034
        %1213 = vmatprep.subr.bf16.mxu0 %v1031
        %1214 = vmatpush1.bf16.msra.mxu0 %v1030
        %1215 = vmatprep.subr.bf16.mxu0 %v1027
        %1216 = vmatpush1.bf16.msra.mxu0 %v1026
        %1217 = vmatprep.subr.bf16.mxu0 0
        %1218 = vmatpush2.bf16.msra.mxu0 0
        %1219 = vmatprep.subr.bf16.mxu0 0
        %1220 = vmatpush2.bf16.msra.mxu0 0
        %1221 = vmatprep.subr.bf16.mxu0 0
        %1222 = vmatpush2.bf16.msra.mxu0 0
        %1223 = vmatprep.subr.bf16.mxu0 0
        %1224 = vmatpush2.bf16.msra.mxu0 0
        %1225 = vmatprep.subr.bf16.mxu0 0
        %1226 = vmatpush2.bf16.msra.mxu0 0
        %1227 = vmatprep.subr.bf16.mxu0 0
        %1228 = vmatpush2.bf16.msra.mxu0 0
        %1229 = vmatprep.subr.bf16.mxu0 0
        %1230 = vmatpush2.bf16.msra.mxu0 0
        %1231 = vmatprep.subr.bf16.mxu0 0
        %1232 = vmatpush2.bf16.msra.mxu0 0
        %1233 = vmatprep.mubr.bf16.mxu0 0
        %1234 = vmatmul.mubr.bf16.gmra.mxu0 %v493
        %v1235 = vpop.f32.mrf.mxu0
        %v1236 = vadd.f32 0.0, %v1235
        %v1237 = vpop.f32.mrf.mxu0
        %v1238 = vadd.f32 0.0, %v1237
        %v1239 = vpop.f32.mrf.mxu0
        %v1240 = vadd.f32 0.0, %v1239
        %v1241 = vpop.f32.mrf.mxu0
        %v1242 = vadd.f32 0.0, %v1241
        %1243 = vmatprep.mubr.bf16.mxu0 0
        %1244 = vmatmul.mubr.bf16.gmra.mxu0 %v494
        %v1245 = vpop.f32.mrf.mxu0
        %v1246 = vadd.f32 0.0, %v1245
        %v1247 = vpop.f32.mrf.mxu0
        %v1248 = vadd.f32 0.0, %v1247
        %v1249 = vpop.f32.mrf.mxu0
        %v1250 = vadd.f32 0.0, %v1249
        %v1251 = vpop.f32.mrf.mxu0
        %v1252 = vadd.f32 0.0, %v1251
        %1253 = vmatprep.mubr.bf16.mxu0 0
        %1254 = vmatmul.mubr.bf16.gmra.mxu0 %v495
        %v1255 = vpop.f32.mrf.mxu0
        %v1256 = vadd.f32 0.0, %v1255
        %v1257 = vpop.f32.mrf.mxu0
        %v1258 = vadd.f32 0.0, %v1257
        %v1259 = vpop.f32.mrf.mxu0
        %v1260 = vadd.f32 0.0, %v1259
        %v1261 = vpop.f32.mrf.mxu0
        %v1262 = vadd.f32 0.0, %v1261
        %1263 = vmatprep.mubr.bf16.mxu0 0
        %1264 = vmatmul.mubr.bf16.gmra.mxu0 %v496
        %v1265 = vpop.f32.mrf.mxu0
        %v1266 = vadd.f32 0.0, %v1265
        %v1267 = vpop.f32.mrf.mxu0
        %v1268 = vadd.f32 0.0, %v1267
        %v1269 = vpop.f32.mrf.mxu0
        %v1270 = vadd.f32 0.0, %v1269
        %v1271 = vpop.f32.mrf.mxu0
        %v1272 = vadd.f32 0.0, %v1271
        %1273 = vmatprep.mubr.bf16.mxu0 0
        %1274 = vmatmul.mubr.bf16.gmra.mxu0 %v497
        %v1275 = vpop.f32.mrf.mxu0
        %v1276 = vadd.f32 0.0, %v1275
        %v1277 = vpop.f32.mrf.mxu0
        %v1278 = vadd.f32 0.0, %v1277
        %v1279 = vpop.f32.mrf.mxu0
        %v1280 = vadd.f32 0.0, %v1279
        %v1281 = vpop.f32.mrf.mxu0
        %v1282 = vadd.f32 0.0, %v1281
        %1283 = vmatprep.mubr.bf16.mxu0 0
        %1284 = vmatmul.mubr.bf16.gmra.mxu0 %v498
        %v1285 = vpop.f32.mrf.mxu0
        %v1286 = vadd.f32 0.0, %v1285
        %v1287 = vpop.f32.mrf.mxu0
        %v1288 = vadd.f32 0.0, %v1287
        %v1289 = vpop.f32.mrf.mxu0
        %v1290 = vadd.f32 0.0, %v1289
        %v1291 = vpop.f32.mrf.mxu0
        %v1292 = vadd.f32 0.0, %v1291
        %1293 = vmatprep.mubr.bf16.mxu0 0
        %1294 = vmatmul.mubr.bf16.gmra.mxu0 %v499
        %v1295 = vpop.f32.mrf.mxu0
        %v1296 = vadd.f32 0.0, %v1295
        %v1297 = vpop.f32.mrf.mxu0
        %v1298 = vadd.f32 0.0, %v1297
        %v1299 = vpop.f32.mrf.mxu0
        %v1300 = vadd.f32 0.0, %v1299
        %v1301 = vpop.f32.mrf.mxu0
        %v1302 = vadd.f32 0.0, %v1301
        %1303 = vmatprep.mubr.bf16.mxu0 0
        %1304 = vmatmul.mubr.bf16.gmra.mxu0 %v500
        %v1305 = vpop.f32.mrf.mxu0
        %v1306 = vadd.f32 0.0, %v1305
        %v1307 = vpop.f32.mrf.mxu0
        %v1308 = vadd.f32 0.0, %v1307
        %v1309 = vpop.f32.mrf.mxu0
        %v1310 = vadd.f32 0.0, %v1309
        %v1311 = vpop.f32.mrf.mxu0
        %v1312 = vadd.f32 0.0, %v1311
        %1313 = vdwg.mxu0
        %v1314 = vmul.f32 %v704, %v1123
        %v1315 = vmul.f32 %v706, %v1125
        %v1316 = vmul.f32 %v817, %v1236
        %v1317 = vmul.f32 %v819, %v1238
        %v1318 = vmul.f32 %v708, %v1127
        %v1319 = vmul.f32 %v710, %v1129
        %v1320 = vmul.f32 %v821, %v1240
        %v1321 = vmul.f32 %v823, %v1242
        %v1322 = vmul.f32 %v714, %v1133
        %v1323 = vmul.f32 %v716, %v1135
        %v1324 = vmul.f32 %v827, %v1246
        %v1325 = vmul.f32 %v829, %v1248
        %v1326 = vmul.f32 %v718, %v1137
        %v1327 = vmul.f32 %v720, %v1139
        %v1328 = vmul.f32 %v831, %v1250
        %v1329 = vmul.f32 %v833, %v1252
        %v1330 = vmul.f32 %v724, %v1143
        %v1331 = vmul.f32 %v726, %v1145
        %v1332 = vmul.f32 %v837, %v1256
        %v1333 = vmul.f32 %v839, %v1258
        %v1334 = vmul.f32 %v728, %v1147
        %v1335 = vmul.f32 %v730, %v1149
        %v1336 = vmul.f32 %v841, %v1260
        %v1337 = vmul.f32 %v843, %v1262
        %v1338 = vmul.f32 %v734, %v1153
        %v1339 = vmul.f32 %v736, %v1155
        %v1340 = vmul.f32 %v847, %v1266
        %v1341 = vmul.f32 %v849, %v1268
        %v1342 = vmul.f32 %v738, %v1157
        %v1343 = vmul.f32 %v740, %v1159
        %v1344 = vmul.f32 %v851, %v1270
        %v1345 = vmul.f32 %v853, %v1272
        %v1346 = vmul.f32 %v744, %v1163
        %v1347 = vmul.f32 %v746, %v1165
        %v1348 = vmul.f32 %v857, %v1276
        %v1349 = vmul.f32 %v859, %v1278
        %v1350 = vmul.f32 %v748, %v1167
        %v1351 = vmul.f32 %v750, %v1169
        %v1352 = vmul.f32 %v861, %v1280
        %v1353 = vmul.f32 %v863, %v1282
        %v1354 = vmul.f32 %v754, %v1173
        %v1355 = vmul.f32 %v756, %v1175
        %v1356 = vmul.f32 %v867, %v1286
        %v1357 = vmul.f32 %v869, %v1288
        %v1358 = vmul.f32 %v758, %v1177
        %v1359 = vmul.f32 %v760, %v1179
        %v1360 = vmul.f32 %v871, %v1290
        %v1361 = vmul.f32 %v873, %v1292
        %v1362 = vmul.f32 %v764, %v1183
        %v1363 = vmul.f32 %v766, %v1185
        %v1364 = vmul.f32 %v877, %v1296
        %v1365 = vmul.f32 %v879, %v1298
        %v1366 = vmul.f32 %v768, %v1187
        %v1367 = vmul.f32 %v770, %v1189
        %v1368 = vmul.f32 %v881, %v1300
        %v1369 = vmul.f32 %v883, %v1302
        %v1370 = vmul.f32 %v774, %v1193
        %v1371 = vmul.f32 %v776, %v1195
        %v1372 = vmul.f32 %v887, %v1306
        %v1373 = vmul.f32 %v889, %v1308
        %v1374 = vmul.f32 %v778, %v1197
        %v1375 = vmul.f32 %v780, %v1199
        %v1376 = vmul.f32 %v891, %v1310
        %v1377 = vmul.f32 %v893, %v1312
        %v1378 = vld [vmem:[#allocation8] sm:$0xff]
        %v1379 = vld [vmem:[#allocation8 + $0x8] sm:$0xff]
        %v1380 = vld [vmem:[#allocation8 + $0x10] sm:$0xff]
        %v1381 = vld [vmem:[#allocation8 + $0x18] sm:$0xff]
        %v1382 = vld [vmem:[#allocation8 + $0x20] sm:$0xff]
        %v1383 = vld [vmem:[#allocation8 + $0x28] sm:$0xff]
        %v1384 = vld [vmem:[#allocation8 + $0x30] sm:$0xff]
        %v1385 = vld [vmem:[#allocation8 + $0x38] sm:$0xff]
        %v1386 = vld [vmem:[#allocation8 + $0x40] sm:$0xff]
        %v1387 = vld [vmem:[#allocation8 + $0x48] sm:$0xff]
        %v1388 = vld [vmem:[#allocation8 + $0x50] sm:$0xff]
        %v1389 = vld [vmem:[#allocation8 + $0x58] sm:$0xff]
        %v1390 = vld [vmem:[#allocation8 + $0x60] sm:$0xff]
        %v1391 = vld [vmem:[#allocation8 + $0x68] sm:$0xff]
        %v1392 = vld [vmem:[#allocation8 + $0x70] sm:$0xff]
        %v1393 = vld [vmem:[#allocation8 + $0x78] sm:$0xff]
        %v1394 = vld [vmem:[#allocation8 + $0x80] sm:$0xff]
        %v1395 = vld [vmem:[#allocation8 + $0x88] sm:$0xff]
        %v1396 = vld [vmem:[#allocation8 + $0x90] sm:$0xff]
        %v1397 = vld [vmem:[#allocation8 + $0x98] sm:$0xff]
        %v1398 = vld [vmem:[#allocation8 + $0xa0] sm:$0xff]
        %v1399 = vld [vmem:[#allocation8 + $0xa8] sm:$0xff]
        %v1400 = vld [vmem:[#allocation8 + $0xb0] sm:$0xff]
        %v1401 = vld [vmem:[#allocation8 + $0xb8] sm:$0xff]
        %v1402 = vld [vmem:[#allocation8 + $0xc0] sm:$0xff]
        %v1403 = vld [vmem:[#allocation8 + $0xc8] sm:$0xff]
        %v1404 = vld [vmem:[#allocation8 + $0xd0] sm:$0xff]
        %v1405 = vld [vmem:[#allocation8 + $0xd8] sm:$0xff]
        %v1406 = vld [vmem:[#allocation8 + $0xe0] sm:$0xff]
        %v1407 = vld [vmem:[#allocation8 + $0xe8] sm:$0xff]
        %v1408 = vld [vmem:[#allocation8 + $0xf0] sm:$0xff]
        %v1409 = vld [vmem:[#allocation8 + $0xf8] sm:$0xff]
        %v1410 = vld [vmem:[#allocation8 + $0x100] sm:$0xff]
        %v1411 = vld [vmem:[#allocation8 + $0x108] sm:$0xff]
        %v1412 = vld [vmem:[#allocation8 + $0x110] sm:$0xff]
        %v1413 = vld [vmem:[#allocation8 + $0x118] sm:$0xff]
        %v1414 = vld [vmem:[#allocation8 + $0x120] sm:$0xff]
        %v1415 = vld [vmem:[#allocation8 + $0x128] sm:$0xff]
        %v1416 = vld [vmem:[#allocation8 + $0x130] sm:$0xff]
        %v1417 = vld [vmem:[#allocation8 + $0x138] sm:$0xff]
        %v1418 = vld [vmem:[#allocation8 + $0x140] sm:$0xff]
        %v1419 = vld [vmem:[#allocation8 + $0x148] sm:$0xff]
        %v1420 = vld [vmem:[#allocation8 + $0x150] sm:$0xff]
        %v1421 = vld [vmem:[#allocation8 + $0x158] sm:$0xff]
        %v1422 = vld [vmem:[#allocation8 + $0x160] sm:$0xff]
        %v1423 = vld [vmem:[#allocation8 + $0x168] sm:$0xff]
        %v1424 = vld [vmem:[#allocation8 + $0x170] sm:$0xff]
        %v1425 = vld [vmem:[#allocation8 + $0x178] sm:$0xff]
        %v1426 = vld [vmem:[#allocation8 + $0x180] sm:$0xff]
        %v1427 = vld [vmem:[#allocation8 + $0x188] sm:$0xff]
        %v1428 = vld [vmem:[#allocation8 + $0x190] sm:$0xff]
        %v1429 = vld [vmem:[#allocation8 + $0x198] sm:$0xff]
        %v1430 = vld [vmem:[#allocation8 + $0x1a0] sm:$0xff]
        %v1431 = vld [vmem:[#allocation8 + $0x1a8] sm:$0xff]
        %v1432 = vld [vmem:[#allocation8 + $0x1b0] sm:$0xff]
        %v1433 = vld [vmem:[#allocation8 + $0x1b8] sm:$0xff]
        %v1434 = vld [vmem:[#allocation8 + $0x1c0] sm:$0xff]
        %v1435 = vld [vmem:[#allocation8 + $0x1c8] sm:$0xff]
        %v1436 = vld [vmem:[#allocation8 + $0x1d0] sm:$0xff]
        %v1437 = vld [vmem:[#allocation8 + $0x1d8] sm:$0xff]
        %v1438 = vld [vmem:[#allocation8 + $0x1e0] sm:$0xff]
        %v1439 = vld [vmem:[#allocation8 + $0x1e8] sm:$0xff]
        %v1440 = vld [vmem:[#allocation8 + $0x1f0] sm:$0xff]
        %v1441 = vld [vmem:[#allocation8 + $0x1f8] sm:$0xff]
        %v1442 = vld [vmem:[#allocation8 + $0x200] sm:$0xff]
        %v1443 = vld [vmem:[#allocation8 + $0x208] sm:$0xff]
        %v1444 = vld [vmem:[#allocation8 + $0x210] sm:$0xff]
        %v1445 = vld [vmem:[#allocation8 + $0x218] sm:$0xff]
        %v1446 = vld [vmem:[#allocation8 + $0x220] sm:$0xff]
        %v1447 = vld [vmem:[#allocation8 + $0x228] sm:$0xff]
        %v1448 = vld [vmem:[#allocation8 + $0x230] sm:$0xff]
        %v1449 = vld [vmem:[#allocation8 + $0x238] sm:$0xff]
        %v1450 = vld [vmem:[#allocation8 + $0x240] sm:$0xff]
        %v1451 = vld [vmem:[#allocation8 + $0x248] sm:$0xff]
        %v1452 = vld [vmem:[#allocation8 + $0x250] sm:$0xff]
        %v1453 = vld [vmem:[#allocation8 + $0x258] sm:$0xff]
        %v1454 = vld [vmem:[#allocation8 + $0x260] sm:$0xff]
        %v1455 = vld [vmem:[#allocation8 + $0x268] sm:$0xff]
        %v1456 = vld [vmem:[#allocation8 + $0x270] sm:$0xff]
        %v1457 = vld [vmem:[#allocation8 + $0x278] sm:$0xff]
        %v1458 = vld [vmem:[#allocation8 + $0x280] sm:$0xff]
        %v1459 = vld [vmem:[#allocation8 + $0x288] sm:$0xff]
        %v1460 = vld [vmem:[#allocation8 + $0x290] sm:$0xff]
        %v1461 = vld [vmem:[#allocation8 + $0x298] sm:$0xff]
        %v1462 = vld [vmem:[#allocation8 + $0x2a0] sm:$0xff]
        %v1463 = vld [vmem:[#allocation8 + $0x2a8] sm:$0xff]
        %v1464 = vld [vmem:[#allocation8 + $0x2b0] sm:$0xff]
        %v1465 = vld [vmem:[#allocation8 + $0x2b8] sm:$0xff]
        %v1466 = vld [vmem:[#allocation8 + $0x2c0] sm:$0xff]
        %v1467 = vld [vmem:[#allocation8 + $0x2c8] sm:$0xff]
        %v1468 = vld [vmem:[#allocation8 + $0x2d0] sm:$0xff]
        %v1469 = vld [vmem:[#allocation8 + $0x2d8] sm:$0xff]
        %v1470 = vld [vmem:[#allocation8 + $0x2e0] sm:$0xff]
        %v1471 = vld [vmem:[#allocation8 + $0x2e8] sm:$0xff]
        %v1472 = vld [vmem:[#allocation8 + $0x2f0] sm:$0xff]
        %v1473 = vld [vmem:[#allocation8 + $0x2f8] sm:$0xff]
        %v1474 = vld [vmem:[#allocation8 + $0x300] sm:$0xff]
        %v1475 = vld [vmem:[#allocation8 + $0x308] sm:$0xff]
        %v1476 = vld [vmem:[#allocation8 + $0x310] sm:$0xff]
        %v1477 = vld [vmem:[#allocation8 + $0x318] sm:$0xff]
        %v1478 = vld [vmem:[#allocation8 + $0x320] sm:$0xff]
        %v1479 = vld [vmem:[#allocation8 + $0x328] sm:$0xff]
        %v1480 = vld [vmem:[#allocation8 + $0x330] sm:$0xff]
        %v1481 = vld [vmem:[#allocation8 + $0x338] sm:$0xff]
        %v1482 = vld [vmem:[#allocation8 + $0x340] sm:$0xff]
        %v1483 = vld [vmem:[#allocation8 + $0x348] sm:$0xff]
        %v1484 = vld [vmem:[#allocation8 + $0x350] sm:$0xff]
        %v1485 = vld [vmem:[#allocation8 + $0x358] sm:$0xff]
        %v1486 = vld [vmem:[#allocation8 + $0x360] sm:$0xff]
        %v1487 = vld [vmem:[#allocation8 + $0x368] sm:$0xff]
        %v1488 = vld [vmem:[#allocation8 + $0x370] sm:$0xff]
        %v1489 = vld [vmem:[#allocation8 + $0x378] sm:$0xff]
        %v1490 = vld [vmem:[#allocation8 + $0x380] sm:$0xff]
        %v1491 = vld [vmem:[#allocation8 + $0x388] sm:$0xff]
        %v1492 = vld [vmem:[#allocation8 + $0x390] sm:$0xff]
        %v1493 = vld [vmem:[#allocation8 + $0x398] sm:$0xff]
        %v1494 = vld [vmem:[#allocation8 + $0x3a0] sm:$0xff]
        %v1495 = vld [vmem:[#allocation8 + $0x3a8] sm:$0xff]
        %v1496 = vld [vmem:[#allocation8 + $0x3b0] sm:$0xff]
        %v1497 = vld [vmem:[#allocation8 + $0x3b8] sm:$0xff]
        %v1498 = vld [vmem:[#allocation8 + $0x3c0] sm:$0xff]
        %v1499 = vld [vmem:[#allocation8 + $0x3c8] sm:$0xff]
        %v1500 = vld [vmem:[#allocation8 + $0x3d0] sm:$0xff]
        %v1501 = vld [vmem:[#allocation8 + $0x3d8] sm:$0xff]
        %v1502 = vld [vmem:[#allocation8 + $0x3e0] sm:$0xff]
        %v1503 = vld [vmem:[#allocation8 + $0x3e8] sm:$0xff]
        %v1504 = vld [vmem:[#allocation8 + $0x3f0] sm:$0xff]
        %v1505 = vld [vmem:[#allocation8 + $0x3f8] sm:$0xff]
        %v1506 = vld [vmem:[#allocation8 + $0x400] sm:$0xff]
        %v1507 = vld [vmem:[#allocation8 + $0x408] sm:$0xff]
        %v1508 = vld [vmem:[#allocation8 + $0x410] sm:$0xff]
        %v1509 = vld [vmem:[#allocation8 + $0x418] sm:$0xff]
        %v1510 = vld [vmem:[#allocation8 + $0x420] sm:$0xff]
        %v1511 = vld [vmem:[#allocation8 + $0x428] sm:$0xff]
        %v1512 = vld [vmem:[#allocation8 + $0x430] sm:$0xff]
        %v1513 = vld [vmem:[#allocation8 + $0x438] sm:$0xff]
        %v1514 = vld [vmem:[#allocation8 + $0x440] sm:$0xff]
        %v1515 = vld [vmem:[#allocation8 + $0x448] sm:$0xff]
        %v1516 = vld [vmem:[#allocation8 + $0x450] sm:$0xff]
        %v1517 = vld [vmem:[#allocation8 + $0x458] sm:$0xff]
        %v1518 = vld [vmem:[#allocation8 + $0x460] sm:$0xff]
        %v1519 = vld [vmem:[#allocation8 + $0x468] sm:$0xff]
        %v1520 = vld [vmem:[#allocation8 + $0x470] sm:$0xff]
        %v1521 = vld [vmem:[#allocation8 + $0x478] sm:$0xff]
        %v1522 = vld [vmem:[#allocation8 + $0x480] sm:$0xff]
        %v1523 = vld [vmem:[#allocation8 + $0x488] sm:$0xff]
        %v1524 = vld [vmem:[#allocation8 + $0x490] sm:$0xff]
        %v1525 = vld [vmem:[#allocation8 + $0x498] sm:$0xff]
        %v1526 = vld [vmem:[#allocation8 + $0x4a0] sm:$0xff]
        %v1527 = vld [vmem:[#allocation8 + $0x4a8] sm:$0xff]
        %v1528 = vld [vmem:[#allocation8 + $0x4b0] sm:$0xff]
        %v1529 = vld [vmem:[#allocation8 + $0x4b8] sm:$0xff]
        %v1530 = vld [vmem:[#allocation8 + $0x4c0] sm:$0xff]
        %v1531 = vld [vmem:[#allocation8 + $0x4c8] sm:$0xff]
        %v1532 = vld [vmem:[#allocation8 + $0x4d0] sm:$0xff]
        %v1533 = vld [vmem:[#allocation8 + $0x4d8] sm:$0xff]
        %v1534 = vld [vmem:[#allocation8 + $0x4e0] sm:$0xff]
        %v1535 = vld [vmem:[#allocation8 + $0x4e8] sm:$0xff]
        %v1536 = vld [vmem:[#allocation8 + $0x4f0] sm:$0xff]
        %v1537 = vld [vmem:[#allocation8 + $0x4f8] sm:$0xff]
        %v1538 = vld [vmem:[#allocation8 + $0x500] sm:$0xff]
        %v1539 = vld [vmem:[#allocation8 + $0x508] sm:$0xff]
        %v1540 = vld [vmem:[#allocation8 + $0x510] sm:$0xff]
        %v1541 = vld [vmem:[#allocation8 + $0x518] sm:$0xff]
        %v1542 = vld [vmem:[#allocation8 + $0x520] sm:$0xff]
        %v1543 = vld [vmem:[#allocation8 + $0x528] sm:$0xff]
        %v1544 = vld [vmem:[#allocation8 + $0x530] sm:$0xff]
        %v1545 = vld [vmem:[#allocation8 + $0x538] sm:$0xff]
        %v1546 = vld [vmem:[#allocation8 + $0x540] sm:$0xff]
        %v1547 = vld [vmem:[#allocation8 + $0x548] sm:$0xff]
        %v1548 = vld [vmem:[#allocation8 + $0x550] sm:$0xff]
        %v1549 = vld [vmem:[#allocation8 + $0x558] sm:$0xff]
        %v1550 = vld [vmem:[#allocation8 + $0x560] sm:$0xff]
        %v1551 = vld [vmem:[#allocation8 + $0x568] sm:$0xff]
        %v1552 = vld [vmem:[#allocation8 + $0x570] sm:$0xff]
        %v1553 = vld [vmem:[#allocation8 + $0x578] sm:$0xff]
        %v1554 = vld [vmem:[#allocation8 + $0x580] sm:$0xff]
        %v1555 = vld [vmem:[#allocation8 + $0x588] sm:$0xff]
        %v1556 = vld [vmem:[#allocation8 + $0x590] sm:$0xff]
        %v1557 = vld [vmem:[#allocation8 + $0x598] sm:$0xff]
        %v1558 = vld [vmem:[#allocation8 + $0x5a0] sm:$0xff]
        %v1559 = vld [vmem:[#allocation8 + $0x5a8] sm:$0xff]
        %v1560 = vld [vmem:[#allocation8 + $0x5b0] sm:$0xff]
        %v1561 = vld [vmem:[#allocation8 + $0x5b8] sm:$0xff]
        %v1562 = vld [vmem:[#allocation8 + $0x5c0] sm:$0xff]
        %v1563 = vld [vmem:[#allocation8 + $0x5c8] sm:$0xff]
        %v1564 = vld [vmem:[#allocation8 + $0x5d0] sm:$0xff]
        %v1565 = vld [vmem:[#allocation8 + $0x5d8] sm:$0xff]
        %v1566 = vld [vmem:[#allocation8 + $0x5e0] sm:$0xff]
        %v1567 = vld [vmem:[#allocation8 + $0x5e8] sm:$0xff]
        %v1568 = vld [vmem:[#allocation8 + $0x5f0] sm:$0xff]
        %v1569 = vld [vmem:[#allocation8 + $0x5f8] sm:$0xff]
        %v1570 = vld [vmem:[#allocation8 + $0x600] sm:$0xff]
        %v1571 = vld [vmem:[#allocation8 + $0x608] sm:$0xff]
        %v1572 = vld [vmem:[#allocation8 + $0x610] sm:$0xff]
        %v1573 = vld [vmem:[#allocation8 + $0x618] sm:$0xff]
        %v1574 = vld [vmem:[#allocation8 + $0x620] sm:$0xff]
        %v1575 = vld [vmem:[#allocation8 + $0x628] sm:$0xff]
        %v1576 = vld [vmem:[#allocation8 + $0x630] sm:$0xff]
        %v1577 = vld [vmem:[#allocation8 + $0x638] sm:$0xff]
        %v1578 = vld [vmem:[#allocation8 + $0x640] sm:$0xff]
        %v1579 = vld [vmem:[#allocation8 + $0x648] sm:$0xff]
        %v1580 = vld [vmem:[#allocation8 + $0x650] sm:$0xff]
        %v1581 = vld [vmem:[#allocation8 + $0x658] sm:$0xff]
        %v1582 = vld [vmem:[#allocation8 + $0x660] sm:$0xff]
        %v1583 = vld [vmem:[#allocation8 + $0x668] sm:$0xff]
        %v1584 = vld [vmem:[#allocation8 + $0x670] sm:$0xff]
        %v1585 = vld [vmem:[#allocation8 + $0x678] sm:$0xff]
        %v1586 = vld [vmem:[#allocation8 + $0x680] sm:$0xff]
        %v1587 = vld [vmem:[#allocation8 + $0x688] sm:$0xff]
        %v1588 = vld [vmem:[#allocation8 + $0x690] sm:$0xff]
        %v1589 = vld [vmem:[#allocation8 + $0x698] sm:$0xff]
        %v1590 = vld [vmem:[#allocation8 + $0x6a0] sm:$0xff]
        %v1591 = vld [vmem:[#allocation8 + $0x6a8] sm:$0xff]
        %v1592 = vld [vmem:[#allocation8 + $0x6b0] sm:$0xff]
        %v1593 = vld [vmem:[#allocation8 + $0x6b8] sm:$0xff]
        %v1594 = vld [vmem:[#allocation8 + $0x6c0] sm:$0xff]
        %v1595 = vld [vmem:[#allocation8 + $0x6c8] sm:$0xff]
        %v1596 = vld [vmem:[#allocation8 + $0x6d0] sm:$0xff]
        %v1597 = vld [vmem:[#allocation8 + $0x6d8] sm:$0xff]
        %v1598 = vld [vmem:[#allocation8 + $0x6e0] sm:$0xff]
        %v1599 = vld [vmem:[#allocation8 + $0x6e8] sm:$0xff]
        %v1600 = vld [vmem:[#allocation8 + $0x6f0] sm:$0xff]
        %v1601 = vld [vmem:[#allocation8 + $0x6f8] sm:$0xff]
        %v1602 = vld [vmem:[#allocation8 + $0x700] sm:$0xff]
        %v1603 = vld [vmem:[#allocation8 + $0x708] sm:$0xff]
        %v1604 = vld [vmem:[#allocation8 + $0x710] sm:$0xff]
        %v1605 = vld [vmem:[#allocation8 + $0x718] sm:$0xff]
        %v1606 = vld [vmem:[#allocation8 + $0x720] sm:$0xff]
        %v1607 = vld [vmem:[#allocation8 + $0x728] sm:$0xff]
        %v1608 = vld [vmem:[#allocation8 + $0x730] sm:$0xff]
        %v1609 = vld [vmem:[#allocation8 + $0x738] sm:$0xff]
        %v1610 = vld [vmem:[#allocation8 + $0x740] sm:$0xff]
        %v1611 = vld [vmem:[#allocation8 + $0x748] sm:$0xff]
        %v1612 = vld [vmem:[#allocation8 + $0x750] sm:$0xff]
        %v1613 = vld [vmem:[#allocation8 + $0x758] sm:$0xff]
        %v1614 = vld [vmem:[#allocation8 + $0x760] sm:$0xff]
        %v1615 = vld [vmem:[#allocation8 + $0x768] sm:$0xff]
        %v1616 = vld [vmem:[#allocation8 + $0x770] sm:$0xff]
        %v1617 = vld [vmem:[#allocation8 + $0x778] sm:$0xff]
        %v1618 = vld [vmem:[#allocation8 + $0x780] sm:$0xff]
        %v1619 = vld [vmem:[#allocation8 + $0x788] sm:$0xff]
        %v1620 = vld [vmem:[#allocation8 + $0x790] sm:$0xff]
        %v1621 = vld [vmem:[#allocation8 + $0x798] sm:$0xff]
        %v1622 = vld [vmem:[#allocation8 + $0x7a0] sm:$0xff]
        %v1623 = vld [vmem:[#allocation8 + $0x7a8] sm:$0xff]
        %v1624 = vld [vmem:[#allocation8 + $0x7b0] sm:$0xff]
        %v1625 = vld [vmem:[#allocation8 + $0x7b8] sm:$0xff]
        %v1626 = vld [vmem:[#allocation8 + $0x7c0] sm:$0xff]
        %v1627 = vld [vmem:[#allocation8 + $0x7c8] sm:$0xff]
        %v1628 = vld [vmem:[#allocation8 + $0x7d0] sm:$0xff]
        %v1629 = vld [vmem:[#allocation8 + $0x7d8] sm:$0xff]
        %v1630 = vld [vmem:[#allocation8 + $0x7e0] sm:$0xff]
        %v1631 = vld [vmem:[#allocation8 + $0x7e8] sm:$0xff]
        %v1632 = vld [vmem:[#allocation8 + $0x7f0] sm:$0xff]
        %v1633 = vld [vmem:[#allocation8 + $0x7f8] sm:$0xff]
        %v1634 = vld [vmem:[#allocation8 + $0x800] sm:$0xff]
        %v1635 = vld [vmem:[#allocation8 + $0x808] sm:$0xff]
        %v1636 = vld [vmem:[#allocation8 + $0x810] sm:$0xff]
        %v1637 = vld [vmem:[#allocation8 + $0x818] sm:$0xff]
        %v1638 = vld [vmem:[#allocation8 + $0x820] sm:$0xff]
        %v1639 = vld [vmem:[#allocation8 + $0x828] sm:$0xff]
        %v1640 = vld [vmem:[#allocation8 + $0x830] sm:$0xff]
        %v1641 = vld [vmem:[#allocation8 + $0x838] sm:$0xff]
        %v1642 = vld [vmem:[#allocation8 + $0x840] sm:$0xff]
        %v1643 = vld [vmem:[#allocation8 + $0x848] sm:$0xff]
        %v1644 = vld [vmem:[#allocation8 + $0x850] sm:$0xff]
        %v1645 = vld [vmem:[#allocation8 + $0x858] sm:$0xff]
        %v1646 = vld [vmem:[#allocation8 + $0x860] sm:$0xff]
        %v1647 = vld [vmem:[#allocation8 + $0x868] sm:$0xff]
        %v1648 = vld [vmem:[#allocation8 + $0x870] sm:$0xff]
        %v1649 = vld [vmem:[#allocation8 + $0x878] sm:$0xff]
        %v1650 = vld [vmem:[#allocation8 + $0x880] sm:$0xff]
        %v1651 = vld [vmem:[#allocation8 + $0x888] sm:$0xff]
        %v1652 = vld [vmem:[#allocation8 + $0x890] sm:$0xff]
        %v1653 = vld [vmem:[#allocation8 + $0x898] sm:$0xff]
        %v1654 = vld [vmem:[#allocation8 + $0x8a0] sm:$0xff]
        %v1655 = vld [vmem:[#allocation8 + $0x8a8] sm:$0xff]
        %v1656 = vld [vmem:[#allocation8 + $0x8b0] sm:$0xff]
        %v1657 = vld [vmem:[#allocation8 + $0x8b8] sm:$0xff]
        %v1658 = vld [vmem:[#allocation8 + $0x8c0] sm:$0xff]
        %v1659 = vld [vmem:[#allocation8 + $0x8c8] sm:$0xff]
        %v1660 = vld [vmem:[#allocation8 + $0x8d0] sm:$0xff]
        %v1661 = vld [vmem:[#allocation8 + $0x8d8] sm:$0xff]
        %v1662 = vld [vmem:[#allocation8 + $0x8e0] sm:$0xff]
        %v1663 = vld [vmem:[#allocation8 + $0x8e8] sm:$0xff]
        %v1664 = vld [vmem:[#allocation8 + $0x8f0] sm:$0xff]
        %v1665 = vld [vmem:[#allocation8 + $0x8f8] sm:$0xff]
        %v1666 = vld [vmem:[#allocation8 + $0x900] sm:$0xff]
        %v1667 = vld [vmem:[#allocation8 + $0x908] sm:$0xff]
        %v1668 = vld [vmem:[#allocation8 + $0x910] sm:$0xff]
        %v1669 = vld [vmem:[#allocation8 + $0x918] sm:$0xff]
        %v1670 = vld [vmem:[#allocation8 + $0x920] sm:$0xff]
        %v1671 = vld [vmem:[#allocation8 + $0x928] sm:$0xff]
        %v1672 = vld [vmem:[#allocation8 + $0x930] sm:$0xff]
        %v1673 = vld [vmem:[#allocation8 + $0x938] sm:$0xff]
        %v1674 = vld [vmem:[#allocation8 + $0x940] sm:$0xff]
        %v1675 = vld [vmem:[#allocation8 + $0x948] sm:$0xff]
        %v1676 = vld [vmem:[#allocation8 + $0x950] sm:$0xff]
        %v1677 = vld [vmem:[#allocation8 + $0x958] sm:$0xff]
        %v1678 = vld [vmem:[#allocation8 + $0x960] sm:$0xff]
        %v1679 = vld [vmem:[#allocation8 + $0x968] sm:$0xff]
        %v1680 = vld [vmem:[#allocation8 + $0x970] sm:$0xff]
        %v1681 = vld [vmem:[#allocation8 + $0x978] sm:$0xff]
        %v1682 = vld [vmem:[#allocation8 + $0x980] sm:$0xff]
        %v1683 = vld [vmem:[#allocation8 + $0x988] sm:$0xff]
        %v1684 = vld [vmem:[#allocation8 + $0x990] sm:$0xff]
        %v1685 = vld [vmem:[#allocation8 + $0x998] sm:$0xff]
        %v1686 = vld [vmem:[#allocation8 + $0x9a0] sm:$0xff]
        %v1687 = vld [vmem:[#allocation8 + $0x9a8] sm:$0xff]
        %v1688 = vld [vmem:[#allocation8 + $0x9b0] sm:$0xff]
        %v1689 = vld [vmem:[#allocation8 + $0x9b8] sm:$0xff]
        %v1690 = vld [vmem:[#allocation8 + $0x9c0] sm:$0xff]
        %v1691 = vld [vmem:[#allocation8 + $0x9c8] sm:$0xff]
        %v1692 = vld [vmem:[#allocation8 + $0x9d0] sm:$0xff]
        %v1693 = vld [vmem:[#allocation8 + $0x9d8] sm:$0xff]
        %v1694 = vld [vmem:[#allocation8 + $0x9e0] sm:$0xff]
        %v1695 = vld [vmem:[#allocation8 + $0x9e8] sm:$0xff]
        %v1696 = vld [vmem:[#allocation8 + $0x9f0] sm:$0xff]
        %v1697 = vld [vmem:[#allocation8 + $0x9f8] sm:$0xff]
        %v1698 = vld [vmem:[#allocation8 + $0xa00] sm:$0xff]
        %v1699 = vld [vmem:[#allocation8 + $0xa08] sm:$0xff]
        %v1700 = vld [vmem:[#allocation8 + $0xa10] sm:$0xff]
        %v1701 = vld [vmem:[#allocation8 + $0xa18] sm:$0xff]
        %v1702 = vld [vmem:[#allocation8 + $0xa20] sm:$0xff]
        %v1703 = vld [vmem:[#allocation8 + $0xa28] sm:$0xff]
        %v1704 = vld [vmem:[#allocation8 + $0xa30] sm:$0xff]
        %v1705 = vld [vmem:[#allocation8 + $0xa38] sm:$0xff]
        %v1706 = vld [vmem:[#allocation8 + $0xa40] sm:$0xff]
        %v1707 = vld [vmem:[#allocation8 + $0xa48] sm:$0xff]
        %v1708 = vld [vmem:[#allocation8 + $0xa50] sm:$0xff]
        %v1709 = vld [vmem:[#allocation8 + $0xa58] sm:$0xff]
        %v1710 = vld [vmem:[#allocation8 + $0xa60] sm:$0xff]
        %v1711 = vld [vmem:[#allocation8 + $0xa68] sm:$0xff]
        %v1712 = vld [vmem:[#allocation8 + $0xa70] sm:$0xff]
        %v1713 = vld [vmem:[#allocation8 + $0xa78] sm:$0xff]
        %v1714 = vld [vmem:[#allocation8 + $0xa80] sm:$0xff]
        %v1715 = vld [vmem:[#allocation8 + $0xa88] sm:$0xff]
        %v1716 = vld [vmem:[#allocation8 + $0xa90] sm:$0xff]
        %v1717 = vld [vmem:[#allocation8 + $0xa98] sm:$0xff]
        %v1718 = vld [vmem:[#allocation8 + $0xaa0] sm:$0xff]
        %v1719 = vld [vmem:[#allocation8 + $0xaa8] sm:$0xff]
        %v1720 = vld [vmem:[#allocation8 + $0xab0] sm:$0xff]
        %v1721 = vld [vmem:[#allocation8 + $0xab8] sm:$0xff]
        %v1722 = vld [vmem:[#allocation8 + $0xac0] sm:$0xff]
        %v1723 = vld [vmem:[#allocation8 + $0xac8] sm:$0xff]
        %v1724 = vld [vmem:[#allocation8 + $0xad0] sm:$0xff]
        %v1725 = vld [vmem:[#allocation8 + $0xad8] sm:$0xff]
        %v1726 = vld [vmem:[#allocation8 + $0xae0] sm:$0xff]
        %v1727 = vld [vmem:[#allocation8 + $0xae8] sm:$0xff]
        %v1728 = vld [vmem:[#allocation8 + $0xaf0] sm:$0xff]
        %v1729 = vld [vmem:[#allocation8 + $0xaf8] sm:$0xff]
        %v1730 = vld [vmem:[#allocation8 + $0xb00] sm:$0xff]
        %v1731 = vld [vmem:[#allocation8 + $0xb08] sm:$0xff]
        %v1732 = vld [vmem:[#allocation8 + $0xb10] sm:$0xff]
        %v1733 = vld [vmem:[#allocation8 + $0xb18] sm:$0xff]
        %v1734 = vld [vmem:[#allocation8 + $0xb20] sm:$0xff]
        %v1735 = vld [vmem:[#allocation8 + $0xb28] sm:$0xff]
        %v1736 = vld [vmem:[#allocation8 + $0xb30] sm:$0xff]
        %v1737 = vld [vmem:[#allocation8 + $0xb38] sm:$0xff]
        %v1738 = vld [vmem:[#allocation8 + $0xb40] sm:$0xff]
        %v1739 = vld [vmem:[#allocation8 + $0xb48] sm:$0xff]
        %v1740 = vld [vmem:[#allocation8 + $0xb50] sm:$0xff]
        %v1741 = vld [vmem:[#allocation8 + $0xb58] sm:$0xff]
        %v1742 = vld [vmem:[#allocation8 + $0xb60] sm:$0xff]
        %v1743 = vld [vmem:[#allocation8 + $0xb68] sm:$0xff]
        %v1744 = vld [vmem:[#allocation8 + $0xb70] sm:$0xff]
        %v1745 = vld [vmem:[#allocation8 + $0xb78] sm:$0xff]
        %v1746 = vld [vmem:[#allocation8 + $0xb80] sm:$0xff]
        %v1747 = vld [vmem:[#allocation8 + $0xb88] sm:$0xff]
        %v1748 = vld [vmem:[#allocation8 + $0xb90] sm:$0xff]
        %v1749 = vld [vmem:[#allocation8 + $0xb98] sm:$0xff]
        %v1750 = vld [vmem:[#allocation8 + $0xba0] sm:$0xff]
        %v1751 = vld [vmem:[#allocation8 + $0xba8] sm:$0xff]
        %v1752 = vld [vmem:[#allocation8 + $0xbb0] sm:$0xff]
        %v1753 = vld [vmem:[#allocation8 + $0xbb8] sm:$0xff]
        %v1754 = vld [vmem:[#allocation8 + $0xbc0] sm:$0xff]
        %v1755 = vld [vmem:[#allocation8 + $0xbc8] sm:$0xff]
        %v1756 = vld [vmem:[#allocation8 + $0xbd0] sm:$0xff]
        %v1757 = vld [vmem:[#allocation8 + $0xbd8] sm:$0xff]
        %v1758 = vld [vmem:[#allocation8 + $0xbe0] sm:$0xff]
        %v1759 = vld [vmem:[#allocation8 + $0xbe8] sm:$0xff]
        %v1760 = vld [vmem:[#allocation8 + $0xbf0] sm:$0xff]
        %v1761 = vld [vmem:[#allocation8 + $0xbf8] sm:$0xff]
        %v1762 = vld [vmem:[#allocation8 + $0xc00] sm:$0xff]
        %v1763 = vld [vmem:[#allocation8 + $0xc08] sm:$0xff]
        %v1764 = vld [vmem:[#allocation8 + $0xc10] sm:$0xff]
        %v1765 = vld [vmem:[#allocation8 + $0xc18] sm:$0xff]
        %v1766 = vld [vmem:[#allocation8 + $0xc20] sm:$0xff]
        %v1767 = vld [vmem:[#allocation8 + $0xc28] sm:$0xff]
        %v1768 = vld [vmem:[#allocation8 + $0xc30] sm:$0xff]
        %v1769 = vld [vmem:[#allocation8 + $0xc38] sm:$0xff]
        %v1770 = vld [vmem:[#allocation8 + $0xc40] sm:$0xff]
        %v1771 = vld [vmem:[#allocation8 + $0xc48] sm:$0xff]
        %v1772 = vld [vmem:[#allocation8 + $0xc50] sm:$0xff]
        %v1773 = vld [vmem:[#allocation8 + $0xc58] sm:$0xff]
        %v1774 = vld [vmem:[#allocation8 + $0xc60] sm:$0xff]
        %v1775 = vld [vmem:[#allocation8 + $0xc68] sm:$0xff]
        %v1776 = vld [vmem:[#allocation8 + $0xc70] sm:$0xff]
        %v1777 = vld [vmem:[#allocation8 + $0xc78] sm:$0xff]
        %v1778 = vld [vmem:[#allocation8 + $0xc80] sm:$0xff]
        %v1779 = vld [vmem:[#allocation8 + $0xc88] sm:$0xff]
        %v1780 = vld [vmem:[#allocation8 + $0xc90] sm:$0xff]
        %v1781 = vld [vmem:[#allocation8 + $0xc98] sm:$0xff]
        %v1782 = vld [vmem:[#allocation8 + $0xca0] sm:$0xff]
        %v1783 = vld [vmem:[#allocation8 + $0xca8] sm:$0xff]
        %v1784 = vld [vmem:[#allocation8 + $0xcb0] sm:$0xff]
        %v1785 = vld [vmem:[#allocation8 + $0xcb8] sm:$0xff]
        %v1786 = vld [vmem:[#allocation8 + $0xcc0] sm:$0xff]
        %v1787 = vld [vmem:[#allocation8 + $0xcc8] sm:$0xff]
        %v1788 = vld [vmem:[#allocation8 + $0xcd0] sm:$0xff]
        %v1789 = vld [vmem:[#allocation8 + $0xcd8] sm:$0xff]
        %v1790 = vld [vmem:[#allocation8 + $0xce0] sm:$0xff]
        %v1791 = vld [vmem:[#allocation8 + $0xce8] sm:$0xff]
        %v1792 = vld [vmem:[#allocation8 + $0xcf0] sm:$0xff]
        %v1793 = vld [vmem:[#allocation8 + $0xcf8] sm:$0xff]
        %v1794 = vld [vmem:[#allocation8 + $0xd00] sm:$0xff]
        %v1795 = vld [vmem:[#allocation8 + $0xd08] sm:$0xff]
        %v1796 = vld [vmem:[#allocation8 + $0xd10] sm:$0xff]
        %v1797 = vld [vmem:[#allocation8 + $0xd18] sm:$0xff]
        %v1798 = vld [vmem:[#allocation8 + $0xd20] sm:$0xff]
        %v1799 = vld [vmem:[#allocation8 + $0xd28] sm:$0xff]
        %v1800 = vld [vmem:[#allocation8 + $0xd30] sm:$0xff]
        %v1801 = vld [vmem:[#allocation8 + $0xd38] sm:$0xff]
        %v1802 = vld [vmem:[#allocation8 + $0xd40] sm:$0xff]
        %v1803 = vld [vmem:[#allocation8 + $0xd48] sm:$0xff]
        %v1804 = vld [vmem:[#allocation8 + $0xd50] sm:$0xff]
        %v1805 = vld [vmem:[#allocation8 + $0xd58] sm:$0xff]
        %v1806 = vld [vmem:[#allocation8 + $0xd60] sm:$0xff]
        %v1807 = vld [vmem:[#allocation8 + $0xd68] sm:$0xff]
        %v1808 = vld [vmem:[#allocation8 + $0xd70] sm:$0xff]
        %v1809 = vld [vmem:[#allocation8 + $0xd78] sm:$0xff]
        %v1810 = vld [vmem:[#allocation8 + $0xd80] sm:$0xff]
        %v1811 = vld [vmem:[#allocation8 + $0xd88] sm:$0xff]
        %v1812 = vld [vmem:[#allocation8 + $0xd90] sm:$0xff]
        %v1813 = vld [vmem:[#allocation8 + $0xd98] sm:$0xff]
        %v1814 = vld [vmem:[#allocation8 + $0xda0] sm:$0xff]
        %v1815 = vld [vmem:[#allocation8 + $0xda8] sm:$0xff]
        %v1816 = vld [vmem:[#allocation8 + $0xdb0] sm:$0xff]
        %v1817 = vld [vmem:[#allocation8 + $0xdb8] sm:$0xff]
        %v1818 = vld [vmem:[#allocation8 + $0xdc0] sm:$0xff]
        %v1819 = vld [vmem:[#allocation8 + $0xdc8] sm:$0xff]
        %v1820 = vld [vmem:[#allocation8 + $0xdd0] sm:$0xff]
        %v1821 = vld [vmem:[#allocation8 + $0xdd8] sm:$0xff]
        %v1822 = vld [vmem:[#allocation8 + $0xde0] sm:$0xff]
        %v1823 = vld [vmem:[#allocation8 + $0xde8] sm:$0xff]
        %v1824 = vld [vmem:[#allocation8 + $0xdf0] sm:$0xff]
        %v1825 = vld [vmem:[#allocation8 + $0xdf8] sm:$0xff]
        %v1826 = vld [vmem:[#allocation8 + $0xe00] sm:$0xff]
        %v1827 = vld [vmem:[#allocation8 + $0xe08] sm:$0xff]
        %v1828 = vld [vmem:[#allocation8 + $0xe10] sm:$0xff]
        %v1829 = vld [vmem:[#allocation8 + $0xe18] sm:$0xff]
        %v1830 = vld [vmem:[#allocation8 + $0xe20] sm:$0xff]
        %v1831 = vld [vmem:[#allocation8 + $0xe28] sm:$0xff]
        %v1832 = vld [vmem:[#allocation8 + $0xe30] sm:$0xff]
        %v1833 = vld [vmem:[#allocation8 + $0xe38] sm:$0xff]
        %v1834 = vld [vmem:[#allocation8 + $0xe40] sm:$0xff]
        %v1835 = vld [vmem:[#allocation8 + $0xe48] sm:$0xff]
        %v1836 = vld [vmem:[#allocation8 + $0xe50] sm:$0xff]
        %v1837 = vld [vmem:[#allocation8 + $0xe58] sm:$0xff]
        %v1838 = vld [vmem:[#allocation8 + $0xe60] sm:$0xff]
        %v1839 = vld [vmem:[#allocation8 + $0xe68] sm:$0xff]
        %v1840 = vld [vmem:[#allocation8 + $0xe70] sm:$0xff]
        %v1841 = vld [vmem:[#allocation8 + $0xe78] sm:$0xff]
        %v1842 = vld [vmem:[#allocation8 + $0xe80] sm:$0xff]
        %v1843 = vld [vmem:[#allocation8 + $0xe88] sm:$0xff]
        %v1844 = vld [vmem:[#allocation8 + $0xe90] sm:$0xff]
        %v1845 = vld [vmem:[#allocation8 + $0xe98] sm:$0xff]
        %v1846 = vld [vmem:[#allocation8 + $0xea0] sm:$0xff]
        %v1847 = vld [vmem:[#allocation8 + $0xea8] sm:$0xff]
        %v1848 = vld [vmem:[#allocation8 + $0xeb0] sm:$0xff]
        %v1849 = vld [vmem:[#allocation8 + $0xeb8] sm:$0xff]
        %v1850 = vld [vmem:[#allocation8 + $0xec0] sm:$0xff]
        %v1851 = vld [vmem:[#allocation8 + $0xec8] sm:$0xff]
        %v1852 = vld [vmem:[#allocation8 + $0xed0] sm:$0xff]
        %v1853 = vld [vmem:[#allocation8 + $0xed8] sm:$0xff]
        %v1854 = vld [vmem:[#allocation8 + $0xee0] sm:$0xff]
        %v1855 = vld [vmem:[#allocation8 + $0xee8] sm:$0xff]
        %v1856 = vld [vmem:[#allocation8 + $0xef0] sm:$0xff]
        %v1857 = vld [vmem:[#allocation8 + $0xef8] sm:$0xff]
        %v1858 = vld [vmem:[#allocation8 + $0xf00] sm:$0xff]
        %v1859 = vld [vmem:[#allocation8 + $0xf08] sm:$0xff]
        %v1860 = vld [vmem:[#allocation8 + $0xf10] sm:$0xff]
        %v1861 = vld [vmem:[#allocation8 + $0xf18] sm:$0xff]
        %v1862 = vld [vmem:[#allocation8 + $0xf20] sm:$0xff]
        %v1863 = vld [vmem:[#allocation8 + $0xf28] sm:$0xff]
        %v1864 = vld [vmem:[#allocation8 + $0xf30] sm:$0xff]
        %v1865 = vld [vmem:[#allocation8 + $0xf38] sm:$0xff]
        %v1866 = vld [vmem:[#allocation8 + $0xf40] sm:$0xff]
        %v1867 = vld [vmem:[#allocation8 + $0xf48] sm:$0xff]
        %v1868 = vld [vmem:[#allocation8 + $0xf50] sm:$0xff]
        %v1869 = vld [vmem:[#allocation8 + $0xf58] sm:$0xff]
        %v1870 = vld [vmem:[#allocation8 + $0xf60] sm:$0xff]
        %v1871 = vld [vmem:[#allocation8 + $0xf68] sm:$0xff]
        %v1872 = vld [vmem:[#allocation8 + $0xf70] sm:$0xff]
        %v1873 = vld [vmem:[#allocation8 + $0xf78] sm:$0xff]
        %v1874 = vld [vmem:[#allocation8 + $0xf80] sm:$0xff]
        %v1875 = vld [vmem:[#allocation8 + $0xf88] sm:$0xff]
        %v1876 = vld [vmem:[#allocation8 + $0xf90] sm:$0xff]
        %v1877 = vld [vmem:[#allocation8 + $0xf98] sm:$0xff]
        %v1878 = vld [vmem:[#allocation8 + $0xfa0] sm:$0xff]
        %v1879 = vld [vmem:[#allocation8 + $0xfa8] sm:$0xff]
        %v1880 = vld [vmem:[#allocation8 + $0xfb0] sm:$0xff]
        %v1881 = vld [vmem:[#allocation8 + $0xfb8] sm:$0xff]
        %v1882 = vld [vmem:[#allocation8 + $0xfc0] sm:$0xff]
        %v1883 = vld [vmem:[#allocation8 + $0xfc8] sm:$0xff]
        %v1884 = vld [vmem:[#allocation8 + $0xfd0] sm:$0xff]
        %v1885 = vld [vmem:[#allocation8 + $0xfd8] sm:$0xff]
        %v1886 = vld [vmem:[#allocation8 + $0xfe0] sm:$0xff]
        %v1887 = vld [vmem:[#allocation8 + $0xfe8] sm:$0xff]
        %v1888 = vld [vmem:[#allocation8 + $0xff0] sm:$0xff]
        %v1889 = vld [vmem:[#allocation8 + $0xff8] sm:$0xff]
        %v1890 = vld [vmem:[#allocation10] sm:$0xff]
        %v1892 = vlaneseq
        %v1893 = vshrl.u32 %v1892, 7
        %v1894 = vsub.s32 0, %v1893
        %v1895 = vrot.slane %v1890, %v1894
        %v1896 = vlaneseq
        %v1897 = vshrl.u32 %v1896, 7
        %v1898 = vsub.s32 1, %v1897
        %v1899 = vrot.slane %v1890, %v1898
        %v1900 = vlaneseq
        %v1901 = vshrl.u32 %v1900, 7
        %v1902 = vsub.s32 2, %v1901
        %v1903 = vrot.slane %v1890, %v1902
        %v1904 = vlaneseq
        %v1905 = vshrl.u32 %v1904, 7
        %v1906 = vsub.s32 3, %v1905
        %v1907 = vrot.slane %v1890, %v1906
        %v1908 = vlaneseq
        %v1909 = vshrl.u32 %v1908, 7
        %v1910 = vsub.s32 4, %v1909
        %v1911 = vrot.slane %v1890, %v1910
        %v1912 = vlaneseq
        %v1913 = vshrl.u32 %v1912, 7
        %v1914 = vsub.s32 5, %v1913
        %v1915 = vrot.slane %v1890, %v1914
        %v1916 = vlaneseq
        %v1917 = vshrl.u32 %v1916, 7
        %v1918 = vsub.s32 6, %v1917
        %v1919 = vrot.slane %v1890, %v1918
        %v1920 = vlaneseq
        %v1921 = vshrl.u32 %v1920, 7
        %v1922 = vsub.s32 7, %v1921
        %v1923 = vrot.slane %v1890, %v1922
        %1932 = vmatprep.subr.mxu0 %v1499
        %1933 = vmatpush1.msra.mxu0 %v1498
        %1934 = vmatprep.subr.mxu0 %v1491
        %1935 = vmatpush1.msra.mxu0 %v1490
        %1936 = vmatprep.subr.mxu0 %v1483
        %1937 = vmatpush1.msra.mxu0 %v1482
        %1938 = vmatprep.subr.mxu0 %v1475
        %1939 = vmatpush1.msra.mxu0 %v1474
        %1940 = vmatprep.subr.mxu0 %v1467
        %1941 = vmatpush1.msra.mxu0 %v1466
        %1942 = vmatprep.subr.mxu0 %v1459
        %1943 = vmatpush1.msra.mxu0 %v1458
        %1944 = vmatprep.subr.mxu0 %v1451
        %1945 = vmatpush1.msra.mxu0 %v1450
        %1946 = vmatprep.subr.mxu0 %v1443
        %1947 = vmatpush1.msra.mxu0 %v1442
        %1948 = vmatprep.subr.mxu0 %v1435
        %1949 = vmatpush1.msra.mxu0 %v1434
        %1950 = vmatprep.subr.mxu0 %v1427
        %1951 = vmatpush1.msra.mxu0 %v1426
        %1952 = vmatprep.subr.mxu0 %v1419
        %1953 = vmatpush1.msra.mxu0 %v1418
        %1954 = vmatprep.subr.mxu0 %v1411
        %1955 = vmatpush1.msra.mxu0 %v1410
        %1956 = vmatprep.subr.mxu0 %v1403
        %1957 = vmatpush1.msra.mxu0 %v1402
        %1958 = vmatprep.subr.mxu0 %v1395
        %1959 = vmatpush1.msra.mxu0 %v1394
        %1960 = vmatprep.subr.mxu0 %v1387
        %1961 = vmatpush1.msra.mxu0 %v1386
        %1962 = vmatprep.subr.mxu0 %v1379
        %1963 = vmatpush1.msra.mxu0 %v1378
        %1964 = vmatprep.subr.mxu0 %v1627
        %1965 = vmatpush2.msra.mxu0 %v1626
        %1966 = vmatprep.subr.mxu0 %v1619
        %1967 = vmatpush2.msra.mxu0 %v1618
        %1968 = vmatprep.subr.mxu0 %v1611
        %1969 = vmatpush2.msra.mxu0 %v1610
        %1970 = vmatprep.subr.mxu0 %v1603
        %1971 = vmatpush2.msra.mxu0 %v1602
        %1972 = vmatprep.subr.mxu0 %v1595
        %1973 = vmatpush2.msra.mxu0 %v1594
        %1974 = vmatprep.subr.mxu0 %v1587
        %1975 = vmatpush2.msra.mxu0 %v1586
        %1976 = vmatprep.subr.mxu0 %v1579
        %1977 = vmatpush2.msra.mxu0 %v1578
        %1978 = vmatprep.subr.mxu0 %v1571
        %1979 = vmatpush2.msra.mxu0 %v1570
        %1980 = vmatprep.subr.mxu0 %v1563
        %1981 = vmatpush2.msra.mxu0 %v1562
        %1982 = vmatprep.subr.mxu0 %v1555
        %1983 = vmatpush2.msra.mxu0 %v1554
        %1984 = vmatprep.subr.mxu0 %v1547
        %1985 = vmatpush2.msra.mxu0 %v1546
        %1986 = vmatprep.subr.mxu0 %v1539
        %1987 = vmatpush2.msra.mxu0 %v1538
        %1988 = vmatprep.subr.mxu0 %v1531
        %1989 = vmatpush2.msra.mxu0 %v1530
        %1990 = vmatprep.subr.mxu0 %v1523
        %1991 = vmatpush2.msra.mxu0 %v1522
        %1992 = vmatprep.subr.mxu0 %v1515
        %1993 = vmatpush2.msra.mxu0 %v1514
        %1994 = vmatprep.subr.mxu0 %v1507
        %1995 = vmatpush2.msra.mxu0 %v1506
        %1996 = vmatprep.mubr.f32.mxu0 %v1315
        %1997 = vmatmul.mubr.f32.gmra.mxu0 %v1314
        %v1998 = vpop.f32.mrf.mxu0
        %v1999 = vadd.f32 %v1895, %v1998
        %v2000 = vpop.f32.mrf.mxu0
        %v2001 = vadd.f32 %v1899, %v2000
        %2002 = vmatprep.mubr.f32.mxu0 %v1319
        %2003 = vmatmul.mubr.f32.gmra.mxu0 %v1318
        %v2004 = vpop.f32.mrf.mxu0
        %v2005 = vadd.f32 %v1895, %v2004
        %v2006 = vpop.f32.mrf.mxu0
        %v2007 = vadd.f32 %v1899, %v2006
        %2008 = vmatprep.mubr.f32.mxu0 %v1323
        %2009 = vmatmul.mubr.f32.gmra.mxu0 %v1322
        %v2010 = vpop.f32.mrf.mxu0
        %v2011 = vadd.f32 %v1895, %v2010
        %v2012 = vpop.f32.mrf.mxu0
        %v2013 = vadd.f32 %v1899, %v2012
        %2014 = vmatprep.mubr.f32.mxu0 %v1327
        %2015 = vmatmul.mubr.f32.gmra.mxu0 %v1326
        %v2016 = vpop.f32.mrf.mxu0
        %v2017 = vadd.f32 %v1895, %v2016
        %v2018 = vpop.f32.mrf.mxu0
        %v2019 = vadd.f32 %v1899, %v2018
        %2020 = vmatprep.mubr.f32.mxu0 %v1331
        %2021 = vmatmul.mubr.f32.gmra.mxu0 %v1330
        %v2022 = vpop.f32.mrf.mxu0
        %v2023 = vadd.f32 %v1895, %v2022
        %v2024 = vpop.f32.mrf.mxu0
        %v2025 = vadd.f32 %v1899, %v2024
        %2026 = vmatprep.mubr.f32.mxu0 %v1335
        %2027 = vmatmul.mubr.f32.gmra.mxu0 %v1334
        %v2028 = vpop.f32.mrf.mxu0
        %v2029 = vadd.f32 %v1895, %v2028
        %v2030 = vpop.f32.mrf.mxu0
        %v2031 = vadd.f32 %v1899, %v2030
        %2032 = vmatprep.mubr.f32.mxu0 %v1339
        %2033 = vmatmul.mubr.f32.gmra.mxu0 %v1338
        %v2034 = vpop.f32.mrf.mxu0
        %v2035 = vadd.f32 %v1895, %v2034
        %v2036 = vpop.f32.mrf.mxu0
        %v2037 = vadd.f32 %v1899, %v2036
        %2038 = vmatprep.mubr.f32.mxu0 %v1343
        %2039 = vmatmul.mubr.f32.gmra.mxu0 %v1342
        %v2040 = vpop.f32.mrf.mxu0
        %v2041 = vadd.f32 %v1895, %v2040
        %v2042 = vpop.f32.mrf.mxu0
        %v2043 = vadd.f32 %v1899, %v2042
        %2044 = vmatprep.mubr.f32.mxu0 %v1347
        %2045 = vmatmul.mubr.f32.gmra.mxu0 %v1346
        %v2046 = vpop.f32.mrf.mxu0
        %v2047 = vadd.f32 %v1895, %v2046
        %v2048 = vpop.f32.mrf.mxu0
        %v2049 = vadd.f32 %v1899, %v2048
        %2050 = vmatprep.mubr.f32.mxu0 %v1351
        %2051 = vmatmul.mubr.f32.gmra.mxu0 %v1350
        %v2052 = vpop.f32.mrf.mxu0
        %v2053 = vadd.f32 %v1895, %v2052
        %v2054 = vpop.f32.mrf.mxu0
        %v2055 = vadd.f32 %v1899, %v2054
        %2056 = vmatprep.mubr.f32.mxu0 %v1355
        %2057 = vmatmul.mubr.f32.gmra.mxu0 %v1354
        %v2058 = vpop.f32.mrf.mxu0
        %v2059 = vadd.f32 %v1895, %v2058
        %v2060 = vpop.f32.mrf.mxu0
        %v2061 = vadd.f32 %v1899, %v2060
        %2062 = vmatprep.mubr.f32.mxu0 %v1359
        %2063 = vmatmul.mubr.f32.gmra.mxu0 %v1358
        %v2064 = vpop.f32.mrf.mxu0
        %v2065 = vadd.f32 %v1895, %v2064
        %v2066 = vpop.f32.mrf.mxu0
        %v2067 = vadd.f32 %v1899, %v2066
        %2068 = vmatprep.mubr.f32.mxu0 %v1363
        %2069 = vmatmul.mubr.f32.gmra.mxu0 %v1362
        %v2070 = vpop.f32.mrf.mxu0
        %v2071 = vadd.f32 %v1895, %v2070
        %v2072 = vpop.f32.mrf.mxu0
        %v2073 = vadd.f32 %v1899, %v2072
        %2074 = vmatprep.mubr.f32.mxu0 %v1367
        %2075 = vmatmul.mubr.f32.gmra.mxu0 %v1366
        %v2076 = vpop.f32.mrf.mxu0
        %v2077 = vadd.f32 %v1895, %v2076
        %v2078 = vpop.f32.mrf.mxu0
        %v2079 = vadd.f32 %v1899, %v2078
        %2080 = vmatprep.mubr.f32.mxu0 %v1371
        %2081 = vmatmul.mubr.f32.gmra.mxu0 %v1370
        %v2082 = vpop.f32.mrf.mxu0
        %v2083 = vadd.f32 %v1895, %v2082
        %v2084 = vpop.f32.mrf.mxu0
        %v2085 = vadd.f32 %v1899, %v2084
        %2086 = vmatprep.mubr.f32.mxu0 %v1375
        %2087 = vmatmul.mubr.f32.gmra.mxu0 %v1374
        %v2088 = vpop.f32.mrf.mxu0
        %v2089 = vadd.f32 %v1895, %v2088
        %v2090 = vpop.f32.mrf.mxu0
        %v2091 = vadd.f32 %v1899, %v2090
        %2092 = vdwg.mxu0
        %2093 = vmatprep.subr.mxu0 %v1755
        %2094 = vmatpush1.msra.mxu0 %v1754
        %2095 = vmatprep.subr.mxu0 %v1747
        %2096 = vmatpush1.msra.mxu0 %v1746
        %2097 = vmatprep.subr.mxu0 %v1739
        %2098 = vmatpush1.msra.mxu0 %v1738
        %2099 = vmatprep.subr.mxu0 %v1731
        %2100 = vmatpush1.msra.mxu0 %v1730
        %2101 = vmatprep.subr.mxu0 %v1723
        %2102 = vmatpush1.msra.mxu0 %v1722
        %2103 = vmatprep.subr.mxu0 %v1715
        %2104 = vmatpush1.msra.mxu0 %v1714
        %2105 = vmatprep.subr.mxu0 %v1707
        %2106 = vmatpush1.msra.mxu0 %v1706
        %2107 = vmatprep.subr.mxu0 %v1699
        %2108 = vmatpush1.msra.mxu0 %v1698
        %2109 = vmatprep.subr.mxu0 %v1691
        %2110 = vmatpush1.msra.mxu0 %v1690
        %2111 = vmatprep.subr.mxu0 %v1683
        %2112 = vmatpush1.msra.mxu0 %v1682
        %2113 = vmatprep.subr.mxu0 %v1675
        %2114 = vmatpush1.msra.mxu0 %v1674
        %2115 = vmatprep.subr.mxu0 %v1667
        %2116 = vmatpush1.msra.mxu0 %v1666
        %2117 = vmatprep.subr.mxu0 %v1659
        %2118 = vmatpush1.msra.mxu0 %v1658
        %2119 = vmatprep.subr.mxu0 %v1651
        %2120 = vmatpush1.msra.mxu0 %v1650
        %2121 = vmatprep.subr.mxu0 %v1643
        %2122 = vmatpush1.msra.mxu0 %v1642
        %2123 = vmatprep.subr.mxu0 %v1635
        %2124 = vmatpush1.msra.mxu0 %v1634
        %2125 = vmatprep.subr.mxu0 %v1883
        %2126 = vmatpush2.msra.mxu0 %v1882
        %2127 = vmatprep.subr.mxu0 %v1875
        %2128 = vmatpush2.msra.mxu0 %v1874
        %2129 = vmatprep.subr.mxu0 %v1867
        %2130 = vmatpush2.msra.mxu0 %v1866
        %2131 = vmatprep.subr.mxu0 %v1859
        %2132 = vmatpush2.msra.mxu0 %v1858
        %2133 = vmatprep.subr.mxu0 %v1851
        %2134 = vmatpush2.msra.mxu0 %v1850
        %2135 = vmatprep.subr.mxu0 %v1843
        %2136 = vmatpush2.msra.mxu0 %v1842
        %2137 = vmatprep.subr.mxu0 %v1835
        %2138 = vmatpush2.msra.mxu0 %v1834
        %2139 = vmatprep.subr.mxu0 %v1827
        %2140 = vmatpush2.msra.mxu0 %v1826
        %2141 = vmatprep.subr.mxu0 %v1819
        %2142 = vmatpush2.msra.mxu0 %v1818
        %2143 = vmatprep.subr.mxu0 %v1811
        %2144 = vmatpush2.msra.mxu0 %v1810
        %2145 = vmatprep.subr.mxu0 %v1803
        %2146 = vmatpush2.msra.mxu0 %v1802
        %2147 = vmatprep.subr.mxu0 %v1795
        %2148 = vmatpush2.msra.mxu0 %v1794
        %2149 = vmatprep.subr.mxu0 %v1787
        %2150 = vmatpush2.msra.mxu0 %v1786
        %2151 = vmatprep.subr.mxu0 %v1779
        %2152 = vmatpush2.msra.mxu0 %v1778
        %2153 = vmatprep.subr.mxu0 %v1771
        %2154 = vmatpush2.msra.mxu0 %v1770
        %2155 = vmatprep.subr.mxu0 %v1763
        %2156 = vmatpush2.msra.mxu0 %v1762
        %2157 = vmatprep.mubr.f32.mxu0 %v1317
        %2158 = vmatmul.mubr.f32.gmra.mxu0 %v1316
        %v2159 = vpop.f32.mrf.mxu0
        %v2160 = vadd.f32 %v1999, %v2159
        %v2161 = vpop.f32.mrf.mxu0
        %v2162 = vadd.f32 %v2001, %v2161
        %2163 = vmatprep.mubr.f32.mxu0 %v1321
        %2164 = vmatmul.mubr.f32.gmra.mxu0 %v1320
        %v2165 = vpop.f32.mrf.mxu0
        %v2166 = vadd.f32 %v2005, %v2165
        %v2167 = vpop.f32.mrf.mxu0
        %v2168 = vadd.f32 %v2007, %v2167
        %2169 = vmatprep.mubr.f32.mxu0 %v1325
        %2170 = vmatmul.mubr.f32.gmra.mxu0 %v1324
        %v2171 = vpop.f32.mrf.mxu0
        %v2172 = vadd.f32 %v2011, %v2171
        %v2173 = vpop.f32.mrf.mxu0
        %v2174 = vadd.f32 %v2013, %v2173
        %2175 = vmatprep.mubr.f32.mxu0 %v1329
        %2176 = vmatmul.mubr.f32.gmra.mxu0 %v1328
        %v2177 = vpop.f32.mrf.mxu0
        %v2178 = vadd.f32 %v2017, %v2177
        %v2179 = vpop.f32.mrf.mxu0
        %v2180 = vadd.f32 %v2019, %v2179
        %2181 = vmatprep.mubr.f32.mxu0 %v1333
        %2182 = vmatmul.mubr.f32.gmra.mxu0 %v1332
        %v2183 = vpop.f32.mrf.mxu0
        %v2184 = vadd.f32 %v2023, %v2183
        %v2185 = vpop.f32.mrf.mxu0
        %v2186 = vadd.f32 %v2025, %v2185
        %2187 = vmatprep.mubr.f32.mxu0 %v1337
        %2188 = vmatmul.mubr.f32.gmra.mxu0 %v1336
        %v2189 = vpop.f32.mrf.mxu0
        %v2190 = vadd.f32 %v2029, %v2189
        %v2191 = vpop.f32.mrf.mxu0
        %v2192 = vadd.f32 %v2031, %v2191
        %2193 = vmatprep.mubr.f32.mxu0 %v1341
        %2194 = vmatmul.mubr.f32.gmra.mxu0 %v1340
        %v2195 = vpop.f32.mrf.mxu0
        %v2196 = vadd.f32 %v2035, %v2195
        %v2197 = vpop.f32.mrf.mxu0
        %v2198 = vadd.f32 %v2037, %v2197
        %2199 = vmatprep.mubr.f32.mxu0 %v1345
        %2200 = vmatmul.mubr.f32.gmra.mxu0 %v1344
        %v2201 = vpop.f32.mrf.mxu0
        %v2202 = vadd.f32 %v2041, %v2201
        %v2203 = vpop.f32.mrf.mxu0
        %v2204 = vadd.f32 %v2043, %v2203
        %2205 = vmatprep.mubr.f32.mxu0 %v1349
        %2206 = vmatmul.mubr.f32.gmra.mxu0 %v1348
        %v2207 = vpop.f32.mrf.mxu0
        %v2208 = vadd.f32 %v2047, %v2207
        %v2209 = vpop.f32.mrf.mxu0
        %v2210 = vadd.f32 %v2049, %v2209
        %2211 = vmatprep.mubr.f32.mxu0 %v1353
        %2212 = vmatmul.mubr.f32.gmra.mxu0 %v1352
        %v2213 = vpop.f32.mrf.mxu0
        %v2214 = vadd.f32 %v2053, %v2213
        %v2215 = vpop.f32.mrf.mxu0
        %v2216 = vadd.f32 %v2055, %v2215
        %2217 = vmatprep.mubr.f32.mxu0 %v1357
        %2218 = vmatmul.mubr.f32.gmra.mxu0 %v1356
        %v2219 = vpop.f32.mrf.mxu0
        %v2220 = vadd.f32 %v2059, %v2219
        %v2221 = vpop.f32.mrf.mxu0
        %v2222 = vadd.f32 %v2061, %v2221
        %2223 = vmatprep.mubr.f32.mxu0 %v1361
        %2224 = vmatmul.mubr.f32.gmra.mxu0 %v1360
        %v2225 = vpop.f32.mrf.mxu0
        %v2226 = vadd.f32 %v2065, %v2225
        %v2227 = vpop.f32.mrf.mxu0
        %v2228 = vadd.f32 %v2067, %v2227
        %2229 = vmatprep.mubr.f32.mxu0 %v1365
        %2230 = vmatmul.mubr.f32.gmra.mxu0 %v1364
        %v2231 = vpop.f32.mrf.mxu0
        %v2232 = vadd.f32 %v2071, %v2231
        %v2233 = vpop.f32.mrf.mxu0
        %v2234 = vadd.f32 %v2073, %v2233
        %2235 = vmatprep.mubr.f32.mxu0 %v1369
        %2236 = vmatmul.mubr.f32.gmra.mxu0 %v1368
        %v2237 = vpop.f32.mrf.mxu0
        %v2238 = vadd.f32 %v2077, %v2237
        %v2239 = vpop.f32.mrf.mxu0
        %v2240 = vadd.f32 %v2079, %v2239
        %2241 = vmatprep.mubr.f32.mxu0 %v1373
        %2242 = vmatmul.mubr.f32.gmra.mxu0 %v1372
        %v2243 = vpop.f32.mrf.mxu0
        %v2244 = vadd.f32 %v2083, %v2243
        %v2245 = vpop.f32.mrf.mxu0
        %v2246 = vadd.f32 %v2085, %v2245
        %2247 = vmatprep.mubr.f32.mxu0 %v1377
        %2248 = vmatmul.mubr.f32.gmra.mxu0 %v1376
        %v2249 = vpop.f32.mrf.mxu0
        %v2250 = vadd.f32 %v2089, %v2249
        %v2251 = vpop.f32.mrf.mxu0
        %v2252 = vadd.f32 %v2091, %v2251
        %2253 = vdwg.mxu0
        %2254 = vmatprep.subr.mxu0 %v1501
        %2255 = vmatpush1.msra.mxu0 %v1500
        %2256 = vmatprep.subr.mxu0 %v1493
        %2257 = vmatpush1.msra.mxu0 %v1492
        %2258 = vmatprep.subr.mxu0 %v1485
        %2259 = vmatpush1.msra.mxu0 %v1484
        %2260 = vmatprep.subr.mxu0 %v1477
        %2261 = vmatpush1.msra.mxu0 %v1476
        %2262 = vmatprep.subr.mxu0 %v1469
        %2263 = vmatpush1.msra.mxu0 %v1468
        %2264 = vmatprep.subr.mxu0 %v1461
        %2265 = vmatpush1.msra.mxu0 %v1460
        %2266 = vmatprep.subr.mxu0 %v1453
        %2267 = vmatpush1.msra.mxu0 %v1452
        %2268 = vmatprep.subr.mxu0 %v1445
        %2269 = vmatpush1.msra.mxu0 %v1444
        %2270 = vmatprep.subr.mxu0 %v1437
        %2271 = vmatpush1.msra.mxu0 %v1436
        %2272 = vmatprep.subr.mxu0 %v1429
        %2273 = vmatpush1.msra.mxu0 %v1428
        %2274 = vmatprep.subr.mxu0 %v1421
        %2275 = vmatpush1.msra.mxu0 %v1420
        %2276 = vmatprep.subr.mxu0 %v1413
        %2277 = vmatpush1.msra.mxu0 %v1412
        %2278 = vmatprep.subr.mxu0 %v1405
        %2279 = vmatpush1.msra.mxu0 %v1404
        %2280 = vmatprep.subr.mxu0 %v1397
        %2281 = vmatpush1.msra.mxu0 %v1396
        %2282 = vmatprep.subr.mxu0 %v1389
        %2283 = vmatpush1.msra.mxu0 %v1388
        %2284 = vmatprep.subr.mxu0 %v1381
        %2285 = vmatpush1.msra.mxu0 %v1380
        %2286 = vmatprep.subr.mxu0 %v1629
        %2287 = vmatpush2.msra.mxu0 %v1628
        %2288 = vmatprep.subr.mxu0 %v1621
        %2289 = vmatpush2.msra.mxu0 %v1620
        %2290 = vmatprep.subr.mxu0 %v1613
        %2291 = vmatpush2.msra.mxu0 %v1612
        %2292 = vmatprep.subr.mxu0 %v1605
        %2293 = vmatpush2.msra.mxu0 %v1604
        %2294 = vmatprep.subr.mxu0 %v1597
        %2295 = vmatpush2.msra.mxu0 %v1596
        %2296 = vmatprep.subr.mxu0 %v1589
        %2297 = vmatpush2.msra.mxu0 %v1588
        %2298 = vmatprep.subr.mxu0 %v1581
        %2299 = vmatpush2.msra.mxu0 %v1580
        %2300 = vmatprep.subr.mxu0 %v1573
        %2301 = vmatpush2.msra.mxu0 %v1572
        %2302 = vmatprep.subr.mxu0 %v1565
        %2303 = vmatpush2.msra.mxu0 %v1564
        %2304 = vmatprep.subr.mxu0 %v1557
        %2305 = vmatpush2.msra.mxu0 %v1556
        %2306 = vmatprep.subr.mxu0 %v1549
        %2307 = vmatpush2.msra.mxu0 %v1548
        %2308 = vmatprep.subr.mxu0 %v1541
        %2309 = vmatpush2.msra.mxu0 %v1540
        %2310 = vmatprep.subr.mxu0 %v1533
        %2311 = vmatpush2.msra.mxu0 %v1532
        %2312 = vmatprep.subr.mxu0 %v1525
        %2313 = vmatpush2.msra.mxu0 %v1524
        %2314 = vmatprep.subr.mxu0 %v1517
        %2315 = vmatpush2.msra.mxu0 %v1516
        %2316 = vmatprep.subr.mxu0 %v1509
        %2317 = vmatpush2.msra.mxu0 %v1508
        %2318 = vmatprep.mubr.f32.mxu0 %v1315
        %2319 = vmatmul.mubr.f32.gmra.mxu0 %v1314
        %v2320 = vpop.f32.mrf.mxu0
        %v2321 = vadd.f32 %v1903, %v2320
        %v2322 = vpop.f32.mrf.mxu0
        %v2323 = vadd.f32 %v1907, %v2322
        %2324 = vmatprep.mubr.f32.mxu0 %v1319
        %2325 = vmatmul.mubr.f32.gmra.mxu0 %v1318
        %v2326 = vpop.f32.mrf.mxu0
        %v2327 = vadd.f32 %v1903, %v2326
        %v2328 = vpop.f32.mrf.mxu0
        %v2329 = vadd.f32 %v1907, %v2328
        %2330 = vmatprep.mubr.f32.mxu0 %v1323
        %2331 = vmatmul.mubr.f32.gmra.mxu0 %v1322
        %v2332 = vpop.f32.mrf.mxu0
        %v2333 = vadd.f32 %v1903, %v2332
        %v2334 = vpop.f32.mrf.mxu0
        %v2335 = vadd.f32 %v1907, %v2334
        %2336 = vmatprep.mubr.f32.mxu0 %v1327
        %2337 = vmatmul.mubr.f32.gmra.mxu0 %v1326
        %v2338 = vpop.f32.mrf.mxu0
        %v2339 = vadd.f32 %v1903, %v2338
        %v2340 = vpop.f32.mrf.mxu0
        %v2341 = vadd.f32 %v1907, %v2340
        %2342 = vmatprep.mubr.f32.mxu0 %v1331
        %2343 = vmatmul.mubr.f32.gmra.mxu0 %v1330
        %v2344 = vpop.f32.mrf.mxu0
        %v2345 = vadd.f32 %v1903, %v2344
        %v2346 = vpop.f32.mrf.mxu0
        %v2347 = vadd.f32 %v1907, %v2346
        %2348 = vmatprep.mubr.f32.mxu0 %v1335
        %2349 = vmatmul.mubr.f32.gmra.mxu0 %v1334
        %v2350 = vpop.f32.mrf.mxu0
        %v2351 = vadd.f32 %v1903, %v2350
        %v2352 = vpop.f32.mrf.mxu0
        %v2353 = vadd.f32 %v1907, %v2352
        %2354 = vmatprep.mubr.f32.mxu0 %v1339
        %2355 = vmatmul.mubr.f32.gmra.mxu0 %v1338
        %v2356 = vpop.f32.mrf.mxu0
        %v2357 = vadd.f32 %v1903, %v2356
        %v2358 = vpop.f32.mrf.mxu0
        %v2359 = vadd.f32 %v1907, %v2358
        %2360 = vmatprep.mubr.f32.mxu0 %v1343
        %2361 = vmatmul.mubr.f32.gmra.mxu0 %v1342
        %v2362 = vpop.f32.mrf.mxu0
        %v2363 = vadd.f32 %v1903, %v2362
        %v2364 = vpop.f32.mrf.mxu0
        %v2365 = vadd.f32 %v1907, %v2364
        %2366 = vmatprep.mubr.f32.mxu0 %v1347
        %2367 = vmatmul.mubr.f32.gmra.mxu0 %v1346
        %v2368 = vpop.f32.mrf.mxu0
        %v2369 = vadd.f32 %v1903, %v2368
        %v2370 = vpop.f32.mrf.mxu0
        %v2371 = vadd.f32 %v1907, %v2370
        %2372 = vmatprep.mubr.f32.mxu0 %v1351
        %2373 = vmatmul.mubr.f32.gmra.mxu0 %v1350
        %v2374 = vpop.f32.mrf.mxu0
        %v2375 = vadd.f32 %v1903, %v2374
        %v2376 = vpop.f32.mrf.mxu0
        %v2377 = vadd.f32 %v1907, %v2376
        %2378 = vmatprep.mubr.f32.mxu0 %v1355
        %2379 = vmatmul.mubr.f32.gmra.mxu0 %v1354
        %v2380 = vpop.f32.mrf.mxu0
        %v2381 = vadd.f32 %v1903, %v2380
        %v2382 = vpop.f32.mrf.mxu0
        %v2383 = vadd.f32 %v1907, %v2382
        %2384 = vmatprep.mubr.f32.mxu0 %v1359
        %2385 = vmatmul.mubr.f32.gmra.mxu0 %v1358
        %v2386 = vpop.f32.mrf.mxu0
        %v2387 = vadd.f32 %v1903, %v2386
        %v2388 = vpop.f32.mrf.mxu0
        %v2389 = vadd.f32 %v1907, %v2388
        %2390 = vmatprep.mubr.f32.mxu0 %v1363
        %2391 = vmatmul.mubr.f32.gmra.mxu0 %v1362
        %v2392 = vpop.f32.mrf.mxu0
        %v2393 = vadd.f32 %v1903, %v2392
        %v2394 = vpop.f32.mrf.mxu0
        %v2395 = vadd.f32 %v1907, %v2394
        %2396 = vmatprep.mubr.f32.mxu0 %v1367
        %2397 = vmatmul.mubr.f32.gmra.mxu0 %v1366
        %v2398 = vpop.f32.mrf.mxu0
        %v2399 = vadd.f32 %v1903, %v2398
        %v2400 = vpop.f32.mrf.mxu0
        %v2401 = vadd.f32 %v1907, %v2400
        %2402 = vmatprep.mubr.f32.mxu0 %v1371
        %2403 = vmatmul.mubr.f32.gmra.mxu0 %v1370
        %v2404 = vpop.f32.mrf.mxu0
        %v2405 = vadd.f32 %v1903, %v2404
        %v2406 = vpop.f32.mrf.mxu0
        %v2407 = vadd.f32 %v1907, %v2406
        %2408 = vmatprep.mubr.f32.mxu0 %v1375
        %2409 = vmatmul.mubr.f32.gmra.mxu0 %v1374
        %v2410 = vpop.f32.mrf.mxu0
        %v2411 = vadd.f32 %v1903, %v2410
        %v2412 = vpop.f32.mrf.mxu0
        %v2413 = vadd.f32 %v1907, %v2412
        %2414 = vdwg.mxu0
        %2415 = vmatprep.subr.mxu0 %v1757
        %2416 = vmatpush1.msra.mxu0 %v1756
        %2417 = vmatprep.subr.mxu0 %v1749
        %2418 = vmatpush1.msra.mxu0 %v1748
        %2419 = vmatprep.subr.mxu0 %v1741
        %2420 = vmatpush1.msra.mxu0 %v1740
        %2421 = vmatprep.subr.mxu0 %v1733
        %2422 = vmatpush1.msra.mxu0 %v1732
        %2423 = vmatprep.subr.mxu0 %v1725
        %2424 = vmatpush1.msra.mxu0 %v1724
        %2425 = vmatprep.subr.mxu0 %v1717
        %2426 = vmatpush1.msra.mxu0 %v1716
        %2427 = vmatprep.subr.mxu0 %v1709
        %2428 = vmatpush1.msra.mxu0 %v1708
        %2429 = vmatprep.subr.mxu0 %v1701
        %2430 = vmatpush1.msra.mxu0 %v1700
        %2431 = vmatprep.subr.mxu0 %v1693
        %2432 = vmatpush1.msra.mxu0 %v1692
        %2433 = vmatprep.subr.mxu0 %v1685
        %2434 = vmatpush1.msra.mxu0 %v1684
        %2435 = vmatprep.subr.mxu0 %v1677
        %2436 = vmatpush1.msra.mxu0 %v1676
        %2437 = vmatprep.subr.mxu0 %v1669
        %2438 = vmatpush1.msra.mxu0 %v1668
        %2439 = vmatprep.subr.mxu0 %v1661
        %2440 = vmatpush1.msra.mxu0 %v1660
        %2441 = vmatprep.subr.mxu0 %v1653
        %2442 = vmatpush1.msra.mxu0 %v1652
        %2443 = vmatprep.subr.mxu0 %v1645
        %2444 = vmatpush1.msra.mxu0 %v1644
        %2445 = vmatprep.subr.mxu0 %v1637
        %2446 = vmatpush1.msra.mxu0 %v1636
        %2447 = vmatprep.subr.mxu0 %v1885
        %2448 = vmatpush2.msra.mxu0 %v1884
        %2449 = vmatprep.subr.mxu0 %v1877
        %2450 = vmatpush2.msra.mxu0 %v1876
        %2451 = vmatprep.subr.mxu0 %v1869
        %2452 = vmatpush2.msra.mxu0 %v1868
        %2453 = vmatprep.subr.mxu0 %v1861
        %2454 = vmatpush2.msra.mxu0 %v1860
        %2455 = vmatprep.subr.mxu0 %v1853
        %2456 = vmatpush2.msra.mxu0 %v1852
        %2457 = vmatprep.subr.mxu0 %v1845
        %2458 = vmatpush2.msra.mxu0 %v1844
        %2459 = vmatprep.subr.mxu0 %v1837
        %2460 = vmatpush2.msra.mxu0 %v1836
        %2461 = vmatprep.subr.mxu0 %v1829
        %2462 = vmatpush2.msra.mxu0 %v1828
        %2463 = vmatprep.subr.mxu0 %v1821
        %2464 = vmatpush2.msra.mxu0 %v1820
        %2465 = vmatprep.subr.mxu0 %v1813
        %2466 = vmatpush2.msra.mxu0 %v1812
        %2467 = vmatprep.subr.mxu0 %v1805
        %2468 = vmatpush2.msra.mxu0 %v1804
        %2469 = vmatprep.subr.mxu0 %v1797
        %2470 = vmatpush2.msra.mxu0 %v1796
        %2471 = vmatprep.subr.mxu0 %v1789
        %2472 = vmatpush2.msra.mxu0 %v1788
        %2473 = vmatprep.subr.mxu0 %v1781
        %2474 = vmatpush2.msra.mxu0 %v1780
        %2475 = vmatprep.subr.mxu0 %v1773
        %2476 = vmatpush2.msra.mxu0 %v1772
        %2477 = vmatprep.subr.mxu0 %v1765
        %2478 = vmatpush2.msra.mxu0 %v1764
        %2479 = vmatprep.mubr.f32.mxu0 %v1317
        %2480 = vmatmul.mubr.f32.gmra.mxu0 %v1316
        %v2481 = vpop.f32.mrf.mxu0
        %v2482 = vadd.f32 %v2321, %v2481
        %v2483 = vpop.f32.mrf.mxu0
        %v2484 = vadd.f32 %v2323, %v2483
        %2485 = vmatprep.mubr.f32.mxu0 %v1321
        %2486 = vmatmul.mubr.f32.gmra.mxu0 %v1320
        %v2487 = vpop.f32.mrf.mxu0
        %v2488 = vadd.f32 %v2327, %v2487
        %v2489 = vpop.f32.mrf.mxu0
        %v2490 = vadd.f32 %v2329, %v2489
        %2491 = vmatprep.mubr.f32.mxu0 %v1325
        %2492 = vmatmul.mubr.f32.gmra.mxu0 %v1324
        %v2493 = vpop.f32.mrf.mxu0
        %v2494 = vadd.f32 %v2333, %v2493
        %v2495 = vpop.f32.mrf.mxu0
        %v2496 = vadd.f32 %v2335, %v2495
        %2497 = vmatprep.mubr.f32.mxu0 %v1329
        %2498 = vmatmul.mubr.f32.gmra.mxu0 %v1328
        %v2499 = vpop.f32.mrf.mxu0
        %v2500 = vadd.f32 %v2339, %v2499
        %v2501 = vpop.f32.mrf.mxu0
        %v2502 = vadd.f32 %v2341, %v2501
        %2503 = vmatprep.mubr.f32.mxu0 %v1333
        %2504 = vmatmul.mubr.f32.gmra.mxu0 %v1332
        %v2505 = vpop.f32.mrf.mxu0
        %v2506 = vadd.f32 %v2345, %v2505
        %v2507 = vpop.f32.mrf.mxu0
        %v2508 = vadd.f32 %v2347, %v2507
        %2509 = vmatprep.mubr.f32.mxu0 %v1337
        %2510 = vmatmul.mubr.f32.gmra.mxu0 %v1336
        %v2511 = vpop.f32.mrf.mxu0
        %v2512 = vadd.f32 %v2351, %v2511
        %v2513 = vpop.f32.mrf.mxu0
        %v2514 = vadd.f32 %v2353, %v2513
        %2515 = vmatprep.mubr.f32.mxu0 %v1341
        %2516 = vmatmul.mubr.f32.gmra.mxu0 %v1340
        %v2517 = vpop.f32.mrf.mxu0
        %v2518 = vadd.f32 %v2357, %v2517
        %v2519 = vpop.f32.mrf.mxu0
        %v2520 = vadd.f32 %v2359, %v2519
        %2521 = vmatprep.mubr.f32.mxu0 %v1345
        %2522 = vmatmul.mubr.f32.gmra.mxu0 %v1344
        %v2523 = vpop.f32.mrf.mxu0
        %v2524 = vadd.f32 %v2363, %v2523
        %v2525 = vpop.f32.mrf.mxu0
        %v2526 = vadd.f32 %v2365, %v2525
        %2527 = vmatprep.mubr.f32.mxu0 %v1349
        %2528 = vmatmul.mubr.f32.gmra.mxu0 %v1348
        %v2529 = vpop.f32.mrf.mxu0
        %v2530 = vadd.f32 %v2369, %v2529
        %v2531 = vpop.f32.mrf.mxu0
        %v2532 = vadd.f32 %v2371, %v2531
        %2533 = vmatprep.mubr.f32.mxu0 %v1353
        %2534 = vmatmul.mubr.f32.gmra.mxu0 %v1352
        %v2535 = vpop.f32.mrf.mxu0
        %v2536 = vadd.f32 %v2375, %v2535
        %v2537 = vpop.f32.mrf.mxu0
        %v2538 = vadd.f32 %v2377, %v2537
        %2539 = vmatprep.mubr.f32.mxu0 %v1357
        %2540 = vmatmul.mubr.f32.gmra.mxu0 %v1356
        %v2541 = vpop.f32.mrf.mxu0
        %v2542 = vadd.f32 %v2381, %v2541
        %v2543 = vpop.f32.mrf.mxu0
        %v2544 = vadd.f32 %v2383, %v2543
        %2545 = vmatprep.mubr.f32.mxu0 %v1361
        %2546 = vmatmul.mubr.f32.gmra.mxu0 %v1360
        %v2547 = vpop.f32.mrf.mxu0
        %v2548 = vadd.f32 %v2387, %v2547
        %v2549 = vpop.f32.mrf.mxu0
        %v2550 = vadd.f32 %v2389, %v2549
        %2551 = vmatprep.mubr.f32.mxu0 %v1365
        %2552 = vmatmul.mubr.f32.gmra.mxu0 %v1364
        %v2553 = vpop.f32.mrf.mxu0
        %v2554 = vadd.f32 %v2393, %v2553
        %v2555 = vpop.f32.mrf.mxu0
        %v2556 = vadd.f32 %v2395, %v2555
        %2557 = vmatprep.mubr.f32.mxu0 %v1369
        %2558 = vmatmul.mubr.f32.gmra.mxu0 %v1368
        %v2559 = vpop.f32.mrf.mxu0
        %v2560 = vadd.f32 %v2399, %v2559
        %v2561 = vpop.f32.mrf.mxu0
        %v2562 = vadd.f32 %v2401, %v2561
        %2563 = vmatprep.mubr.f32.mxu0 %v1373
        %2564 = vmatmul.mubr.f32.gmra.mxu0 %v1372
        %v2565 = vpop.f32.mrf.mxu0
        %v2566 = vadd.f32 %v2405, %v2565
        %v2567 = vpop.f32.mrf.mxu0
        %v2568 = vadd.f32 %v2407, %v2567
        %2569 = vmatprep.mubr.f32.mxu0 %v1377
        %2570 = vmatmul.mubr.f32.gmra.mxu0 %v1376
        %v2571 = vpop.f32.mrf.mxu0
        %v2572 = vadd.f32 %v2411, %v2571
        %v2573 = vpop.f32.mrf.mxu0
        %v2574 = vadd.f32 %v2413, %v2573
        %2575 = vdwg.mxu0
        %2576 = vmatprep.subr.mxu0 %v1503
        %2577 = vmatpush1.msra.mxu0 %v1502
        %2578 = vmatprep.subr.mxu0 %v1495
        %2579 = vmatpush1.msra.mxu0 %v1494
        %2580 = vmatprep.subr.mxu0 %v1487
        %2581 = vmatpush1.msra.mxu0 %v1486
        %2582 = vmatprep.subr.mxu0 %v1479
        %2583 = vmatpush1.msra.mxu0 %v1478
        %2584 = vmatprep.subr.mxu0 %v1471
        %2585 = vmatpush1.msra.mxu0 %v1470
        %2586 = vmatprep.subr.mxu0 %v1463
        %2587 = vmatpush1.msra.mxu0 %v1462
        %2588 = vmatprep.subr.mxu0 %v1455
        %2589 = vmatpush1.msra.mxu0 %v1454
        %2590 = vmatprep.subr.mxu0 %v1447
        %2591 = vmatpush1.msra.mxu0 %v1446
        %2592 = vmatprep.subr.mxu0 %v1439
        %2593 = vmatpush1.msra.mxu0 %v1438
        %2594 = vmatprep.subr.mxu0 %v1431
        %2595 = vmatpush1.msra.mxu0 %v1430
        %2596 = vmatprep.subr.mxu0 %v1423
        %2597 = vmatpush1.msra.mxu0 %v1422
        %2598 = vmatprep.subr.mxu0 %v1415
        %2599 = vmatpush1.msra.mxu0 %v1414
        %2600 = vmatprep.subr.mxu0 %v1407
        %2601 = vmatpush1.msra.mxu0 %v1406
        %2602 = vmatprep.subr.mxu0 %v1399
        %2603 = vmatpush1.msra.mxu0 %v1398
        %2604 = vmatprep.subr.mxu0 %v1391
        %2605 = vmatpush1.msra.mxu0 %v1390
        %2606 = vmatprep.subr.mxu0 %v1383
        %2607 = vmatpush1.msra.mxu0 %v1382
        %2608 = vmatprep.subr.mxu0 %v1631
        %2609 = vmatpush2.msra.mxu0 %v1630
        %2610 = vmatprep.subr.mxu0 %v1623
        %2611 = vmatpush2.msra.mxu0 %v1622
        %2612 = vmatprep.subr.mxu0 %v1615
        %2613 = vmatpush2.msra.mxu0 %v1614
        %2614 = vmatprep.subr.mxu0 %v1607
        %2615 = vmatpush2.msra.mxu0 %v1606
        %2616 = vmatprep.subr.mxu0 %v1599
        %2617 = vmatpush2.msra.mxu0 %v1598
        %2618 = vmatprep.subr.mxu0 %v1591
        %2619 = vmatpush2.msra.mxu0 %v1590
        %2620 = vmatprep.subr.mxu0 %v1583
        %2621 = vmatpush2.msra.mxu0 %v1582
        %2622 = vmatprep.subr.mxu0 %v1575
        %2623 = vmatpush2.msra.mxu0 %v1574
        %2624 = vmatprep.subr.mxu0 %v1567
        %2625 = vmatpush2.msra.mxu0 %v1566
        %2626 = vmatprep.subr.mxu0 %v1559
        %2627 = vmatpush2.msra.mxu0 %v1558
        %2628 = vmatprep.subr.mxu0 %v1551
        %2629 = vmatpush2.msra.mxu0 %v1550
        %2630 = vmatprep.subr.mxu0 %v1543
        %2631 = vmatpush2.msra.mxu0 %v1542
        %2632 = vmatprep.subr.mxu0 %v1535
        %2633 = vmatpush2.msra.mxu0 %v1534
        %2634 = vmatprep.subr.mxu0 %v1527
        %2635 = vmatpush2.msra.mxu0 %v1526
        %2636 = vmatprep.subr.mxu0 %v1519
        %2637 = vmatpush2.msra.mxu0 %v1518
        %2638 = vmatprep.subr.mxu0 %v1511
        %2639 = vmatpush2.msra.mxu0 %v1510
        %2640 = vmatprep.mubr.f32.mxu0 %v1315
        %2641 = vmatmul.mubr.f32.gmra.mxu0 %v1314
        %v2642 = vpop.f32.mrf.mxu0
        %v2643 = vadd.f32 %v1911, %v2642
        %v2644 = vpop.f32.mrf.mxu0
        %v2645 = vadd.f32 %v1915, %v2644
        %2646 = vmatprep.mubr.f32.mxu0 %v1319
        %2647 = vmatmul.mubr.f32.gmra.mxu0 %v1318
        %v2648 = vpop.f32.mrf.mxu0
        %v2649 = vadd.f32 %v1911, %v2648
        %v2650 = vpop.f32.mrf.mxu0
        %v2651 = vadd.f32 %v1915, %v2650
        %2652 = vmatprep.mubr.f32.mxu0 %v1323
        %2653 = vmatmul.mubr.f32.gmra.mxu0 %v1322
        %v2654 = vpop.f32.mrf.mxu0
        %v2655 = vadd.f32 %v1911, %v2654
        %v2656 = vpop.f32.mrf.mxu0
        %v2657 = vadd.f32 %v1915, %v2656
        %2658 = vmatprep.mubr.f32.mxu0 %v1327
        %2659 = vmatmul.mubr.f32.gmra.mxu0 %v1326
        %v2660 = vpop.f32.mrf.mxu0
        %v2661 = vadd.f32 %v1911, %v2660
        %v2662 = vpop.f32.mrf.mxu0
        %v2663 = vadd.f32 %v1915, %v2662
        %2664 = vmatprep.mubr.f32.mxu0 %v1331
        %2665 = vmatmul.mubr.f32.gmra.mxu0 %v1330
        %v2666 = vpop.f32.mrf.mxu0
        %v2667 = vadd.f32 %v1911, %v2666
        %v2668 = vpop.f32.mrf.mxu0
        %v2669 = vadd.f32 %v1915, %v2668
        %2670 = vmatprep.mubr.f32.mxu0 %v1335
        %2671 = vmatmul.mubr.f32.gmra.mxu0 %v1334
        %v2672 = vpop.f32.mrf.mxu0
        %v2673 = vadd.f32 %v1911, %v2672
        %v2674 = vpop.f32.mrf.mxu0
        %v2675 = vadd.f32 %v1915, %v2674
        %2676 = vmatprep.mubr.f32.mxu0 %v1339
        %2677 = vmatmul.mubr.f32.gmra.mxu0 %v1338
        %v2678 = vpop.f32.mrf.mxu0
        %v2679 = vadd.f32 %v1911, %v2678
        %v2680 = vpop.f32.mrf.mxu0
        %v2681 = vadd.f32 %v1915, %v2680
        %2682 = vmatprep.mubr.f32.mxu0 %v1343
        %2683 = vmatmul.mubr.f32.gmra.mxu0 %v1342
        %v2684 = vpop.f32.mrf.mxu0
        %v2685 = vadd.f32 %v1911, %v2684
        %v2686 = vpop.f32.mrf.mxu0
        %v2687 = vadd.f32 %v1915, %v2686
        %2688 = vmatprep.mubr.f32.mxu0 %v1347
        %2689 = vmatmul.mubr.f32.gmra.mxu0 %v1346
        %v2690 = vpop.f32.mrf.mxu0
        %v2691 = vadd.f32 %v1911, %v2690
        %v2692 = vpop.f32.mrf.mxu0
        %v2693 = vadd.f32 %v1915, %v2692
        %2694 = vmatprep.mubr.f32.mxu0 %v1351
        %2695 = vmatmul.mubr.f32.gmra.mxu0 %v1350
        %v2696 = vpop.f32.mrf.mxu0
        %v2697 = vadd.f32 %v1911, %v2696
        %v2698 = vpop.f32.mrf.mxu0
        %v2699 = vadd.f32 %v1915, %v2698
        %2700 = vmatprep.mubr.f32.mxu0 %v1355
        %2701 = vmatmul.mubr.f32.gmra.mxu0 %v1354
        %v2702 = vpop.f32.mrf.mxu0
        %v2703 = vadd.f32 %v1911, %v2702
        %v2704 = vpop.f32.mrf.mxu0
        %v2705 = vadd.f32 %v1915, %v2704
        %2706 = vmatprep.mubr.f32.mxu0 %v1359
        %2707 = vmatmul.mubr.f32.gmra.mxu0 %v1358
        %v2708 = vpop.f32.mrf.mxu0
        %v2709 = vadd.f32 %v1911, %v2708
        %v2710 = vpop.f32.mrf.mxu0
        %v2711 = vadd.f32 %v1915, %v2710
        %2712 = vmatprep.mubr.f32.mxu0 %v1363
        %2713 = vmatmul.mubr.f32.gmra.mxu0 %v1362
        %v2714 = vpop.f32.mrf.mxu0
        %v2715 = vadd.f32 %v1911, %v2714
        %v2716 = vpop.f32.mrf.mxu0
        %v2717 = vadd.f32 %v1915, %v2716
        %2718 = vmatprep.mubr.f32.mxu0 %v1367
        %2719 = vmatmul.mubr.f32.gmra.mxu0 %v1366
        %v2720 = vpop.f32.mrf.mxu0
        %v2721 = vadd.f32 %v1911, %v2720
        %v2722 = vpop.f32.mrf.mxu0
        %v2723 = vadd.f32 %v1915, %v2722
        %2724 = vmatprep.mubr.f32.mxu0 %v1371
        %2725 = vmatmul.mubr.f32.gmra.mxu0 %v1370
        %v2726 = vpop.f32.mrf.mxu0
        %v2727 = vadd.f32 %v1911, %v2726
        %v2728 = vpop.f32.mrf.mxu0
        %v2729 = vadd.f32 %v1915, %v2728
        %2730 = vmatprep.mubr.f32.mxu0 %v1375
        %2731 = vmatmul.mubr.f32.gmra.mxu0 %v1374
        %v2732 = vpop.f32.mrf.mxu0
        %v2733 = vadd.f32 %v1911, %v2732
        %v2734 = vpop.f32.mrf.mxu0
        %v2735 = vadd.f32 %v1915, %v2734
        %2736 = vdwg.mxu0
        %2737 = vmatprep.subr.mxu0 %v1759
        %2738 = vmatpush1.msra.mxu0 %v1758
        %2739 = vmatprep.subr.mxu0 %v1751
        %2740 = vmatpush1.msra.mxu0 %v1750
        %2741 = vmatprep.subr.mxu0 %v1743
        %2742 = vmatpush1.msra.mxu0 %v1742
        %2743 = vmatprep.subr.mxu0 %v1735
        %2744 = vmatpush1.msra.mxu0 %v1734
        %2745 = vmatprep.subr.mxu0 %v1727
        %2746 = vmatpush1.msra.mxu0 %v1726
        %2747 = vmatprep.subr.mxu0 %v1719
        %2748 = vmatpush1.msra.mxu0 %v1718
        %2749 = vmatprep.subr.mxu0 %v1711
        %2750 = vmatpush1.msra.mxu0 %v1710
        %2751 = vmatprep.subr.mxu0 %v1703
        %2752 = vmatpush1.msra.mxu0 %v1702
        %2753 = vmatprep.subr.mxu0 %v1695
        %2754 = vmatpush1.msra.mxu0 %v1694
        %2755 = vmatprep.subr.mxu0 %v1687
        %2756 = vmatpush1.msra.mxu0 %v1686
        %2757 = vmatprep.subr.mxu0 %v1679
        %2758 = vmatpush1.msra.mxu0 %v1678
        %2759 = vmatprep.subr.mxu0 %v1671
        %2760 = vmatpush1.msra.mxu0 %v1670
        %2761 = vmatprep.subr.mxu0 %v1663
        %2762 = vmatpush1.msra.mxu0 %v1662
        %2763 = vmatprep.subr.mxu0 %v1655
        %2764 = vmatpush1.msra.mxu0 %v1654
        %2765 = vmatprep.subr.mxu0 %v1647
        %2766 = vmatpush1.msra.mxu0 %v1646
        %2767 = vmatprep.subr.mxu0 %v1639
        %2768 = vmatpush1.msra.mxu0 %v1638
        %2769 = vmatprep.subr.mxu0 %v1887
        %2770 = vmatpush2.msra.mxu0 %v1886
        %2771 = vmatprep.subr.mxu0 %v1879
        %2772 = vmatpush2.msra.mxu0 %v1878
        %2773 = vmatprep.subr.mxu0 %v1871
        %2774 = vmatpush2.msra.mxu0 %v1870
        %2775 = vmatprep.subr.mxu0 %v1863
        %2776 = vmatpush2.msra.mxu0 %v1862
        %2777 = vmatprep.subr.mxu0 %v1855
        %2778 = vmatpush2.msra.mxu0 %v1854
        %2779 = vmatprep.subr.mxu0 %v1847
        %2780 = vmatpush2.msra.mxu0 %v1846
        %2781 = vmatprep.subr.mxu0 %v1839
        %2782 = vmatpush2.msra.mxu0 %v1838
        %2783 = vmatprep.subr.mxu0 %v1831
        %2784 = vmatpush2.msra.mxu0 %v1830
        %2785 = vmatprep.subr.mxu0 %v1823
        %2786 = vmatpush2.msra.mxu0 %v1822
        %2787 = vmatprep.subr.mxu0 %v1815
        %2788 = vmatpush2.msra.mxu0 %v1814
        %2789 = vmatprep.subr.mxu0 %v1807
        %2790 = vmatpush2.msra.mxu0 %v1806
        %2791 = vmatprep.subr.mxu0 %v1799
        %2792 = vmatpush2.msra.mxu0 %v1798
        %2793 = vmatprep.subr.mxu0 %v1791
        %2794 = vmatpush2.msra.mxu0 %v1790
        %2795 = vmatprep.subr.mxu0 %v1783
        %2796 = vmatpush2.msra.mxu0 %v1782
        %2797 = vmatprep.subr.mxu0 %v1775
        %2798 = vmatpush2.msra.mxu0 %v1774
        %2799 = vmatprep.subr.mxu0 %v1767
        %2800 = vmatpush2.msra.mxu0 %v1766
        %2801 = vmatprep.mubr.f32.mxu0 %v1317
        %2802 = vmatmul.mubr.f32.gmra.mxu0 %v1316
        %v2803 = vpop.f32.mrf.mxu0
        %v2804 = vadd.f32 %v2643, %v2803
        %v2805 = vpop.f32.mrf.mxu0
        %v2806 = vadd.f32 %v2645, %v2805
        %2807 = vmatprep.mubr.f32.mxu0 %v1321
        %2808 = vmatmul.mubr.f32.gmra.mxu0 %v1320
        %v2809 = vpop.f32.mrf.mxu0
        %v2810 = vadd.f32 %v2649, %v2809
        %v2811 = vpop.f32.mrf.mxu0
        %v2812 = vadd.f32 %v2651, %v2811
        %2813 = vmatprep.mubr.f32.mxu0 %v1325
        %2814 = vmatmul.mubr.f32.gmra.mxu0 %v1324
        %v2815 = vpop.f32.mrf.mxu0
        %v2816 = vadd.f32 %v2655, %v2815
        %v2817 = vpop.f32.mrf.mxu0
        %v2818 = vadd.f32 %v2657, %v2817
        %2819 = vmatprep.mubr.f32.mxu0 %v1329
        %2820 = vmatmul.mubr.f32.gmra.mxu0 %v1328
        %v2821 = vpop.f32.mrf.mxu0
        %v2822 = vadd.f32 %v2661, %v2821
        %v2823 = vpop.f32.mrf.mxu0
        %v2824 = vadd.f32 %v2663, %v2823
        %2825 = vmatprep.mubr.f32.mxu0 %v1333
        %2826 = vmatmul.mubr.f32.gmra.mxu0 %v1332
        %v2827 = vpop.f32.mrf.mxu0
        %v2828 = vadd.f32 %v2667, %v2827
        %v2829 = vpop.f32.mrf.mxu0
        %v2830 = vadd.f32 %v2669, %v2829
        %2831 = vmatprep.mubr.f32.mxu0 %v1337
        %2832 = vmatmul.mubr.f32.gmra.mxu0 %v1336
        %v2833 = vpop.f32.mrf.mxu0
        %v2834 = vadd.f32 %v2673, %v2833
        %v2835 = vpop.f32.mrf.mxu0
        %v2836 = vadd.f32 %v2675, %v2835
        %2837 = vmatprep.mubr.f32.mxu0 %v1341
        %2838 = vmatmul.mubr.f32.gmra.mxu0 %v1340
        %v2839 = vpop.f32.mrf.mxu0
        %v2840 = vadd.f32 %v2679, %v2839
        %v2841 = vpop.f32.mrf.mxu0
        %v2842 = vadd.f32 %v2681, %v2841
        %2843 = vmatprep.mubr.f32.mxu0 %v1345
        %2844 = vmatmul.mubr.f32.gmra.mxu0 %v1344
        %v2845 = vpop.f32.mrf.mxu0
        %v2846 = vadd.f32 %v2685, %v2845
        %v2847 = vpop.f32.mrf.mxu0
        %v2848 = vadd.f32 %v2687, %v2847
        %2849 = vmatprep.mubr.f32.mxu0 %v1349
        %2850 = vmatmul.mubr.f32.gmra.mxu0 %v1348
        %v2851 = vpop.f32.mrf.mxu0
        %v2852 = vadd.f32 %v2691, %v2851
        %v2853 = vpop.f32.mrf.mxu0
        %v2854 = vadd.f32 %v2693, %v2853
        %2855 = vmatprep.mubr.f32.mxu0 %v1353
        %2856 = vmatmul.mubr.f32.gmra.mxu0 %v1352
        %v2857 = vpop.f32.mrf.mxu0
        %v2858 = vadd.f32 %v2697, %v2857
        %v2859 = vpop.f32.mrf.mxu0
        %v2860 = vadd.f32 %v2699, %v2859
        %2861 = vmatprep.mubr.f32.mxu0 %v1357
        %2862 = vmatmul.mubr.f32.gmra.mxu0 %v1356
        %v2863 = vpop.f32.mrf.mxu0
        %v2864 = vadd.f32 %v2703, %v2863
        %v2865 = vpop.f32.mrf.mxu0
        %v2866 = vadd.f32 %v2705, %v2865
        %2867 = vmatprep.mubr.f32.mxu0 %v1361
        %2868 = vmatmul.mubr.f32.gmra.mxu0 %v1360
        %v2869 = vpop.f32.mrf.mxu0
        %v2870 = vadd.f32 %v2709, %v2869
        %v2871 = vpop.f32.mrf.mxu0
        %v2872 = vadd.f32 %v2711, %v2871
        %2873 = vmatprep.mubr.f32.mxu0 %v1365
        %2874 = vmatmul.mubr.f32.gmra.mxu0 %v1364
        %v2875 = vpop.f32.mrf.mxu0
        %v2876 = vadd.f32 %v2715, %v2875
        %v2877 = vpop.f32.mrf.mxu0
        %v2878 = vadd.f32 %v2717, %v2877
        %2879 = vmatprep.mubr.f32.mxu0 %v1369
        %2880 = vmatmul.mubr.f32.gmra.mxu0 %v1368
        %v2881 = vpop.f32.mrf.mxu0
        %v2882 = vadd.f32 %v2721, %v2881
        %v2883 = vpop.f32.mrf.mxu0
        %v2884 = vadd.f32 %v2723, %v2883
        %2885 = vmatprep.mubr.f32.mxu0 %v1373
        %2886 = vmatmul.mubr.f32.gmra.mxu0 %v1372
        %v2887 = vpop.f32.mrf.mxu0
        %v2888 = vadd.f32 %v2727, %v2887
        %v2889 = vpop.f32.mrf.mxu0
        %v2890 = vadd.f32 %v2729, %v2889
        %2891 = vmatprep.mubr.f32.mxu0 %v1377
        %2892 = vmatmul.mubr.f32.gmra.mxu0 %v1376
        %v2893 = vpop.f32.mrf.mxu0
        %v2894 = vadd.f32 %v2733, %v2893
        %v2895 = vpop.f32.mrf.mxu0
        %v2896 = vadd.f32 %v2735, %v2895
        %2897 = vdwg.mxu0
        %2898 = vmatprep.subr.mxu0 %v1505
        %2899 = vmatpush1.msra.mxu0 %v1504
        %2900 = vmatprep.subr.mxu0 %v1497
        %2901 = vmatpush1.msra.mxu0 %v1496
        %2902 = vmatprep.subr.mxu0 %v1489
        %2903 = vmatpush1.msra.mxu0 %v1488
        %2904 = vmatprep.subr.mxu0 %v1481
        %2905 = vmatpush1.msra.mxu0 %v1480
        %2906 = vmatprep.subr.mxu0 %v1473
        %2907 = vmatpush1.msra.mxu0 %v1472
        %2908 = vmatprep.subr.mxu0 %v1465
        %2909 = vmatpush1.msra.mxu0 %v1464
        %2910 = vmatprep.subr.mxu0 %v1457
        %2911 = vmatpush1.msra.mxu0 %v1456
        %2912 = vmatprep.subr.mxu0 %v1449
        %2913 = vmatpush1.msra.mxu0 %v1448
        %2914 = vmatprep.subr.mxu0 %v1441
        %2915 = vmatpush1.msra.mxu0 %v1440
        %2916 = vmatprep.subr.mxu0 %v1433
        %2917 = vmatpush1.msra.mxu0 %v1432
        %2918 = vmatprep.subr.mxu0 %v1425
        %2919 = vmatpush1.msra.mxu0 %v1424
        %2920 = vmatprep.subr.mxu0 %v1417
        %2921 = vmatpush1.msra.mxu0 %v1416
        %2922 = vmatprep.subr.mxu0 %v1409
        %2923 = vmatpush1.msra.mxu0 %v1408
        %2924 = vmatprep.subr.mxu0 %v1401
        %2925 = vmatpush1.msra.mxu0 %v1400
        %2926 = vmatprep.subr.mxu0 %v1393
        %2927 = vmatpush1.msra.mxu0 %v1392
        %2928 = vmatprep.subr.mxu0 %v1385
        %2929 = vmatpush1.msra.mxu0 %v1384
        %2930 = vmatprep.subr.mxu0 %v1633
        %2931 = vmatpush2.msra.mxu0 %v1632
        %2932 = vmatprep.subr.mxu0 %v1625
        %2933 = vmatpush2.msra.mxu0 %v1624
        %2934 = vmatprep.subr.mxu0 %v1617
        %2935 = vmatpush2.msra.mxu0 %v1616
        %2936 = vmatprep.subr.mxu0 %v1609
        %2937 = vmatpush2.msra.mxu0 %v1608
        %2938 = vmatprep.subr.mxu0 %v1601
        %2939 = vmatpush2.msra.mxu0 %v1600
        %2940 = vmatprep.subr.mxu0 %v1593
        %2941 = vmatpush2.msra.mxu0 %v1592
        %2942 = vmatprep.subr.mxu0 %v1585
        %2943 = vmatpush2.msra.mxu0 %v1584
        %2944 = vmatprep.subr.mxu0 %v1577
        %2945 = vmatpush2.msra.mxu0 %v1576
        %2946 = vmatprep.subr.mxu0 %v1569
        %2947 = vmatpush2.msra.mxu0 %v1568
        %2948 = vmatprep.subr.mxu0 %v1561
        %2949 = vmatpush2.msra.mxu0 %v1560
        %2950 = vmatprep.subr.mxu0 %v1553
        %2951 = vmatpush2.msra.mxu0 %v1552
        %2952 = vmatprep.subr.mxu0 %v1545
        %2953 = vmatpush2.msra.mxu0 %v1544
        %2954 = vmatprep.subr.mxu0 %v1537
        %2955 = vmatpush2.msra.mxu0 %v1536
        %2956 = vmatprep.subr.mxu0 %v1529
        %2957 = vmatpush2.msra.mxu0 %v1528
        %2958 = vmatprep.subr.mxu0 %v1521
        %2959 = vmatpush2.msra.mxu0 %v1520
        %2960 = vmatprep.subr.mxu0 %v1513
        %2961 = vmatpush2.msra.mxu0 %v1512
        %2962 = vmatprep.mubr.f32.mxu0 %v1315
        %2963 = vmatmul.mubr.f32.gmra.mxu0 %v1314
        %v2964 = vpop.f32.mrf.mxu0
        %v2965 = vadd.f32 %v1919, %v2964
        %v2966 = vpop.f32.mrf.mxu0
        %v2967 = vadd.f32 %v1923, %v2966
        %2968 = vmatprep.mubr.f32.mxu0 %v1319
        %2969 = vmatmul.mubr.f32.gmra.mxu0 %v1318
        %v2970 = vpop.f32.mrf.mxu0
        %v2971 = vadd.f32 %v1919, %v2970
        %v2972 = vpop.f32.mrf.mxu0
        %v2973 = vadd.f32 %v1923, %v2972
        %2974 = vmatprep.mubr.f32.mxu0 %v1323
        %2975 = vmatmul.mubr.f32.gmra.mxu0 %v1322
        %v2976 = vpop.f32.mrf.mxu0
        %v2977 = vadd.f32 %v1919, %v2976
        %v2978 = vpop.f32.mrf.mxu0
        %v2979 = vadd.f32 %v1923, %v2978
        %2980 = vmatprep.mubr.f32.mxu0 %v1327
        %2981 = vmatmul.mubr.f32.gmra.mxu0 %v1326
        %v2982 = vpop.f32.mrf.mxu0
        %v2983 = vadd.f32 %v1919, %v2982
        %v2984 = vpop.f32.mrf.mxu0
        %v2985 = vadd.f32 %v1923, %v2984
        %2986 = vmatprep.mubr.f32.mxu0 %v1331
        %2987 = vmatmul.mubr.f32.gmra.mxu0 %v1330
        %v2988 = vpop.f32.mrf.mxu0
        %v2989 = vadd.f32 %v1919, %v2988
        %v2990 = vpop.f32.mrf.mxu0
        %v2991 = vadd.f32 %v1923, %v2990
        %2992 = vmatprep.mubr.f32.mxu0 %v1335
        %2993 = vmatmul.mubr.f32.gmra.mxu0 %v1334
        %v2994 = vpop.f32.mrf.mxu0
        %v2995 = vadd.f32 %v1919, %v2994
        %v2996 = vpop.f32.mrf.mxu0
        %v2997 = vadd.f32 %v1923, %v2996
        %2998 = vmatprep.mubr.f32.mxu0 %v1339
        %2999 = vmatmul.mubr.f32.gmra.mxu0 %v1338
        %v3000 = vpop.f32.mrf.mxu0
        %v3001 = vadd.f32 %v1919, %v3000
        %v3002 = vpop.f32.mrf.mxu0
        %v3003 = vadd.f32 %v1923, %v3002
        %3004 = vmatprep.mubr.f32.mxu0 %v1343
        %3005 = vmatmul.mubr.f32.gmra.mxu0 %v1342
        %v3006 = vpop.f32.mrf.mxu0
        %v3007 = vadd.f32 %v1919, %v3006
        %v3008 = vpop.f32.mrf.mxu0
        %v3009 = vadd.f32 %v1923, %v3008
        %3010 = vmatprep.mubr.f32.mxu0 %v1347
        %3011 = vmatmul.mubr.f32.gmra.mxu0 %v1346
        %v3012 = vpop.f32.mrf.mxu0
        %v3013 = vadd.f32 %v1919, %v3012
        %v3014 = vpop.f32.mrf.mxu0
        %v3015 = vadd.f32 %v1923, %v3014
        %3016 = vmatprep.mubr.f32.mxu0 %v1351
        %3017 = vmatmul.mubr.f32.gmra.mxu0 %v1350
        %v3018 = vpop.f32.mrf.mxu0
        %v3019 = vadd.f32 %v1919, %v3018
        %v3020 = vpop.f32.mrf.mxu0
        %v3021 = vadd.f32 %v1923, %v3020
        %3022 = vmatprep.mubr.f32.mxu0 %v1355
        %3023 = vmatmul.mubr.f32.gmra.mxu0 %v1354
        %v3024 = vpop.f32.mrf.mxu0
        %v3025 = vadd.f32 %v1919, %v3024
        %v3026 = vpop.f32.mrf.mxu0
        %v3027 = vadd.f32 %v1923, %v3026
        %3028 = vmatprep.mubr.f32.mxu0 %v1359
        %3029 = vmatmul.mubr.f32.gmra.mxu0 %v1358
        %v3030 = vpop.f32.mrf.mxu0
        %v3031 = vadd.f32 %v1919, %v3030
        %v3032 = vpop.f32.mrf.mxu0
        %v3033 = vadd.f32 %v1923, %v3032
        %3034 = vmatprep.mubr.f32.mxu0 %v1363
        %3035 = vmatmul.mubr.f32.gmra.mxu0 %v1362
        %v3036 = vpop.f32.mrf.mxu0
        %v3037 = vadd.f32 %v1919, %v3036
        %v3038 = vpop.f32.mrf.mxu0
        %v3039 = vadd.f32 %v1923, %v3038
        %3040 = vmatprep.mubr.f32.mxu0 %v1367
        %3041 = vmatmul.mubr.f32.gmra.mxu0 %v1366
        %v3042 = vpop.f32.mrf.mxu0
        %v3043 = vadd.f32 %v1919, %v3042
        %v3044 = vpop.f32.mrf.mxu0
        %v3045 = vadd.f32 %v1923, %v3044
        %3046 = vmatprep.mubr.f32.mxu0 %v1371
        %3047 = vmatmul.mubr.f32.gmra.mxu0 %v1370
        %v3048 = vpop.f32.mrf.mxu0
        %v3049 = vadd.f32 %v1919, %v3048
        %v3050 = vpop.f32.mrf.mxu0
        %v3051 = vadd.f32 %v1923, %v3050
        %3052 = vmatprep.mubr.f32.mxu0 %v1375
        %3053 = vmatmul.mubr.f32.gmra.mxu0 %v1374
        %v3054 = vpop.f32.mrf.mxu0
        %v3055 = vadd.f32 %v1919, %v3054
        %v3056 = vpop.f32.mrf.mxu0
        %v3057 = vadd.f32 %v1923, %v3056
        %3058 = vdwg.mxu0
        %3059 = vmatprep.subr.mxu0 %v1761
        %3060 = vmatpush1.msra.mxu0 %v1760
        %3061 = vmatprep.subr.mxu0 %v1753
        %3062 = vmatpush1.msra.mxu0 %v1752
        %3063 = vmatprep.subr.mxu0 %v1745
        %3064 = vmatpush1.msra.mxu0 %v1744
        %3065 = vmatprep.subr.mxu0 %v1737
        %3066 = vmatpush1.msra.mxu0 %v1736
        %3067 = vmatprep.subr.mxu0 %v1729
        %3068 = vmatpush1.msra.mxu0 %v1728
        %3069 = vmatprep.subr.mxu0 %v1721
        %3070 = vmatpush1.msra.mxu0 %v1720
        %3071 = vmatprep.subr.mxu0 %v1713
        %3072 = vmatpush1.msra.mxu0 %v1712
        %3073 = vmatprep.subr.mxu0 %v1705
        %3074 = vmatpush1.msra.mxu0 %v1704
        %3075 = vmatprep.subr.mxu0 %v1697
        %3076 = vmatpush1.msra.mxu0 %v1696
        %3077 = vmatprep.subr.mxu0 %v1689
        %3078 = vmatpush1.msra.mxu0 %v1688
        %3079 = vmatprep.subr.mxu0 %v1681
        %3080 = vmatpush1.msra.mxu0 %v1680
        %3081 = vmatprep.subr.mxu0 %v1673
        %3082 = vmatpush1.msra.mxu0 %v1672
        %3083 = vmatprep.subr.mxu0 %v1665
        %3084 = vmatpush1.msra.mxu0 %v1664
        %3085 = vmatprep.subr.mxu0 %v1657
        %3086 = vmatpush1.msra.mxu0 %v1656
        %3087 = vmatprep.subr.mxu0 %v1649
        %3088 = vmatpush1.msra.mxu0 %v1648
        %3089 = vmatprep.subr.mxu0 %v1641
        %3090 = vmatpush1.msra.mxu0 %v1640
        %3091 = vmatprep.subr.mxu0 %v1889
        %3092 = vmatpush2.msra.mxu0 %v1888
        %3093 = vmatprep.subr.mxu0 %v1881
        %3094 = vmatpush2.msra.mxu0 %v1880
        %3095 = vmatprep.subr.mxu0 %v1873
        %3096 = vmatpush2.msra.mxu0 %v1872
        %3097 = vmatprep.subr.mxu0 %v1865
        %3098 = vmatpush2.msra.mxu0 %v1864
        %3099 = vmatprep.subr.mxu0 %v1857
        %3100 = vmatpush2.msra.mxu0 %v1856
        %3101 = vmatprep.subr.mxu0 %v1849
        %3102 = vmatpush2.msra.mxu0 %v1848
        %3103 = vmatprep.subr.mxu0 %v1841
        %3104 = vmatpush2.msra.mxu0 %v1840
        %3105 = vmatprep.subr.mxu0 %v1833
        %3106 = vmatpush2.msra.mxu0 %v1832
        %3107 = vmatprep.subr.mxu0 %v1825
        %3108 = vmatpush2.msra.mxu0 %v1824
        %3109 = vmatprep.subr.mxu0 %v1817
        %3110 = vmatpush2.msra.mxu0 %v1816
        %3111 = vmatprep.subr.mxu0 %v1809
        %3112 = vmatpush2.msra.mxu0 %v1808
        %3113 = vmatprep.subr.mxu0 %v1801
        %3114 = vmatpush2.msra.mxu0 %v1800
        %3115 = vmatprep.subr.mxu0 %v1793
        %3116 = vmatpush2.msra.mxu0 %v1792
        %3117 = vmatprep.subr.mxu0 %v1785
        %3118 = vmatpush2.msra.mxu0 %v1784
        %3119 = vmatprep.subr.mxu0 %v1777
        %3120 = vmatpush2.msra.mxu0 %v1776
        %3121 = vmatprep.subr.mxu0 %v1769
        %3122 = vmatpush2.msra.mxu0 %v1768
        %3123 = vmatprep.mubr.f32.mxu0 %v1317
        %3124 = vmatmul.mubr.f32.gmra.mxu0 %v1316
        %v3125 = vpop.f32.mrf.mxu0
        %v3126 = vadd.f32 %v2965, %v3125
        %v3127 = vpop.f32.mrf.mxu0
        %v3128 = vadd.f32 %v2967, %v3127
        %3129 = vmatprep.mubr.f32.mxu0 %v1321
        %3130 = vmatmul.mubr.f32.gmra.mxu0 %v1320
        %v3131 = vpop.f32.mrf.mxu0
        %v3132 = vadd.f32 %v2971, %v3131
        %v3133 = vpop.f32.mrf.mxu0
        %v3134 = vadd.f32 %v2973, %v3133
        %3135 = vmatprep.mubr.f32.mxu0 %v1325
        %3136 = vmatmul.mubr.f32.gmra.mxu0 %v1324
        %v3137 = vpop.f32.mrf.mxu0
        %v3138 = vadd.f32 %v2977, %v3137
        %v3139 = vpop.f32.mrf.mxu0
        %v3140 = vadd.f32 %v2979, %v3139
        %3141 = vmatprep.mubr.f32.mxu0 %v1329
        %3142 = vmatmul.mubr.f32.gmra.mxu0 %v1328
        %v3143 = vpop.f32.mrf.mxu0
        %v3144 = vadd.f32 %v2983, %v3143
        %v3145 = vpop.f32.mrf.mxu0
        %v3146 = vadd.f32 %v2985, %v3145
        %3147 = vmatprep.mubr.f32.mxu0 %v1333
        %3148 = vmatmul.mubr.f32.gmra.mxu0 %v1332
        %v3149 = vpop.f32.mrf.mxu0
        %v3150 = vadd.f32 %v2989, %v3149
        %v3151 = vpop.f32.mrf.mxu0
        %v3152 = vadd.f32 %v2991, %v3151
        %3153 = vmatprep.mubr.f32.mxu0 %v1337
        %3154 = vmatmul.mubr.f32.gmra.mxu0 %v1336
        %v3155 = vpop.f32.mrf.mxu0
        %v3156 = vadd.f32 %v2995, %v3155
        %v3157 = vpop.f32.mrf.mxu0
        %v3158 = vadd.f32 %v2997, %v3157
        %3159 = vmatprep.mubr.f32.mxu0 %v1341
        %3160 = vmatmul.mubr.f32.gmra.mxu0 %v1340
        %v3161 = vpop.f32.mrf.mxu0
        %v3162 = vadd.f32 %v3001, %v3161
        %v3163 = vpop.f32.mrf.mxu0
        %v3164 = vadd.f32 %v3003, %v3163
        %3165 = vmatprep.mubr.f32.mxu0 %v1345
        %3166 = vmatmul.mubr.f32.gmra.mxu0 %v1344
        %v3167 = vpop.f32.mrf.mxu0
        %v3168 = vadd.f32 %v3007, %v3167
        %v3169 = vpop.f32.mrf.mxu0
        %v3170 = vadd.f32 %v3009, %v3169
        %3171 = vmatprep.mubr.f32.mxu0 %v1349
        %3172 = vmatmul.mubr.f32.gmra.mxu0 %v1348
        %v3173 = vpop.f32.mrf.mxu0
        %v3174 = vadd.f32 %v3013, %v3173
        %v3175 = vpop.f32.mrf.mxu0
        %v3176 = vadd.f32 %v3015, %v3175
        %3177 = vmatprep.mubr.f32.mxu0 %v1353
        %3178 = vmatmul.mubr.f32.gmra.mxu0 %v1352
        %v3179 = vpop.f32.mrf.mxu0
        %v3180 = vadd.f32 %v3019, %v3179
        %v3181 = vpop.f32.mrf.mxu0
        %v3182 = vadd.f32 %v3021, %v3181
        %3183 = vmatprep.mubr.f32.mxu0 %v1357
        %3184 = vmatmul.mubr.f32.gmra.mxu0 %v1356
        %v3185 = vpop.f32.mrf.mxu0
        %v3186 = vadd.f32 %v3025, %v3185
        %v3187 = vpop.f32.mrf.mxu0
        %v3188 = vadd.f32 %v3027, %v3187
        %3189 = vmatprep.mubr.f32.mxu0 %v1361
        %3190 = vmatmul.mubr.f32.gmra.mxu0 %v1360
        %v3191 = vpop.f32.mrf.mxu0
        %v3192 = vadd.f32 %v3031, %v3191
        %v3193 = vpop.f32.mrf.mxu0
        %v3194 = vadd.f32 %v3033, %v3193
        %3195 = vmatprep.mubr.f32.mxu0 %v1365
        %3196 = vmatmul.mubr.f32.gmra.mxu0 %v1364
        %v3197 = vpop.f32.mrf.mxu0
        %v3198 = vadd.f32 %v3037, %v3197
        %v3199 = vpop.f32.mrf.mxu0
        %v3200 = vadd.f32 %v3039, %v3199
        %3201 = vmatprep.mubr.f32.mxu0 %v1369
        %3202 = vmatmul.mubr.f32.gmra.mxu0 %v1368
        %v3203 = vpop.f32.mrf.mxu0
        %v3204 = vadd.f32 %v3043, %v3203
        %v3205 = vpop.f32.mrf.mxu0
        %v3206 = vadd.f32 %v3045, %v3205
        %3207 = vmatprep.mubr.f32.mxu0 %v1373
        %3208 = vmatmul.mubr.f32.gmra.mxu0 %v1372
        %v3209 = vpop.f32.mrf.mxu0
        %v3210 = vadd.f32 %v3049, %v3209
        %v3211 = vpop.f32.mrf.mxu0
        %v3212 = vadd.f32 %v3051, %v3211
        %3213 = vmatprep.mubr.f32.mxu0 %v1377
        %3214 = vmatmul.mubr.f32.gmra.mxu0 %v1376
        %v3215 = vpop.f32.mrf.mxu0
        %v3216 = vadd.f32 %v3055, %v3215
        %v3217 = vpop.f32.mrf.mxu0
        %v3218 = vadd.f32 %v3057, %v3217
        %3219 = vdwg.mxu0
        %v3220 = vmax.f32 %v2160, 0.0
        %v3221 = vmax.f32 %v2162, 0.0
        %v3222 = vmax.f32 %v2482, 0.0
        %v3223 = vmax.f32 %v2484, 0.0
        %v3224 = vmax.f32 %v2804, 0.0
        %v3225 = vmax.f32 %v2806, 0.0
        %v3226 = vmax.f32 %v3126, 0.0
        %v3227 = vmax.f32 %v3128, 0.0
        %v3228 = vmax.f32 %v2166, 0.0
        %v3229 = vmax.f32 %v2168, 0.0
        %v3230 = vmax.f32 %v2488, 0.0
        %v3231 = vmax.f32 %v2490, 0.0
        %v3232 = vmax.f32 %v2810, 0.0
        %v3233 = vmax.f32 %v2812, 0.0
        %v3234 = vmax.f32 %v3132, 0.0
        %v3235 = vmax.f32 %v3134, 0.0
        %v3236 = vmax.f32 %v2172, 0.0
        %v3237 = vmax.f32 %v2174, 0.0
        %v3238 = vmax.f32 %v2494, 0.0
        %v3239 = vmax.f32 %v2496, 0.0
        %v3240 = vmax.f32 %v2816, 0.0
        %v3241 = vmax.f32 %v2818, 0.0
        %v3242 = vmax.f32 %v3138, 0.0
        %v3243 = vmax.f32 %v3140, 0.0
        %v3244 = vmax.f32 %v2178, 0.0
        %v3245 = vmax.f32 %v2180, 0.0
        %v3246 = vmax.f32 %v2500, 0.0
        %v3247 = vmax.f32 %v2502, 0.0
        %v3248 = vmax.f32 %v2822, 0.0
        %v3249 = vmax.f32 %v2824, 0.0
        %v3250 = vmax.f32 %v3144, 0.0
        %v3251 = vmax.f32 %v3146, 0.0
        %v3252 = vmax.f32 %v2184, 0.0
        %v3253 = vmax.f32 %v2186, 0.0
        %v3254 = vmax.f32 %v2506, 0.0
        %v3255 = vmax.f32 %v2508, 0.0
        %v3256 = vmax.f32 %v2828, 0.0
        %v3257 = vmax.f32 %v2830, 0.0
        %v3258 = vmax.f32 %v3150, 0.0
        %v3259 = vmax.f32 %v3152, 0.0
        %v3260 = vmax.f32 %v2190, 0.0
        %v3261 = vmax.f32 %v2192, 0.0
        %v3262 = vmax.f32 %v2512, 0.0
        %v3263 = vmax.f32 %v2514, 0.0
        %v3264 = vmax.f32 %v2834, 0.0
        %v3265 = vmax.f32 %v2836, 0.0
        %v3266 = vmax.f32 %v3156, 0.0
        %v3267 = vmax.f32 %v3158, 0.0
        %v3268 = vmax.f32 %v2196, 0.0
        %v3269 = vmax.f32 %v2198, 0.0
        %v3270 = vmax.f32 %v2518, 0.0
        %v3271 = vmax.f32 %v2520, 0.0
        %v3272 = vmax.f32 %v2840, 0.0
        %v3273 = vmax.f32 %v2842, 0.0
        %v3274 = vmax.f32 %v3162, 0.0
        %v3275 = vmax.f32 %v3164, 0.0
        %v3276 = vmax.f32 %v2202, 0.0
        %v3277 = vmax.f32 %v2204, 0.0
        %v3278 = vmax.f32 %v2524, 0.0
        %v3279 = vmax.f32 %v2526, 0.0
        %v3280 = vmax.f32 %v2846, 0.0
        %v3281 = vmax.f32 %v2848, 0.0
        %v3282 = vmax.f32 %v3168, 0.0
        %v3283 = vmax.f32 %v3170, 0.0
        %v3284 = vmax.f32 %v2208, 0.0
        %v3285 = vmax.f32 %v2210, 0.0
        %v3286 = vmax.f32 %v2530, 0.0
        %v3287 = vmax.f32 %v2532, 0.0
        %v3288 = vmax.f32 %v2852, 0.0
        %v3289 = vmax.f32 %v2854, 0.0
        %v3290 = vmax.f32 %v3174, 0.0
        %v3291 = vmax.f32 %v3176, 0.0
        %v3292 = vmax.f32 %v2214, 0.0
        %v3293 = vmax.f32 %v2216, 0.0
        %v3294 = vmax.f32 %v2536, 0.0
        %v3295 = vmax.f32 %v2538, 0.0
        %v3296 = vmax.f32 %v2858, 0.0
        %v3297 = vmax.f32 %v2860, 0.0
        %v3298 = vmax.f32 %v3180, 0.0
        %v3299 = vmax.f32 %v3182, 0.0
        %v3300 = vmax.f32 %v2220, 0.0
        %v3301 = vmax.f32 %v2222, 0.0
        %v3302 = vmax.f32 %v2542, 0.0
        %v3303 = vmax.f32 %v2544, 0.0
        %v3304 = vmax.f32 %v2864, 0.0
        %v3305 = vmax.f32 %v2866, 0.0
        %v3306 = vmax.f32 %v3186, 0.0
        %v3307 = vmax.f32 %v3188, 0.0
        %v3308 = vmax.f32 %v2226, 0.0
        %v3309 = vmax.f32 %v2228, 0.0
        %v3310 = vmax.f32 %v2548, 0.0
        %v3311 = vmax.f32 %v2550, 0.0
        %v3312 = vmax.f32 %v2870, 0.0
        %v3313 = vmax.f32 %v2872, 0.0
        %v3314 = vmax.f32 %v3192, 0.0
        %v3315 = vmax.f32 %v3194, 0.0
        %v3316 = vmax.f32 %v2232, 0.0
        %v3317 = vmax.f32 %v2234, 0.0
        %v3318 = vmax.f32 %v2554, 0.0
        %v3319 = vmax.f32 %v2556, 0.0
        %v3320 = vmax.f32 %v2876, 0.0
        %v3321 = vmax.f32 %v2878, 0.0
        %v3322 = vmax.f32 %v3198, 0.0
        %v3323 = vmax.f32 %v3200, 0.0
        %v3324 = vmax.f32 %v2238, 0.0
        %v3325 = vmax.f32 %v2240, 0.0
        %v3326 = vmax.f32 %v2560, 0.0
        %v3327 = vmax.f32 %v2562, 0.0
        %v3328 = vmax.f32 %v2882, 0.0
        %v3329 = vmax.f32 %v2884, 0.0
        %v3330 = vmax.f32 %v3204, 0.0
        %v3331 = vmax.f32 %v3206, 0.0
        %v3332 = vmax.f32 %v2244, 0.0
        %v3333 = vmax.f32 %v2246, 0.0
        %v3334 = vmax.f32 %v2566, 0.0
        %v3335 = vmax.f32 %v2568, 0.0
        %v3336 = vmax.f32 %v2888, 0.0
        %v3337 = vmax.f32 %v2890, 0.0
        %v3338 = vmax.f32 %v3210, 0.0
        %v3339 = vmax.f32 %v3212, 0.0
        %v3340 = vmax.f32 %v2250, 0.0
        %v3341 = vmax.f32 %v2252, 0.0
        %v3342 = vmax.f32 %v2572, 0.0
        %v3343 = vmax.f32 %v2574, 0.0
        %v3344 = vmax.f32 %v2894, 0.0
        %v3345 = vmax.f32 %v2896, 0.0
        %v3346 = vmax.f32 %v3216, 0.0
        %v3347 = vmax.f32 %v3218, 0.0
        %v3348 = vld [vmem:[%s5] sm:$0xff]
        %v3349 = vld [vmem:[%s5 + $0x8] sm:$0xff]
        %v3350 = vld [vmem:[%s5 + $0x10] sm:$0xff]
        %v3351 = vld [vmem:[%s5 + $0x18] sm:$0xff]
        %v3352 = vld [vmem:[%s5 + $0x20] sm:$0xff]
        %v3353 = vld [vmem:[%s5 + $0x28] sm:$0xff]
        %v3354 = vld [vmem:[%s5 + $0x30] sm:$0xff]
        %v3355 = vld [vmem:[%s5 + $0x38] sm:$0xff]
        %v3356 = vld [vmem:[%s5 + $0x40] sm:$0xff]
        %v3357 = vld [vmem:[%s5 + $0x48] sm:$0xff]
        %v3358 = vld [vmem:[%s5 + $0x50] sm:$0xff]
        %v3359 = vld [vmem:[%s5 + $0x58] sm:$0xff]
        %v3360 = vld [vmem:[%s5 + $0x60] sm:$0xff]
        %v3361 = vld [vmem:[%s5 + $0x68] sm:$0xff]
        %v3362 = vld [vmem:[%s5 + $0x70] sm:$0xff]
        %v3363 = vld [vmem:[%s5 + $0x78] sm:$0xff]
        %v3364 = vld [vmem:[%s5 + $0x80] sm:$0xff]
        %v3365 = vld [vmem:[%s5 + $0x88] sm:$0xff]
        %v3366 = vld [vmem:[%s5 + $0x90] sm:$0xff]
        %v3367 = vld [vmem:[%s5 + $0x98] sm:$0xff]
        %v3368 = vld [vmem:[%s5 + $0xa0] sm:$0xff]
        %v3369 = vld [vmem:[%s5 + $0xa8] sm:$0xff]
        %v3370 = vld [vmem:[%s5 + $0xb0] sm:$0xff]
        %v3371 = vld [vmem:[%s5 + $0xb8] sm:$0xff]
        %v3372 = vld [vmem:[%s5 + $0xc0] sm:$0xff]
        %v3373 = vld [vmem:[%s5 + $0xc8] sm:$0xff]
        %v3374 = vld [vmem:[%s5 + $0xd0] sm:$0xff]
        %v3375 = vld [vmem:[%s5 + $0xd8] sm:$0xff]
        %v3376 = vld [vmem:[%s5 + $0xe0] sm:$0xff]
        %v3377 = vld [vmem:[%s5 + $0xe8] sm:$0xff]
        %v3378 = vld [vmem:[%s5 + $0xf0] sm:$0xff]
        %v3379 = vld [vmem:[%s5 + $0xf8] sm:$0xff]
        %v3380 = vld [vmem:[%s5 + $0x100] sm:$0xff]
        %v3381 = vld [vmem:[%s5 + $0x108] sm:$0xff]
        %v3382 = vld [vmem:[%s5 + $0x110] sm:$0xff]
        %v3383 = vld [vmem:[%s5 + $0x118] sm:$0xff]
        %v3384 = vld [vmem:[%s5 + $0x120] sm:$0xff]
        %v3385 = vld [vmem:[%s5 + $0x128] sm:$0xff]
        %v3386 = vld [vmem:[%s5 + $0x130] sm:$0xff]
        %v3387 = vld [vmem:[%s5 + $0x138] sm:$0xff]
        %v3388 = vld [vmem:[%s5 + $0x140] sm:$0xff]
        %v3389 = vld [vmem:[%s5 + $0x148] sm:$0xff]
        %v3390 = vld [vmem:[%s5 + $0x150] sm:$0xff]
        %v3391 = vld [vmem:[%s5 + $0x158] sm:$0xff]
        %v3392 = vld [vmem:[%s5 + $0x160] sm:$0xff]
        %v3393 = vld [vmem:[%s5 + $0x168] sm:$0xff]
        %v3394 = vld [vmem:[%s5 + $0x170] sm:$0xff]
        %v3395 = vld [vmem:[%s5 + $0x178] sm:$0xff]
        %v3396 = vld [vmem:[%s5 + $0x180] sm:$0xff]
        %v3397 = vld [vmem:[%s5 + $0x188] sm:$0xff]
        %v3398 = vld [vmem:[%s5 + $0x190] sm:$0xff]
        %v3399 = vld [vmem:[%s5 + $0x198] sm:$0xff]
        %v3400 = vld [vmem:[%s5 + $0x1a0] sm:$0xff]
        %v3401 = vld [vmem:[%s5 + $0x1a8] sm:$0xff]
        %v3402 = vld [vmem:[%s5 + $0x1b0] sm:$0xff]
        %v3403 = vld [vmem:[%s5 + $0x1b8] sm:$0xff]
        %v3404 = vld [vmem:[%s5 + $0x1c0] sm:$0xff]
        %v3405 = vld [vmem:[%s5 + $0x1c8] sm:$0xff]
        %v3406 = vld [vmem:[%s5 + $0x1d0] sm:$0xff]
        %v3407 = vld [vmem:[%s5 + $0x1d8] sm:$0xff]
        %v3408 = vld [vmem:[%s5 + $0x1e0] sm:$0xff]
        %v3409 = vld [vmem:[%s5 + $0x1e8] sm:$0xff]
        %v3410 = vld [vmem:[%s5 + $0x1f0] sm:$0xff]
        %v3411 = vld [vmem:[%s5 + $0x1f8] sm:$0xff]
        %v3412 = vld [vmem:[%s5 + $0x200] sm:$0xff]
        %v3413 = vld [vmem:[%s5 + $0x208] sm:$0xff]
        %v3414 = vld [vmem:[%s5 + $0x210] sm:$0xff]
        %v3415 = vld [vmem:[%s5 + $0x218] sm:$0xff]
        %v3416 = vld [vmem:[%s5 + $0x220] sm:$0xff]
        %v3417 = vld [vmem:[%s5 + $0x228] sm:$0xff]
        %v3418 = vld [vmem:[%s5 + $0x230] sm:$0xff]
        %v3419 = vld [vmem:[%s5 + $0x238] sm:$0xff]
        %v3420 = vld [vmem:[%s5 + $0x240] sm:$0xff]
        %v3421 = vld [vmem:[%s5 + $0x248] sm:$0xff]
        %v3422 = vld [vmem:[%s5 + $0x250] sm:$0xff]
        %v3423 = vld [vmem:[%s5 + $0x258] sm:$0xff]
        %v3424 = vld [vmem:[%s5 + $0x260] sm:$0xff]
        %v3425 = vld [vmem:[%s5 + $0x268] sm:$0xff]
        %v3426 = vld [vmem:[%s5 + $0x270] sm:$0xff]
        %v3427 = vld [vmem:[%s5 + $0x278] sm:$0xff]
        %v3428 = vld [vmem:[%s5 + $0x280] sm:$0xff]
        %v3429 = vld [vmem:[%s5 + $0x288] sm:$0xff]
        %v3430 = vld [vmem:[%s5 + $0x290] sm:$0xff]
        %v3431 = vld [vmem:[%s5 + $0x298] sm:$0xff]
        %v3432 = vld [vmem:[%s5 + $0x2a0] sm:$0xff]
        %v3433 = vld [vmem:[%s5 + $0x2a8] sm:$0xff]
        %v3434 = vld [vmem:[%s5 + $0x2b0] sm:$0xff]
        %v3435 = vld [vmem:[%s5 + $0x2b8] sm:$0xff]
        %v3436 = vld [vmem:[%s5 + $0x2c0] sm:$0xff]
        %v3437 = vld [vmem:[%s5 + $0x2c8] sm:$0xff]
        %v3438 = vld [vmem:[%s5 + $0x2d0] sm:$0xff]
        %v3439 = vld [vmem:[%s5 + $0x2d8] sm:$0xff]
        %v3440 = vld [vmem:[%s5 + $0x2e0] sm:$0xff]
        %v3441 = vld [vmem:[%s5 + $0x2e8] sm:$0xff]
        %v3442 = vld [vmem:[%s5 + $0x2f0] sm:$0xff]
        %v3443 = vld [vmem:[%s5 + $0x2f8] sm:$0xff]
        %v3444 = vld [vmem:[%s5 + $0x300] sm:$0xff]
        %v3445 = vld [vmem:[%s5 + $0x308] sm:$0xff]
        %v3446 = vld [vmem:[%s5 + $0x310] sm:$0xff]
        %v3447 = vld [vmem:[%s5 + $0x318] sm:$0xff]
        %v3448 = vld [vmem:[%s5 + $0x320] sm:$0xff]
        %v3449 = vld [vmem:[%s5 + $0x328] sm:$0xff]
        %v3450 = vld [vmem:[%s5 + $0x330] sm:$0xff]
        %v3451 = vld [vmem:[%s5 + $0x338] sm:$0xff]
        %v3452 = vld [vmem:[%s5 + $0x340] sm:$0xff]
        %v3453 = vld [vmem:[%s5 + $0x348] sm:$0xff]
        %v3454 = vld [vmem:[%s5 + $0x350] sm:$0xff]
        %v3455 = vld [vmem:[%s5 + $0x358] sm:$0xff]
        %v3456 = vld [vmem:[%s5 + $0x360] sm:$0xff]
        %v3457 = vld [vmem:[%s5 + $0x368] sm:$0xff]
        %v3458 = vld [vmem:[%s5 + $0x370] sm:$0xff]
        %v3459 = vld [vmem:[%s5 + $0x378] sm:$0xff]
        %v3460 = vld [vmem:[%s5 + $0x380] sm:$0xff]
        %v3461 = vld [vmem:[%s5 + $0x388] sm:$0xff]
        %v3462 = vld [vmem:[%s5 + $0x390] sm:$0xff]
        %v3463 = vld [vmem:[%s5 + $0x398] sm:$0xff]
        %v3464 = vld [vmem:[%s5 + $0x3a0] sm:$0xff]
        %v3465 = vld [vmem:[%s5 + $0x3a8] sm:$0xff]
        %v3466 = vld [vmem:[%s5 + $0x3b0] sm:$0xff]
        %v3467 = vld [vmem:[%s5 + $0x3b8] sm:$0xff]
        %v3468 = vld [vmem:[%s5 + $0x3c0] sm:$0xff]
        %v3469 = vld [vmem:[%s5 + $0x3c8] sm:$0xff]
        %v3470 = vld [vmem:[%s5 + $0x3d0] sm:$0xff]
        %v3471 = vld [vmem:[%s5 + $0x3d8] sm:$0xff]
        %v3472 = vld [vmem:[%s5 + $0x3e0] sm:$0xff]
        %v3473 = vld [vmem:[%s5 + $0x3e8] sm:$0xff]
        %v3474 = vld [vmem:[%s5 + $0x3f0] sm:$0xff]
        %v3475 = vld [vmem:[%s5 + $0x3f8] sm:$0xff]
        %v3476 = vld [vmem:[#allocation11 + $0x1] sm:$0x1]
        %v3477 = vlaneseq
        %v3478 = vshrl.u32 %v3477, 7
        %v3479 = vsub.s32 0, %v3478
        %v3480 = vrot.slane %v3476, %v3479
        %3481 = vmatprep.subr.mxu0 0.0
        %3482 = vmatpush1.msra.mxu0 %v3363
        %3483 = vmatprep.subr.mxu0 0.0
        %3484 = vmatpush1.msra.mxu0 %v3362
        %3485 = vmatprep.subr.mxu0 0.0
        %3486 = vmatpush1.msra.mxu0 %v3361
        %3487 = vmatprep.subr.mxu0 0.0
        %3488 = vmatpush1.msra.mxu0 %v3360
        %3489 = vmatprep.subr.mxu0 0.0
        %3490 = vmatpush1.msra.mxu0 %v3359
        %3491 = vmatprep.subr.mxu0 0.0
        %3492 = vmatpush1.msra.mxu0 %v3358
        %3493 = vmatprep.subr.mxu0 0.0
        %3494 = vmatpush1.msra.mxu0 %v3357
        %3495 = vmatprep.subr.mxu0 0.0
        %3496 = vmatpush1.msra.mxu0 %v3356
        %3497 = vmatprep.subr.mxu0 0.0
        %3498 = vmatpush1.msra.mxu0 %v3355
        %3499 = vmatprep.subr.mxu0 0.0
        %3500 = vmatpush1.msra.mxu0 %v3354
        %3501 = vmatprep.subr.mxu0 0.0
        %3502 = vmatpush1.msra.mxu0 %v3353
        %3503 = vmatprep.subr.mxu0 0.0
        %3504 = vmatpush1.msra.mxu0 %v3352
        %3505 = vmatprep.subr.mxu0 0.0
        %3506 = vmatpush1.msra.mxu0 %v3351
        %3507 = vmatprep.subr.mxu0 0.0
        %3508 = vmatpush1.msra.mxu0 %v3350
        %3509 = vmatprep.subr.mxu0 0.0
        %3510 = vmatpush1.msra.mxu0 %v3349
        %3511 = vmatprep.subr.mxu0 0.0
        %3512 = vmatpush1.msra.mxu0 %v3348
        %3513 = vmatprep.subr.mxu0 0.0
        %3514 = vmatpush2.msra.mxu0 %v3379
        %3515 = vmatprep.subr.mxu0 0.0
        %3516 = vmatpush2.msra.mxu0 %v3378
        %3517 = vmatprep.subr.mxu0 0.0
        %3518 = vmatpush2.msra.mxu0 %v3377
        %3519 = vmatprep.subr.mxu0 0.0
        %3520 = vmatpush2.msra.mxu0 %v3376
        %3521 = vmatprep.subr.mxu0 0.0
        %3522 = vmatpush2.msra.mxu0 %v3375
        %3523 = vmatprep.subr.mxu0 0.0
        %3524 = vmatpush2.msra.mxu0 %v3374
        %3525 = vmatprep.subr.mxu0 0.0
        %3526 = vmatpush2.msra.mxu0 %v3373
        %3527 = vmatprep.subr.mxu0 0.0
        %3528 = vmatpush2.msra.mxu0 %v3372
        %3529 = vmatprep.subr.mxu0 0.0
        %3530 = vmatpush2.msra.mxu0 %v3371
        %3531 = vmatprep.subr.mxu0 0.0
        %3532 = vmatpush2.msra.mxu0 %v3370
        %3533 = vmatprep.subr.mxu0 0.0
        %3534 = vmatpush2.msra.mxu0 %v3369
        %3535 = vmatprep.subr.mxu0 0.0
        %3536 = vmatpush2.msra.mxu0 %v3368
        %3537 = vmatprep.subr.mxu0 0.0
        %3538 = vmatpush2.msra.mxu0 %v3367
        %3539 = vmatprep.subr.mxu0 0.0
        %3540 = vmatpush2.msra.mxu0 %v3366
        %3541 = vmatprep.subr.mxu0 0.0
        %3542 = vmatpush2.msra.mxu0 %v3365
        %3543 = vmatprep.subr.mxu0 0.0
        %3544 = vmatpush2.msra.mxu0 %v3364
        %3545 = vmatprep.mubr.f32.mxu0 %v3221
        %3546 = vmatmul.mubr.f32.gmra.mxu0 %v3220
        %v3547 = vpop.f32.mrf.mxu0
        %v3548 = vadd.f32 %v3480, %v3547
        %v3549 = vpop.f32.mrf.mxu0
        %3550 = vmatprep.mubr.f32.mxu0 %v3229
        %3551 = vmatmul.mubr.f32.gmra.mxu0 %v3228
        %v3552 = vpop.f32.mrf.mxu0
        %v3553 = vadd.f32 %v3480, %v3552
        %v3554 = vpop.f32.mrf.mxu0
        %3555 = vmatprep.mubr.f32.mxu0 %v3237
        %3556 = vmatmul.mubr.f32.gmra.mxu0 %v3236
        %v3557 = vpop.f32.mrf.mxu0
        %v3558 = vadd.f32 %v3480, %v3557
        %v3559 = vpop.f32.mrf.mxu0
        %3560 = vmatprep.mubr.f32.mxu0 %v3245
        %3561 = vmatmul.mubr.f32.gmra.mxu0 %v3244
        %v3562 = vpop.f32.mrf.mxu0
        %v3563 = vadd.f32 %v3480, %v3562
        %v3564 = vpop.f32.mrf.mxu0
        %3565 = vmatprep.mubr.f32.mxu0 %v3253
        %3566 = vmatmul.mubr.f32.gmra.mxu0 %v3252
        %v3567 = vpop.f32.mrf.mxu0
        %v3568 = vadd.f32 %v3480, %v3567
        %v3569 = vpop.f32.mrf.mxu0
        %3570 = vmatprep.mubr.f32.mxu0 %v3261
        %3571 = vmatmul.mubr.f32.gmra.mxu0 %v3260
        %v3572 = vpop.f32.mrf.mxu0
        %v3573 = vadd.f32 %v3480, %v3572
        %v3574 = vpop.f32.mrf.mxu0
        %3575 = vmatprep.mubr.f32.mxu0 %v3269
        %3576 = vmatmul.mubr.f32.gmra.mxu0 %v3268
        %v3577 = vpop.f32.mrf.mxu0
        %v3578 = vadd.f32 %v3480, %v3577
        %v3579 = vpop.f32.mrf.mxu0
        %3580 = vmatprep.mubr.f32.mxu0 %v3277
        %3581 = vmatmul.mubr.f32.gmra.mxu0 %v3276
        %v3582 = vpop.f32.mrf.mxu0
        %v3583 = vadd.f32 %v3480, %v3582
        %v3584 = vpop.f32.mrf.mxu0
        %3585 = vmatprep.mubr.f32.mxu0 %v3285
        %3586 = vmatmul.mubr.f32.gmra.mxu0 %v3284
        %v3587 = vpop.f32.mrf.mxu0
        %v3588 = vadd.f32 %v3480, %v3587
        %v3589 = vpop.f32.mrf.mxu0
        %3590 = vmatprep.mubr.f32.mxu0 %v3293
        %3591 = vmatmul.mubr.f32.gmra.mxu0 %v3292
        %v3592 = vpop.f32.mrf.mxu0
        %v3593 = vadd.f32 %v3480, %v3592
        %v3594 = vpop.f32.mrf.mxu0
        %3595 = vmatprep.mubr.f32.mxu0 %v3301
        %3596 = vmatmul.mubr.f32.gmra.mxu0 %v3300
        %v3597 = vpop.f32.mrf.mxu0
        %v3598 = vadd.f32 %v3480, %v3597
        %v3599 = vpop.f32.mrf.mxu0
        %3600 = vmatprep.mubr.f32.mxu0 %v3309
        %3601 = vmatmul.mubr.f32.gmra.mxu0 %v3308
        %v3602 = vpop.f32.mrf.mxu0
        %v3603 = vadd.f32 %v3480, %v3602
        %v3604 = vpop.f32.mrf.mxu0
        %3605 = vmatprep.mubr.f32.mxu0 %v3317
        %3606 = vmatmul.mubr.f32.gmra.mxu0 %v3316
        %v3607 = vpop.f32.mrf.mxu0
        %v3608 = vadd.f32 %v3480, %v3607
        %v3609 = vpop.f32.mrf.mxu0
        %3610 = vmatprep.mubr.f32.mxu0 %v3325
        %3611 = vmatmul.mubr.f32.gmra.mxu0 %v3324
        %v3612 = vpop.f32.mrf.mxu0
        %v3613 = vadd.f32 %v3480, %v3612
        %v3614 = vpop.f32.mrf.mxu0
        %3615 = vmatprep.mubr.f32.mxu0 %v3333
        %3616 = vmatmul.mubr.f32.gmra.mxu0 %v3332
        %v3617 = vpop.f32.mrf.mxu0
        %v3618 = vadd.f32 %v3480, %v3617
        %v3619 = vpop.f32.mrf.mxu0
        %3620 = vmatprep.mubr.f32.mxu0 %v3341
        %3621 = vmatmul.mubr.f32.gmra.mxu0 %v3340
        %v3622 = vpop.f32.mrf.mxu0
        %v3623 = vadd.f32 %v3480, %v3622
        %v3624 = vpop.f32.mrf.mxu0
        %3625 = vdwg.mxu0
        %3626 = vmatprep.subr.mxu0 0.0
        %3627 = vmatpush1.msra.mxu0 %v3395
        %3628 = vmatprep.subr.mxu0 0.0
        %3629 = vmatpush1.msra.mxu0 %v3394
        %3630 = vmatprep.subr.mxu0 0.0
        %3631 = vmatpush1.msra.mxu0 %v3393
        %3632 = vmatprep.subr.mxu0 0.0
        %3633 = vmatpush1.msra.mxu0 %v3392
        %3634 = vmatprep.subr.mxu0 0.0
        %3635 = vmatpush1.msra.mxu0 %v3391
        %3636 = vmatprep.subr.mxu0 0.0
        %3637 = vmatpush1.msra.mxu0 %v3390
        %3638 = vmatprep.subr.mxu0 0.0
        %3639 = vmatpush1.msra.mxu0 %v3389
        %3640 = vmatprep.subr.mxu0 0.0
        %3641 = vmatpush1.msra.mxu0 %v3388
        %3642 = vmatprep.subr.mxu0 0.0
        %3643 = vmatpush1.msra.mxu0 %v3387
        %3644 = vmatprep.subr.mxu0 0.0
        %3645 = vmatpush1.msra.mxu0 %v3386
        %3646 = vmatprep.subr.mxu0 0.0
        %3647 = vmatpush1.msra.mxu0 %v3385
        %3648 = vmatprep.subr.mxu0 0.0
        %3649 = vmatpush1.msra.mxu0 %v3384
        %3650 = vmatprep.subr.mxu0 0.0
        %3651 = vmatpush1.msra.mxu0 %v3383
        %3652 = vmatprep.subr.mxu0 0.0
        %3653 = vmatpush1.msra.mxu0 %v3382
        %3654 = vmatprep.subr.mxu0 0.0
        %3655 = vmatpush1.msra.mxu0 %v3381
        %3656 = vmatprep.subr.mxu0 0.0
        %3657 = vmatpush1.msra.mxu0 %v3380
        %3658 = vmatprep.subr.mxu0 0.0
        %3659 = vmatpush2.msra.mxu0 %v3411
        %3660 = vmatprep.subr.mxu0 0.0
        %3661 = vmatpush2.msra.mxu0 %v3410
        %3662 = vmatprep.subr.mxu0 0.0
        %3663 = vmatpush2.msra.mxu0 %v3409
        %3664 = vmatprep.subr.mxu0 0.0
        %3665 = vmatpush2.msra.mxu0 %v3408
        %3666 = vmatprep.subr.mxu0 0.0
        %3667 = vmatpush2.msra.mxu0 %v3407
        %3668 = vmatprep.subr.mxu0 0.0
        %3669 = vmatpush2.msra.mxu0 %v3406
        %3670 = vmatprep.subr.mxu0 0.0
        %3671 = vmatpush2.msra.mxu0 %v3405
        %3672 = vmatprep.subr.mxu0 0.0
        %3673 = vmatpush2.msra.mxu0 %v3404
        %3674 = vmatprep.subr.mxu0 0.0
        %3675 = vmatpush2.msra.mxu0 %v3403
        %3676 = vmatprep.subr.mxu0 0.0
        %3677 = vmatpush2.msra.mxu0 %v3402
        %3678 = vmatprep.subr.mxu0 0.0
        %3679 = vmatpush2.msra.mxu0 %v3401
        %3680 = vmatprep.subr.mxu0 0.0
        %3681 = vmatpush2.msra.mxu0 %v3400
        %3682 = vmatprep.subr.mxu0 0.0
        %3683 = vmatpush2.msra.mxu0 %v3399
        %3684 = vmatprep.subr.mxu0 0.0
        %3685 = vmatpush2.msra.mxu0 %v3398
        %3686 = vmatprep.subr.mxu0 0.0
        %3687 = vmatpush2.msra.mxu0 %v3397
        %3688 = vmatprep.subr.mxu0 0.0
        %3689 = vmatpush2.msra.mxu0 %v3396
        %3690 = vmatprep.mubr.f32.mxu0 %v3223
        %3691 = vmatmul.mubr.f32.gmra.mxu0 %v3222
        %v3692 = vpop.f32.mrf.mxu0
        %v3693 = vadd.f32 %v3548, %v3692
        %v3694 = vpop.f32.mrf.mxu0
        %3695 = vmatprep.mubr.f32.mxu0 %v3231
        %3696 = vmatmul.mubr.f32.gmra.mxu0 %v3230
        %v3697 = vpop.f32.mrf.mxu0
        %v3698 = vadd.f32 %v3553, %v3697
        %v3699 = vpop.f32.mrf.mxu0
        %3700 = vmatprep.mubr.f32.mxu0 %v3239
        %3701 = vmatmul.mubr.f32.gmra.mxu0 %v3238
        %v3702 = vpop.f32.mrf.mxu0
        %v3703 = vadd.f32 %v3558, %v3702
        %v3704 = vpop.f32.mrf.mxu0
        %3705 = vmatprep.mubr.f32.mxu0 %v3247
        %3706 = vmatmul.mubr.f32.gmra.mxu0 %v3246
        %v3707 = vpop.f32.mrf.mxu0
        %v3708 = vadd.f32 %v3563, %v3707
        %v3709 = vpop.f32.mrf.mxu0
        %3710 = vmatprep.mubr.f32.mxu0 %v3255
        %3711 = vmatmul.mubr.f32.gmra.mxu0 %v3254
        %v3712 = vpop.f32.mrf.mxu0
        %v3713 = vadd.f32 %v3568, %v3712
        %v3714 = vpop.f32.mrf.mxu0
        %3715 = vmatprep.mubr.f32.mxu0 %v3263
        %3716 = vmatmul.mubr.f32.gmra.mxu0 %v3262
        %v3717 = vpop.f32.mrf.mxu0
        %v3718 = vadd.f32 %v3573, %v3717
        %v3719 = vpop.f32.mrf.mxu0
        %3720 = vmatprep.mubr.f32.mxu0 %v3271
        %3721 = vmatmul.mubr.f32.gmra.mxu0 %v3270
        %v3722 = vpop.f32.mrf.mxu0
        %v3723 = vadd.f32 %v3578, %v3722
        %v3724 = vpop.f32.mrf.mxu0
        %3725 = vmatprep.mubr.f32.mxu0 %v3279
        %3726 = vmatmul.mubr.f32.gmra.mxu0 %v3278
        %v3727 = vpop.f32.mrf.mxu0
        %v3728 = vadd.f32 %v3583, %v3727
        %v3729 = vpop.f32.mrf.mxu0
        %3730 = vmatprep.mubr.f32.mxu0 %v3287
        %3731 = vmatmul.mubr.f32.gmra.mxu0 %v3286
        %v3732 = vpop.f32.mrf.mxu0
        %v3733 = vadd.f32 %v3588, %v3732
        %v3734 = vpop.f32.mrf.mxu0
        %3735 = vmatprep.mubr.f32.mxu0 %v3295
        %3736 = vmatmul.mubr.f32.gmra.mxu0 %v3294
        %v3737 = vpop.f32.mrf.mxu0
        %v3738 = vadd.f32 %v3593, %v3737
        %v3739 = vpop.f32.mrf.mxu0
        %3740 = vmatprep.mubr.f32.mxu0 %v3303
        %3741 = vmatmul.mubr.f32.gmra.mxu0 %v3302
        %v3742 = vpop.f32.mrf.mxu0
        %v3743 = vadd.f32 %v3598, %v3742
        %v3744 = vpop.f32.mrf.mxu0
        %3745 = vmatprep.mubr.f32.mxu0 %v3311
        %3746 = vmatmul.mubr.f32.gmra.mxu0 %v3310
        %v3747 = vpop.f32.mrf.mxu0
        %v3748 = vadd.f32 %v3603, %v3747
        %v3749 = vpop.f32.mrf.mxu0
        %3750 = vmatprep.mubr.f32.mxu0 %v3319
        %3751 = vmatmul.mubr.f32.gmra.mxu0 %v3318
        %v3752 = vpop.f32.mrf.mxu0
        %v3753 = vadd.f32 %v3608, %v3752
        %v3754 = vpop.f32.mrf.mxu0
        %3755 = vmatprep.mubr.f32.mxu0 %v3327
        %3756 = vmatmul.mubr.f32.gmra.mxu0 %v3326
        %v3757 = vpop.f32.mrf.mxu0
        %v3758 = vadd.f32 %v3613, %v3757
        %v3759 = vpop.f32.mrf.mxu0
        %3760 = vmatprep.mubr.f32.mxu0 %v3335
        %3761 = vmatmul.mubr.f32.gmra.mxu0 %v3334
        %v3762 = vpop.f32.mrf.mxu0
        %v3763 = vadd.f32 %v3618, %v3762
        %v3764 = vpop.f32.mrf.mxu0
        %3765 = vmatprep.mubr.f32.mxu0 %v3343
        %3766 = vmatmul.mubr.f32.gmra.mxu0 %v3342
        %v3767 = vpop.f32.mrf.mxu0
        %v3768 = vadd.f32 %v3623, %v3767
        %v3769 = vpop.f32.mrf.mxu0
        %3770 = vdwg.mxu0
        %3771 = vmatprep.subr.mxu0 0.0
        %3772 = vmatpush1.msra.mxu0 %v3427
        %3773 = vmatprep.subr.mxu0 0.0
        %3774 = vmatpush1.msra.mxu0 %v3426
        %3775 = vmatprep.subr.mxu0 0.0
        %3776 = vmatpush1.msra.mxu0 %v3425
        %3777 = vmatprep.subr.mxu0 0.0
        %3778 = vmatpush1.msra.mxu0 %v3424
        %3779 = vmatprep.subr.mxu0 0.0
        %3780 = vmatpush1.msra.mxu0 %v3423
        %3781 = vmatprep.subr.mxu0 0.0
        %3782 = vmatpush1.msra.mxu0 %v3422
        %3783 = vmatprep.subr.mxu0 0.0
        %3784 = vmatpush1.msra.mxu0 %v3421
        %3785 = vmatprep.subr.mxu0 0.0
        %3786 = vmatpush1.msra.mxu0 %v3420
        %3787 = vmatprep.subr.mxu0 0.0
        %3788 = vmatpush1.msra.mxu0 %v3419
        %3789 = vmatprep.subr.mxu0 0.0
        %3790 = vmatpush1.msra.mxu0 %v3418
        %3791 = vmatprep.subr.mxu0 0.0
        %3792 = vmatpush1.msra.mxu0 %v3417
        %3793 = vmatprep.subr.mxu0 0.0
        %3794 = vmatpush1.msra.mxu0 %v3416
        %3795 = vmatprep.subr.mxu0 0.0
        %3796 = vmatpush1.msra.mxu0 %v3415
        %3797 = vmatprep.subr.mxu0 0.0
        %3798 = vmatpush1.msra.mxu0 %v3414
        %3799 = vmatprep.subr.mxu0 0.0
        %3800 = vmatpush1.msra.mxu0 %v3413
        %3801 = vmatprep.subr.mxu0 0.0
        %3802 = vmatpush1.msra.mxu0 %v3412
        %3803 = vmatprep.subr.mxu0 0.0
        %3804 = vmatpush2.msra.mxu0 %v3443
        %3805 = vmatprep.subr.mxu0 0.0
        %3806 = vmatpush2.msra.mxu0 %v3442
        %3807 = vmatprep.subr.mxu0 0.0
        %3808 = vmatpush2.msra.mxu0 %v3441
        %3809 = vmatprep.subr.mxu0 0.0
        %3810 = vmatpush2.msra.mxu0 %v3440
        %3811 = vmatprep.subr.mxu0 0.0
        %3812 = vmatpush2.msra.mxu0 %v3439
        %3813 = vmatprep.subr.mxu0 0.0
        %3814 = vmatpush2.msra.mxu0 %v3438
        %3815 = vmatprep.subr.mxu0 0.0
        %3816 = vmatpush2.msra.mxu0 %v3437
        %3817 = vmatprep.subr.mxu0 0.0
        %3818 = vmatpush2.msra.mxu0 %v3436
        %3819 = vmatprep.subr.mxu0 0.0
        %3820 = vmatpush2.msra.mxu0 %v3435
        %3821 = vmatprep.subr.mxu0 0.0
        %3822 = vmatpush2.msra.mxu0 %v3434
        %3823 = vmatprep.subr.mxu0 0.0
        %3824 = vmatpush2.msra.mxu0 %v3433
        %3825 = vmatprep.subr.mxu0 0.0
        %3826 = vmatpush2.msra.mxu0 %v3432
        %3827 = vmatprep.subr.mxu0 0.0
        %3828 = vmatpush2.msra.mxu0 %v3431
        %3829 = vmatprep.subr.mxu0 0.0
        %3830 = vmatpush2.msra.mxu0 %v3430
        %3831 = vmatprep.subr.mxu0 0.0
        %3832 = vmatpush2.msra.mxu0 %v3429
        %3833 = vmatprep.subr.mxu0 0.0
        %3834 = vmatpush2.msra.mxu0 %v3428
        %3835 = vmatprep.mubr.f32.mxu0 %v3225
        %3836 = vmatmul.mubr.f32.gmra.mxu0 %v3224
        %v3837 = vpop.f32.mrf.mxu0
        %v3838 = vadd.f32 %v3693, %v3837
        %v3839 = vpop.f32.mrf.mxu0
        %3840 = vmatprep.mubr.f32.mxu0 %v3233
        %3841 = vmatmul.mubr.f32.gmra.mxu0 %v3232
        %v3842 = vpop.f32.mrf.mxu0
        %v3843 = vadd.f32 %v3698, %v3842
        %v3844 = vpop.f32.mrf.mxu0
        %3845 = vmatprep.mubr.f32.mxu0 %v3241
        %3846 = vmatmul.mubr.f32.gmra.mxu0 %v3240
        %v3847 = vpop.f32.mrf.mxu0
        %v3848 = vadd.f32 %v3703, %v3847
        %v3849 = vpop.f32.mrf.mxu0
        %3850 = vmatprep.mubr.f32.mxu0 %v3249
        %3851 = vmatmul.mubr.f32.gmra.mxu0 %v3248
        %v3852 = vpop.f32.mrf.mxu0
        %v3853 = vadd.f32 %v3708, %v3852
        %v3854 = vpop.f32.mrf.mxu0
        %3855 = vmatprep.mubr.f32.mxu0 %v3257
        %3856 = vmatmul.mubr.f32.gmra.mxu0 %v3256
        %v3857 = vpop.f32.mrf.mxu0
        %v3858 = vadd.f32 %v3713, %v3857
        %v3859 = vpop.f32.mrf.mxu0
        %3860 = vmatprep.mubr.f32.mxu0 %v3265
        %3861 = vmatmul.mubr.f32.gmra.mxu0 %v3264
        %v3862 = vpop.f32.mrf.mxu0
        %v3863 = vadd.f32 %v3718, %v3862
        %v3864 = vpop.f32.mrf.mxu0
        %3865 = vmatprep.mubr.f32.mxu0 %v3273
        %3866 = vmatmul.mubr.f32.gmra.mxu0 %v3272
        %v3867 = vpop.f32.mrf.mxu0
        %v3868 = vadd.f32 %v3723, %v3867
        %v3869 = vpop.f32.mrf.mxu0
        %3870 = vmatprep.mubr.f32.mxu0 %v3281
        %3871 = vmatmul.mubr.f32.gmra.mxu0 %v3280
        %v3872 = vpop.f32.mrf.mxu0
        %v3873 = vadd.f32 %v3728, %v3872
        %v3874 = vpop.f32.mrf.mxu0
        %3875 = vmatprep.mubr.f32.mxu0 %v3289
        %3876 = vmatmul.mubr.f32.gmra.mxu0 %v3288
        %v3877 = vpop.f32.mrf.mxu0
        %v3878 = vadd.f32 %v3733, %v3877
        %v3879 = vpop.f32.mrf.mxu0
        %3880 = vmatprep.mubr.f32.mxu0 %v3297
        %3881 = vmatmul.mubr.f32.gmra.mxu0 %v3296
        %v3882 = vpop.f32.mrf.mxu0
        %v3883 = vadd.f32 %v3738, %v3882
        %v3884 = vpop.f32.mrf.mxu0
        %3885 = vmatprep.mubr.f32.mxu0 %v3305
        %3886 = vmatmul.mubr.f32.gmra.mxu0 %v3304
        %v3887 = vpop.f32.mrf.mxu0
        %v3888 = vadd.f32 %v3743, %v3887
        %v3889 = vpop.f32.mrf.mxu0
        %3890 = vmatprep.mubr.f32.mxu0 %v3313
        %3891 = vmatmul.mubr.f32.gmra.mxu0 %v3312
        %v3892 = vpop.f32.mrf.mxu0
        %v3893 = vadd.f32 %v3748, %v3892
        %v3894 = vpop.f32.mrf.mxu0
        %3895 = vmatprep.mubr.f32.mxu0 %v3321
        %3896 = vmatmul.mubr.f32.gmra.mxu0 %v3320
        %v3897 = vpop.f32.mrf.mxu0
        %v3898 = vadd.f32 %v3753, %v3897
        %v3899 = vpop.f32.mrf.mxu0
        %3900 = vmatprep.mubr.f32.mxu0 %v3329
        %3901 = vmatmul.mubr.f32.gmra.mxu0 %v3328
        %v3902 = vpop.f32.mrf.mxu0
        %v3903 = vadd.f32 %v3758, %v3902
        %v3904 = vpop.f32.mrf.mxu0
        %3905 = vmatprep.mubr.f32.mxu0 %v3337
        %3906 = vmatmul.mubr.f32.gmra.mxu0 %v3336
        %v3907 = vpop.f32.mrf.mxu0
        %v3908 = vadd.f32 %v3763, %v3907
        %v3909 = vpop.f32.mrf.mxu0
        %3910 = vmatprep.mubr.f32.mxu0 %v3345
        %3911 = vmatmul.mubr.f32.gmra.mxu0 %v3344
        %v3912 = vpop.f32.mrf.mxu0
        %v3913 = vadd.f32 %v3768, %v3912
        %v3914 = vpop.f32.mrf.mxu0
        %3915 = vdwg.mxu0
        %3916 = vmatprep.subr.mxu0 0.0
        %3917 = vmatpush1.msra.mxu0 %v3459
        %3918 = vmatprep.subr.mxu0 0.0
        %3919 = vmatpush1.msra.mxu0 %v3458
        %3920 = vmatprep.subr.mxu0 0.0
        %3921 = vmatpush1.msra.mxu0 %v3457
        %3922 = vmatprep.subr.mxu0 0.0
        %3923 = vmatpush1.msra.mxu0 %v3456
        %3924 = vmatprep.subr.mxu0 0.0
        %3925 = vmatpush1.msra.mxu0 %v3455
        %3926 = vmatprep.subr.mxu0 0.0
        %3927 = vmatpush1.msra.mxu0 %v3454
        %3928 = vmatprep.subr.mxu0 0.0
        %3929 = vmatpush1.msra.mxu0 %v3453
        %3930 = vmatprep.subr.mxu0 0.0
        %3931 = vmatpush1.msra.mxu0 %v3452
        %3932 = vmatprep.subr.mxu0 0.0
        %3933 = vmatpush1.msra.mxu0 %v3451
        %3934 = vmatprep.subr.mxu0 0.0
        %3935 = vmatpush1.msra.mxu0 %v3450
        %3936 = vmatprep.subr.mxu0 0.0
        %3937 = vmatpush1.msra.mxu0 %v3449
        %3938 = vmatprep.subr.mxu0 0.0
        %3939 = vmatpush1.msra.mxu0 %v3448
        %3940 = vmatprep.subr.mxu0 0.0
        %3941 = vmatpush1.msra.mxu0 %v3447
        %3942 = vmatprep.subr.mxu0 0.0
        %3943 = vmatpush1.msra.mxu0 %v3446
        %3944 = vmatprep.subr.mxu0 0.0
        %3945 = vmatpush1.msra.mxu0 %v3445
        %3946 = vmatprep.subr.mxu0 0.0
        %3947 = vmatpush1.msra.mxu0 %v3444
        %3948 = vmatprep.subr.mxu0 0.0
        %3949 = vmatpush2.msra.mxu0 %v3475
        %3950 = vmatprep.subr.mxu0 0.0
        %3951 = vmatpush2.msra.mxu0 %v3474
        %3952 = vmatprep.subr.mxu0 0.0
        %3953 = vmatpush2.msra.mxu0 %v3473
        %3954 = vmatprep.subr.mxu0 0.0
        %3955 = vmatpush2.msra.mxu0 %v3472
        %3956 = vmatprep.subr.mxu0 0.0
        %3957 = vmatpush2.msra.mxu0 %v3471
        %3958 = vmatprep.subr.mxu0 0.0
        %3959 = vmatpush2.msra.mxu0 %v3470
        %3960 = vmatprep.subr.mxu0 0.0
        %3961 = vmatpush2.msra.mxu0 %v3469
        %3962 = vmatprep.subr.mxu0 0.0
        %3963 = vmatpush2.msra.mxu0 %v3468
        %3964 = vmatprep.subr.mxu0 0.0
        %3965 = vmatpush2.msra.mxu0 %v3467
        %3966 = vmatprep.subr.mxu0 0.0
        %3967 = vmatpush2.msra.mxu0 %v3466
        %3968 = vmatprep.subr.mxu0 0.0
        %3969 = vmatpush2.msra.mxu0 %v3465
        %3970 = vmatprep.subr.mxu0 0.0
        %3971 = vmatpush2.msra.mxu0 %v3464
        %3972 = vmatprep.subr.mxu0 0.0
        %3973 = vmatpush2.msra.mxu0 %v3463
        %3974 = vmatprep.subr.mxu0 0.0
        %3975 = vmatpush2.msra.mxu0 %v3462
        %3976 = vmatprep.subr.mxu0 0.0
        %3977 = vmatpush2.msra.mxu0 %v3461
        %3978 = vmatprep.subr.mxu0 0.0
        %3979 = vmatpush2.msra.mxu0 %v3460
        %3980 = vmatprep.mubr.f32.mxu0 %v3227
        %3981 = vmatmul.mubr.f32.gmra.mxu0 %v3226
        %v3982 = vpop.f32.mrf.mxu0
        %v3983 = vadd.f32 %v3838, %v3982
        %v3984 = vpop.f32.mrf.mxu0
        %3985 = vmatprep.mubr.f32.mxu0 %v3235
        %3986 = vmatmul.mubr.f32.gmra.mxu0 %v3234
        %v3987 = vpop.f32.mrf.mxu0
        %v3988 = vadd.f32 %v3843, %v3987
        %v3989 = vpop.f32.mrf.mxu0
        %3990 = vmatprep.mubr.f32.mxu0 %v3243
        %3991 = vmatmul.mubr.f32.gmra.mxu0 %v3242
        %v3992 = vpop.f32.mrf.mxu0
        %v3993 = vadd.f32 %v3848, %v3992
        %v3994 = vpop.f32.mrf.mxu0
        %3995 = vmatprep.mubr.f32.mxu0 %v3251
        %3996 = vmatmul.mubr.f32.gmra.mxu0 %v3250
        %v3997 = vpop.f32.mrf.mxu0
        %v3998 = vadd.f32 %v3853, %v3997
        %v3999 = vpop.f32.mrf.mxu0
        %4000 = vmatprep.mubr.f32.mxu0 %v3259
        %4001 = vmatmul.mubr.f32.gmra.mxu0 %v3258
        %v4002 = vpop.f32.mrf.mxu0
        %v4003 = vadd.f32 %v3858, %v4002
        %v4004 = vpop.f32.mrf.mxu0
        %4005 = vmatprep.mubr.f32.mxu0 %v3267
        %4006 = vmatmul.mubr.f32.gmra.mxu0 %v3266
        %v4007 = vpop.f32.mrf.mxu0
        %v4008 = vadd.f32 %v3863, %v4007
        %v4009 = vpop.f32.mrf.mxu0
        %4010 = vmatprep.mubr.f32.mxu0 %v3275
        %4011 = vmatmul.mubr.f32.gmra.mxu0 %v3274
        %v4012 = vpop.f32.mrf.mxu0
        %v4013 = vadd.f32 %v3868, %v4012
        %v4014 = vpop.f32.mrf.mxu0
        %4015 = vmatprep.mubr.f32.mxu0 %v3283
        %4016 = vmatmul.mubr.f32.gmra.mxu0 %v3282
        %v4017 = vpop.f32.mrf.mxu0
        %v4018 = vadd.f32 %v3873, %v4017
        %v4019 = vpop.f32.mrf.mxu0
        %4020 = vmatprep.mubr.f32.mxu0 %v3291
        %4021 = vmatmul.mubr.f32.gmra.mxu0 %v3290
        %v4022 = vpop.f32.mrf.mxu0
        %v4023 = vadd.f32 %v3878, %v4022
        %v4024 = vpop.f32.mrf.mxu0
        %4025 = vmatprep.mubr.f32.mxu0 %v3299
        %4026 = vmatmul.mubr.f32.gmra.mxu0 %v3298
        %v4027 = vpop.f32.mrf.mxu0
        %v4028 = vadd.f32 %v3883, %v4027
        %v4029 = vpop.f32.mrf.mxu0
        %4030 = vmatprep.mubr.f32.mxu0 %v3307
        %4031 = vmatmul.mubr.f32.gmra.mxu0 %v3306
        %v4032 = vpop.f32.mrf.mxu0
        %v4033 = vadd.f32 %v3888, %v4032
        %v4034 = vpop.f32.mrf.mxu0
        %4035 = vmatprep.mubr.f32.mxu0 %v3315
        %4036 = vmatmul.mubr.f32.gmra.mxu0 %v3314
        %v4037 = vpop.f32.mrf.mxu0
        %v4038 = vadd.f32 %v3893, %v4037
        %v4039 = vpop.f32.mrf.mxu0
        %4040 = vmatprep.mubr.f32.mxu0 %v3323
        %4041 = vmatmul.mubr.f32.gmra.mxu0 %v3322
        %v4042 = vpop.f32.mrf.mxu0
        %v4043 = vadd.f32 %v3898, %v4042
        %v4044 = vpop.f32.mrf.mxu0
        %4045 = vmatprep.mubr.f32.mxu0 %v3331
        %4046 = vmatmul.mubr.f32.gmra.mxu0 %v3330
        %v4047 = vpop.f32.mrf.mxu0
        %v4048 = vadd.f32 %v3903, %v4047
        %v4049 = vpop.f32.mrf.mxu0
        %4050 = vmatprep.mubr.f32.mxu0 %v3339
        %4051 = vmatmul.mubr.f32.gmra.mxu0 %v3338
        %v4052 = vpop.f32.mrf.mxu0
        %v4053 = vadd.f32 %v3908, %v4052
        %v4054 = vpop.f32.mrf.mxu0
        %4055 = vmatprep.mubr.f32.mxu0 %v3347
        %4056 = vmatmul.mubr.f32.gmra.mxu0 %v3346
        %v4057 = vpop.f32.mrf.mxu0
        %v4058 = vadd.f32 %v3913, %v4057
        %v4059 = vpop.f32.mrf.mxu0
        %4060 = vdwg.mxu0
        %vm4061 = vcmask 261120
        %v4062 = vsel %vm4061, %v3983, -inf
        %4063 = vmax.xlane.f32.xlu0 %v4062
        %v4064 = vpop.xlane.xlu0 %4063
        %v4065 = vsel %vm4061, %v3988, -inf
        %4066 = vmax.xlane.f32.xlu0 %v4065
        %v4067 = vpop.xlane.xlu0 %4066
        %v4068 = vsel %vm4061, %v3993, -inf
        %4069 = vmax.xlane.f32.xlu0 %v4068
        %v4070 = vpop.xlane.xlu0 %4069
        %v4071 = vsel %vm4061, %v3998, -inf
        %4072 = vmax.xlane.f32.xlu0 %v4071
        %v4073 = vpop.xlane.xlu0 %4072
        %v4074 = vsel %vm4061, %v4003, -inf
        %4075 = vmax.xlane.f32.xlu0 %v4074
        %v4076 = vpop.xlane.xlu0 %4075
        %v4077 = vsel %vm4061, %v4008, -inf
        %4078 = vmax.xlane.f32.xlu0 %v4077
        %v4079 = vpop.xlane.xlu0 %4078
        %v4080 = vsel %vm4061, %v4013, -inf
        %4081 = vmax.xlane.f32.xlu0 %v4080
        %v4082 = vpop.xlane.xlu0 %4081
        %v4083 = vsel %vm4061, %v4018, -inf
        %4084 = vmax.xlane.f32.xlu0 %v4083
        %v4085 = vpop.xlane.xlu0 %4084
        %v4086 = vsel %vm4061, %v4023, -inf
        %4087 = vmax.xlane.f32.xlu0 %v4086
        %v4088 = vpop.xlane.xlu0 %4087
        %v4089 = vsel %vm4061, %v4028, -inf
        %4090 = vmax.xlane.f32.xlu0 %v4089
        %v4091 = vpop.xlane.xlu0 %4090
        %v4092 = vsel %vm4061, %v4033, -inf
        %4093 = vmax.xlane.f32.xlu0 %v4092
        %v4094 = vpop.xlane.xlu0 %4093
        %v4095 = vsel %vm4061, %v4038, -inf
        %4096 = vmax.xlane.f32.xlu0 %v4095
        %v4097 = vpop.xlane.xlu0 %4096
        %v4098 = vsel %vm4061, %v4043, -inf
        %4099 = vmax.xlane.f32.xlu0 %v4098
        %v4100 = vpop.xlane.xlu0 %4099
        %v4101 = vsel %vm4061, %v4048, -inf
        %4102 = vmax.xlane.f32.xlu0 %v4101
        %v4103 = vpop.xlane.xlu0 %4102
        %v4104 = vsel %vm4061, %v4053, -inf
        %4105 = vmax.xlane.f32.xlu0 %v4104
        %v4106 = vpop.xlane.xlu0 %4105
        %v4107 = vsel %vm4061, %v4058, -inf
        %4108 = vmax.xlane.f32.xlu0 %v4107
        %v4109 = vpop.xlane.xlu0 %4108
        %v4110 = vsub.f32 %v3983, %v4064
        %v4111 = vsub.f32 %v3988, %v4067
        %v4112 = vsub.f32 %v3993, %v4070
        %v4113 = vsub.f32 %v3998, %v4073
        %v4114 = vsub.f32 %v4003, %v4076
        %v4115 = vsub.f32 %v4008, %v4079
        %v4116 = vsub.f32 %v4013, %v4082
        %v4117 = vsub.f32 %v4018, %v4085
        %v4118 = vsub.f32 %v4023, %v4088
        %v4119 = vsub.f32 %v4028, %v4091
        %v4120 = vsub.f32 %v4033, %v4094
        %v4121 = vsub.f32 %v4038, %v4097
        %v4122 = vsub.f32 %v4043, %v4100
        %v4123 = vsub.f32 %v4048, %v4103
        %v4124 = vsub.f32 %v4053, %v4106
        %v4125 = vsub.f32 %v4058, %v4109
        %v4126 = vmul.f32 %v4110, 1.442695
        %v4127 = vpow.pop %v4126
        %v4128 = vmul.f32 %v4111, 1.442695
        %v4129 = vpow.pop %v4128
        %v4130 = vmul.f32 %v4112, 1.442695
        %v4131 = vpow.pop %v4130
        %v4132 = vmul.f32 %v4113, 1.442695
        %v4133 = vpow.pop %v4132
        %v4134 = vmul.f32 %v4114, 1.442695
        %v4135 = vpow.pop %v4134
        %v4136 = vmul.f32 %v4115, 1.442695
        %v4137 = vpow.pop %v4136
        %v4138 = vmul.f32 %v4116, 1.442695
        %v4139 = vpow.pop %v4138
        %v4140 = vmul.f32 %v4117, 1.442695
        %v4141 = vpow.pop %v4140
        %v4142 = vmul.f32 %v4118, 1.442695
        %v4143 = vpow.pop %v4142
        %v4144 = vmul.f32 %v4119, 1.442695
        %v4145 = vpow.pop %v4144
        %v4146 = vmul.f32 %v4120, 1.442695
        %v4147 = vpow.pop %v4146
        %v4148 = vmul.f32 %v4121, 1.442695
        %v4149 = vpow.pop %v4148
        %v4150 = vmul.f32 %v4122, 1.442695
        %v4151 = vpow.pop %v4150
        %v4152 = vmul.f32 %v4123, 1.442695
        %v4153 = vpow.pop %v4152
        %v4154 = vmul.f32 %v4124, 1.442695
        %v4155 = vpow.pop %v4154
        %v4156 = vmul.f32 %v4125, 1.442695
        %v4157 = vpow.pop %v4156
        %v4158 = vsel %vm4061, %v4127, 0.0
        %4159 = vadd.xlane.f32.xlu0 %v4158
        %v4160 = vpop.xlane.xlu0 %4159
        %v4161 = vsel %vm4061, %v4129, 0.0
        %4162 = vadd.xlane.f32.xlu0 %v4161
        %v4163 = vpop.xlane.xlu0 %4162
        %v4164 = vsel %vm4061, %v4131, 0.0
        %4165 = vadd.xlane.f32.xlu0 %v4164
        %v4166 = vpop.xlane.xlu0 %4165
        %v4167 = vsel %vm4061, %v4133, 0.0
        %4168 = vadd.xlane.f32.xlu0 %v4167
        %v4169 = vpop.xlane.xlu0 %4168
        %v4170 = vsel %vm4061, %v4135, 0.0
        %4171 = vadd.xlane.f32.xlu0 %v4170
        %v4172 = vpop.xlane.xlu0 %4171
        %v4173 = vsel %vm4061, %v4137, 0.0
        %4174 = vadd.xlane.f32.xlu0 %v4173
        %v4175 = vpop.xlane.xlu0 %4174
        %v4176 = vsel %vm4061, %v4139, 0.0
        %4177 = vadd.xlane.f32.xlu0 %v4176
        %v4178 = vpop.xlane.xlu0 %4177
        %v4179 = vsel %vm4061, %v4141, 0.0
        %4180 = vadd.xlane.f32.xlu0 %v4179
        %v4181 = vpop.xlane.xlu0 %4180
        %v4182 = vsel %vm4061, %v4143, 0.0
        %4183 = vadd.xlane.f32.xlu0 %v4182
        %v4184 = vpop.xlane.xlu0 %4183
        %v4185 = vsel %vm4061, %v4145, 0.0
        %4186 = vadd.xlane.f32.xlu0 %v4185
        %v4187 = vpop.xlane.xlu0 %4186
        %v4188 = vsel %vm4061, %v4147, 0.0
        %4189 = vadd.xlane.f32.xlu0 %v4188
        %v4190 = vpop.xlane.xlu0 %4189
        %v4191 = vsel %vm4061, %v4149, 0.0
        %4192 = vadd.xlane.f32.xlu0 %v4191
        %v4193 = vpop.xlane.xlu0 %4192
        %v4194 = vsel %vm4061, %v4151, 0.0
        %4195 = vadd.xlane.f32.xlu0 %v4194
        %v4196 = vpop.xlane.xlu0 %4195
        %v4197 = vsel %vm4061, %v4153, 0.0
        %4198 = vadd.xlane.f32.xlu0 %v4197
        %v4199 = vpop.xlane.xlu0 %4198
        %v4200 = vsel %vm4061, %v4155, 0.0
        %4201 = vadd.xlane.f32.xlu0 %v4200
        %v4202 = vpop.xlane.xlu0 %4201
        %v4203 = vsel %vm4061, %v4157, 0.0
        %4204 = vadd.xlane.f32.xlu0 %v4203
        %v4205 = vpop.xlane.xlu0 %4204
        %v4206 = vrcp.pop %v4160
        %v4207 = vrcp.pop %v4163
        %v4208 = vrcp.pop %v4166
        %v4209 = vrcp.pop %v4169
        %v4210 = vrcp.pop %v4172
        %v4211 = vrcp.pop %v4175
        %v4212 = vrcp.pop %v4178
        %v4213 = vrcp.pop %v4181
        %v4214 = vrcp.pop %v4184
        %v4215 = vrcp.pop %v4187
        %v4216 = vrcp.pop %v4190
        %v4217 = vrcp.pop %v4193
        %v4218 = vrcp.pop %v4196
        %v4219 = vrcp.pop %v4199
        %v4220 = vrcp.pop %v4202
        %v4221 = vrcp.pop %v4205
        %v4222 = vmul.f32 %v4127, %v4206
        %v4223 = vmul.f32 %v4129, %v4207
        %v4224 = vmul.f32 %v4131, %v4208
        %v4225 = vmul.f32 %v4133, %v4209
        %v4226 = vmul.f32 %v4135, %v4210
        %v4227 = vmul.f32 %v4137, %v4211
        %v4228 = vmul.f32 %v4139, %v4212
        %v4229 = vmul.f32 %v4141, %v4213
        %v4230 = vmul.f32 %v4143, %v4214
        %v4231 = vmul.f32 %v4145, %v4215
        %v4232 = vmul.f32 %v4147, %v4216
        %v4233 = vmul.f32 %v4149, %v4217
        %v4234 = vmul.f32 %v4151, %v4218
        %v4235 = vmul.f32 %v4153, %v4219
        %v4236 = vmul.f32 %v4155, %v4220
        %v4237 = vmul.f32 %v4157, %v4221
        %v4238 = vld [vmem:[%s6] sm:$0xff]
        %v4239 = vld [vmem:[%s6 + $0x8] sm:$0xff]
        %v4240 = vld [vmem:[%s6 + $0x10] sm:$0xff]
        %v4241 = vld [vmem:[%s6 + $0x18] sm:$0xff]
        %v4242 = vld [vmem:[%s6 + $0x20] sm:$0xff]
        %v4243 = vld [vmem:[%s6 + $0x28] sm:$0xff]
        %v4244 = vld [vmem:[%s6 + $0x30] sm:$0xff]
        %v4245 = vld [vmem:[%s6 + $0x38] sm:$0xff]
        %v4246 = vld [vmem:[%s6 + $0x40] sm:$0xff]
        %v4247 = vld [vmem:[%s6 + $0x48] sm:$0xff]
        %v4248 = vld [vmem:[%s6 + $0x50] sm:$0xff]
        %v4249 = vld [vmem:[%s6 + $0x58] sm:$0xff]
        %v4250 = vld [vmem:[%s6 + $0x60] sm:$0xff]
        %v4251 = vld [vmem:[%s6 + $0x68] sm:$0xff]
        %v4252 = vld [vmem:[%s6 + $0x70] sm:$0xff]
        %v4253 = vld [vmem:[%s6 + $0x78] sm:$0xff]
        %v4254 = vld [vmem:[%s6 + $0x80] sm:$0xff]
        %v4255 = vld [vmem:[%s6 + $0x88] sm:$0xff]
        %v4256 = vld [vmem:[%s6 + $0x90] sm:$0xff]
        %v4257 = vld [vmem:[%s6 + $0x98] sm:$0xff]
        %v4258 = vld [vmem:[%s6 + $0xa0] sm:$0xff]
        %v4259 = vld [vmem:[%s6 + $0xa8] sm:$0xff]
        %v4260 = vld [vmem:[%s6 + $0xb0] sm:$0xff]
        %v4261 = vld [vmem:[%s6 + $0xb8] sm:$0xff]
        %v4262 = vld [vmem:[%s6 + $0xc0] sm:$0xff]
        %v4263 = vld [vmem:[%s6 + $0xc8] sm:$0xff]
        %v4264 = vld [vmem:[%s6 + $0xd0] sm:$0xff]
        %v4265 = vld [vmem:[%s6 + $0xd8] sm:$0xff]
        %v4266 = vld [vmem:[%s6 + $0xe0] sm:$0xff]
        %v4267 = vld [vmem:[%s6 + $0xe8] sm:$0xff]
        %v4268 = vld [vmem:[%s6 + $0xf0] sm:$0xff]
        %v4269 = vld [vmem:[%s6 + $0xf8] sm:$0xff]
        %v4270 = vld [vmem:[%s6 + $0x100] sm:$0xff]
        %v4271 = vld [vmem:[%s6 + $0x108] sm:$0xff]
        %v4272 = vld [vmem:[%s6 + $0x110] sm:$0xff]
        %v4273 = vld [vmem:[%s6 + $0x118] sm:$0xff]
        %v4274 = vld [vmem:[%s6 + $0x120] sm:$0xff]
        %v4275 = vld [vmem:[%s6 + $0x128] sm:$0xff]
        %v4276 = vld [vmem:[%s6 + $0x130] sm:$0xff]
        %v4277 = vld [vmem:[%s6 + $0x138] sm:$0xff]
        %v4278 = vld [vmem:[%s6 + $0x140] sm:$0xff]
        %v4279 = vld [vmem:[%s6 + $0x148] sm:$0xff]
        %v4280 = vld [vmem:[%s6 + $0x150] sm:$0xff]
        %v4281 = vld [vmem:[%s6 + $0x158] sm:$0xff]
        %v4282 = vld [vmem:[%s6 + $0x160] sm:$0xff]
        %v4283 = vld [vmem:[%s6 + $0x168] sm:$0xff]
        %v4284 = vld [vmem:[%s6 + $0x170] sm:$0xff]
        %v4285 = vld [vmem:[%s6 + $0x178] sm:$0xff]
        %v4286 = vld [vmem:[%s6 + $0x180] sm:$0xff]
        %v4287 = vld [vmem:[%s6 + $0x188] sm:$0xff]
        %v4288 = vld [vmem:[%s6 + $0x190] sm:$0xff]
        %v4289 = vld [vmem:[%s6 + $0x198] sm:$0xff]
        %v4290 = vld [vmem:[%s6 + $0x1a0] sm:$0xff]
        %v4291 = vld [vmem:[%s6 + $0x1a8] sm:$0xff]
        %v4292 = vld [vmem:[%s6 + $0x1b0] sm:$0xff]
        %v4293 = vld [vmem:[%s6 + $0x1b8] sm:$0xff]
        %v4294 = vld [vmem:[%s6 + $0x1c0] sm:$0xff]
        %v4295 = vld [vmem:[%s6 + $0x1c8] sm:$0xff]
        %v4296 = vld [vmem:[%s6 + $0x1d0] sm:$0xff]
        %v4297 = vld [vmem:[%s6 + $0x1d8] sm:$0xff]
        %v4298 = vld [vmem:[%s6 + $0x1e0] sm:$0xff]
        %v4299 = vld [vmem:[%s6 + $0x1e8] sm:$0xff]
        %v4300 = vld [vmem:[%s6 + $0x1f0] sm:$0xff]
        %v4301 = vld [vmem:[%s6 + $0x1f8] sm:$0xff]
        %4302 = vmatprep.subr.mxu0 0.0
        %4303 = vmatpush1.msra.mxu0 %v4253
        %4304 = vmatprep.subr.mxu0 0.0
        %4305 = vmatpush1.msra.mxu0 %v4252
        %4306 = vmatprep.subr.mxu0 0.0
        %4307 = vmatpush1.msra.mxu0 %v4251
        %4308 = vmatprep.subr.mxu0 0.0
        %4309 = vmatpush1.msra.mxu0 %v4250
        %4310 = vmatprep.subr.mxu0 0.0
        %4311 = vmatpush1.msra.mxu0 %v4249
        %4312 = vmatprep.subr.mxu0 0.0
        %4313 = vmatpush1.msra.mxu0 %v4248
        %4314 = vmatprep.subr.mxu0 0.0
        %4315 = vmatpush1.msra.mxu0 %v4247
        %4316 = vmatprep.subr.mxu0 0.0
        %4317 = vmatpush1.msra.mxu0 %v4246
        %4318 = vmatprep.subr.mxu0 0.0
        %4319 = vmatpush1.msra.mxu0 %v4245
        %4320 = vmatprep.subr.mxu0 0.0
        %4321 = vmatpush1.msra.mxu0 %v4244
        %4322 = vmatprep.subr.mxu0 0.0
        %4323 = vmatpush1.msra.mxu0 %v4243
        %4324 = vmatprep.subr.mxu0 0.0
        %4325 = vmatpush1.msra.mxu0 %v4242
        %4326 = vmatprep.subr.mxu0 0.0
        %4327 = vmatpush1.msra.mxu0 %v4241
        %4328 = vmatprep.subr.mxu0 0.0
        %4329 = vmatpush1.msra.mxu0 %v4240
        %4330 = vmatprep.subr.mxu0 0.0
        %4331 = vmatpush1.msra.mxu0 %v4239
        %4332 = vmatprep.subr.mxu0 0.0
        %4333 = vmatpush1.msra.mxu0 %v4238
        %4334 = vmatprep.subr.mxu0 0.0
        %4335 = vmatpush2.msra.mxu0 %v4269
        %4336 = vmatprep.subr.mxu0 0.0
        %4337 = vmatpush2.msra.mxu0 %v4268
        %4338 = vmatprep.subr.mxu0 0.0
        %4339 = vmatpush2.msra.mxu0 %v4267
        %4340 = vmatprep.subr.mxu0 0.0
        %4341 = vmatpush2.msra.mxu0 %v4266
        %4342 = vmatprep.subr.mxu0 0.0
        %4343 = vmatpush2.msra.mxu0 %v4265
        %4344 = vmatprep.subr.mxu0 0.0
        %4345 = vmatpush2.msra.mxu0 %v4264
        %4346 = vmatprep.subr.mxu0 0.0
        %4347 = vmatpush2.msra.mxu0 %v4263
        %4348 = vmatprep.subr.mxu0 0.0
        %4349 = vmatpush2.msra.mxu0 %v4262
        %4350 = vmatprep.subr.mxu0 0.0
        %4351 = vmatpush2.msra.mxu0 %v4261
        %4352 = vmatprep.subr.mxu0 0.0
        %4353 = vmatpush2.msra.mxu0 %v4260
        %4354 = vmatprep.subr.mxu0 0.0
        %4355 = vmatpush2.msra.mxu0 %v4259
        %4356 = vmatprep.subr.mxu0 0.0
        %4357 = vmatpush2.msra.mxu0 %v4258
        %4358 = vmatprep.subr.mxu0 0.0
        %4359 = vmatpush2.msra.mxu0 %v4257
        %4360 = vmatprep.subr.mxu0 0.0
        %4361 = vmatpush2.msra.mxu0 %v4256
        %4362 = vmatprep.subr.mxu0 0.0
        %4363 = vmatpush2.msra.mxu0 %v4255
        %4364 = vmatprep.subr.mxu0 0.0
        %4365 = vmatpush2.msra.mxu0 %v4254
        %4366 = vmatprep.mubr.f32.mxu0 %v1315
        %4367 = vmatmul.mubr.f32.gmra.mxu0 %v1314
        %v4368 = vpop.f32.mrf.mxu0
        %v4369 = vadd.f32 0.0, %v4368
        %v4370 = vpop.f32.mrf.mxu0
        %4371 = vmatprep.mubr.f32.mxu0 %v1319
        %4372 = vmatmul.mubr.f32.gmra.mxu0 %v1318
        %v4373 = vpop.f32.mrf.mxu0
        %v4374 = vadd.f32 0.0, %v4373
        %v4375 = vpop.f32.mrf.mxu0
        %4376 = vmatprep.mubr.f32.mxu0 %v1323
        %4377 = vmatmul.mubr.f32.gmra.mxu0 %v1322
        %v4378 = vpop.f32.mrf.mxu0
        %v4379 = vadd.f32 0.0, %v4378
        %v4380 = vpop.f32.mrf.mxu0
        %4381 = vmatprep.mubr.f32.mxu0 %v1327
        %4382 = vmatmul.mubr.f32.gmra.mxu0 %v1326
        %v4383 = vpop.f32.mrf.mxu0
        %v4384 = vadd.f32 0.0, %v4383
        %v4385 = vpop.f32.mrf.mxu0
        %4386 = vmatprep.mubr.f32.mxu0 %v1331
        %4387 = vmatmul.mubr.f32.gmra.mxu0 %v1330
        %v4388 = vpop.f32.mrf.mxu0
        %v4389 = vadd.f32 0.0, %v4388
        %v4390 = vpop.f32.mrf.mxu0
        %4391 = vmatprep.mubr.f32.mxu0 %v1335
        %4392 = vmatmul.mubr.f32.gmra.mxu0 %v1334
        %v4393 = vpop.f32.mrf.mxu0
        %v4394 = vadd.f32 0.0, %v4393
        %v4395 = vpop.f32.mrf.mxu0
        %4396 = vmatprep.mubr.f32.mxu0 %v1339
        %4397 = vmatmul.mubr.f32.gmra.mxu0 %v1338
        %v4398 = vpop.f32.mrf.mxu0
        %v4399 = vadd.f32 0.0, %v4398
        %v4400 = vpop.f32.mrf.mxu0
        %4401 = vmatprep.mubr.f32.mxu0 %v1343
        %4402 = vmatmul.mubr.f32.gmra.mxu0 %v1342
        %v4403 = vpop.f32.mrf.mxu0
        %v4404 = vadd.f32 0.0, %v4403
        %v4405 = vpop.f32.mrf.mxu0
        %4406 = vmatprep.mubr.f32.mxu0 %v1347
        %4407 = vmatmul.mubr.f32.gmra.mxu0 %v1346
        %v4408 = vpop.f32.mrf.mxu0
        %v4409 = vadd.f32 0.0, %v4408
        %v4410 = vpop.f32.mrf.mxu0
        %4411 = vmatprep.mubr.f32.mxu0 %v1351
        %4412 = vmatmul.mubr.f32.gmra.mxu0 %v1350
        %v4413 = vpop.f32.mrf.mxu0
        %v4414 = vadd.f32 0.0, %v4413
        %v4415 = vpop.f32.mrf.mxu0
        %4416 = vmatprep.mubr.f32.mxu0 %v1355
        %4417 = vmatmul.mubr.f32.gmra.mxu0 %v1354
        %v4418 = vpop.f32.mrf.mxu0
        %v4419 = vadd.f32 0.0, %v4418
        %v4420 = vpop.f32.mrf.mxu0
        %4421 = vmatprep.mubr.f32.mxu0 %v1359
        %4422 = vmatmul.mubr.f32.gmra.mxu0 %v1358
        %v4423 = vpop.f32.mrf.mxu0
        %v4424 = vadd.f32 0.0, %v4423
        %v4425 = vpop.f32.mrf.mxu0
        %4426 = vmatprep.mubr.f32.mxu0 %v1363
        %4427 = vmatmul.mubr.f32.gmra.mxu0 %v1362
        %v4428 = vpop.f32.mrf.mxu0
        %v4429 = vadd.f32 0.0, %v4428
        %v4430 = vpop.f32.mrf.mxu0
        %4431 = vmatprep.mubr.f32.mxu0 %v1367
        %4432 = vmatmul.mubr.f32.gmra.mxu0 %v1366
        %v4433 = vpop.f32.mrf.mxu0
        %v4434 = vadd.f32 0.0, %v4433
        %v4435 = vpop.f32.mrf.mxu0
        %4436 = vmatprep.mubr.f32.mxu0 %v1371
        %4437 = vmatmul.mubr.f32.gmra.mxu0 %v1370
        %v4438 = vpop.f32.mrf.mxu0
        %v4439 = vadd.f32 0.0, %v4438
        %v4440 = vpop.f32.mrf.mxu0
        %4441 = vmatprep.mubr.f32.mxu0 %v1375
        %4442 = vmatmul.mubr.f32.gmra.mxu0 %v1374
        %v4443 = vpop.f32.mrf.mxu0
        %v4444 = vadd.f32 0.0, %v4443
        %v4445 = vpop.f32.mrf.mxu0
        %4446 = vdwg.mxu0
        %4447 = vmatprep.subr.mxu0 0.0
        %4448 = vmatpush1.msra.mxu0 %v4285
        %4449 = vmatprep.subr.mxu0 0.0
        %4450 = vmatpush1.msra.mxu0 %v4284
        %4451 = vmatprep.subr.mxu0 0.0
        %4452 = vmatpush1.msra.mxu0 %v4283
        %4453 = vmatprep.subr.mxu0 0.0
        %4454 = vmatpush1.msra.mxu0 %v4282
        %4455 = vmatprep.subr.mxu0 0.0
        %4456 = vmatpush1.msra.mxu0 %v4281
        %4457 = vmatprep.subr.mxu0 0.0
        %4458 = vmatpush1.msra.mxu0 %v4280
        %4459 = vmatprep.subr.mxu0 0.0
        %4460 = vmatpush1.msra.mxu0 %v4279
        %4461 = vmatprep.subr.mxu0 0.0
        %4462 = vmatpush1.msra.mxu0 %v4278
        %4463 = vmatprep.subr.mxu0 0.0
        %4464 = vmatpush1.msra.mxu0 %v4277
        %4465 = vmatprep.subr.mxu0 0.0
        %4466 = vmatpush1.msra.mxu0 %v4276
        %4467 = vmatprep.subr.mxu0 0.0
        %4468 = vmatpush1.msra.mxu0 %v4275
        %4469 = vmatprep.subr.mxu0 0.0
        %4470 = vmatpush1.msra.mxu0 %v4274
        %4471 = vmatprep.subr.mxu0 0.0
        %4472 = vmatpush1.msra.mxu0 %v4273
        %4473 = vmatprep.subr.mxu0 0.0
        %4474 = vmatpush1.msra.mxu0 %v4272
        %4475 = vmatprep.subr.mxu0 0.0
        %4476 = vmatpush1.msra.mxu0 %v4271
        %4477 = vmatprep.subr.mxu0 0.0
        %4478 = vmatpush1.msra.mxu0 %v4270
        %4479 = vmatprep.subr.mxu0 0.0
        %4480 = vmatpush2.msra.mxu0 %v4301
        %4481 = vmatprep.subr.mxu0 0.0
        %4482 = vmatpush2.msra.mxu0 %v4300
        %4483 = vmatprep.subr.mxu0 0.0
        %4484 = vmatpush2.msra.mxu0 %v4299
        %4485 = vmatprep.subr.mxu0 0.0
        %4486 = vmatpush2.msra.mxu0 %v4298
        %4487 = vmatprep.subr.mxu0 0.0
        %4488 = vmatpush2.msra.mxu0 %v4297
        %4489 = vmatprep.subr.mxu0 0.0
        %4490 = vmatpush2.msra.mxu0 %v4296
        %4491 = vmatprep.subr.mxu0 0.0
        %4492 = vmatpush2.msra.mxu0 %v4295
        %4493 = vmatprep.subr.mxu0 0.0
        %4494 = vmatpush2.msra.mxu0 %v4294
        %4495 = vmatprep.subr.mxu0 0.0
        %4496 = vmatpush2.msra.mxu0 %v4293
        %4497 = vmatprep.subr.mxu0 0.0
        %4498 = vmatpush2.msra.mxu0 %v4292
        %4499 = vmatprep.subr.mxu0 0.0
        %4500 = vmatpush2.msra.mxu0 %v4291
        %4501 = vmatprep.subr.mxu0 0.0
        %4502 = vmatpush2.msra.mxu0 %v4290
        %4503 = vmatprep.subr.mxu0 0.0
        %4504 = vmatpush2.msra.mxu0 %v4289
        %4505 = vmatprep.subr.mxu0 0.0
        %4506 = vmatpush2.msra.mxu0 %v4288
        %4507 = vmatprep.subr.mxu0 0.0
        %4508 = vmatpush2.msra.mxu0 %v4287
        %4509 = vmatprep.subr.mxu0 0.0
        %4510 = vmatpush2.msra.mxu0 %v4286
        %4511 = vmatprep.mubr.f32.mxu0 %v1317
        %4512 = vmatmul.mubr.f32.gmra.mxu0 %v1316
        %v4513 = vpop.f32.mrf.mxu0
        %v4514 = vadd.f32 %v4369, %v4513
        %v4515 = vpop.f32.mrf.mxu0
        %4516 = vmatprep.mubr.f32.mxu0 %v1321
        %4517 = vmatmul.mubr.f32.gmra.mxu0 %v1320
        %v4518 = vpop.f32.mrf.mxu0
        %v4519 = vadd.f32 %v4374, %v4518
        %v4520 = vpop.f32.mrf.mxu0
        %4521 = vmatprep.mubr.f32.mxu0 %v1325
        %4522 = vmatmul.mubr.f32.gmra.mxu0 %v1324
        %v4523 = vpop.f32.mrf.mxu0
        %v4524 = vadd.f32 %v4379, %v4523
        %v4525 = vpop.f32.mrf.mxu0
        %4526 = vmatprep.mubr.f32.mxu0 %v1329
        %4527 = vmatmul.mubr.f32.gmra.mxu0 %v1328
        %v4528 = vpop.f32.mrf.mxu0
        %v4529 = vadd.f32 %v4384, %v4528
        %v4530 = vpop.f32.mrf.mxu0
        %4531 = vmatprep.mubr.f32.mxu0 %v1333
        %4532 = vmatmul.mubr.f32.gmra.mxu0 %v1332
        %v4533 = vpop.f32.mrf.mxu0
        %v4534 = vadd.f32 %v4389, %v4533
        %v4535 = vpop.f32.mrf.mxu0
        %4536 = vmatprep.mubr.f32.mxu0 %v1337
        %4537 = vmatmul.mubr.f32.gmra.mxu0 %v1336
        %v4538 = vpop.f32.mrf.mxu0
        %v4539 = vadd.f32 %v4394, %v4538
        %v4540 = vpop.f32.mrf.mxu0
        %4541 = vmatprep.mubr.f32.mxu0 %v1341
        %4542 = vmatmul.mubr.f32.gmra.mxu0 %v1340
        %v4543 = vpop.f32.mrf.mxu0
        %v4544 = vadd.f32 %v4399, %v4543
        %v4545 = vpop.f32.mrf.mxu0
        %4546 = vmatprep.mubr.f32.mxu0 %v1345
        %4547 = vmatmul.mubr.f32.gmra.mxu0 %v1344
        %v4548 = vpop.f32.mrf.mxu0
        %v4549 = vadd.f32 %v4404, %v4548
        %v4550 = vpop.f32.mrf.mxu0
        %4551 = vmatprep.mubr.f32.mxu0 %v1349
        %4552 = vmatmul.mubr.f32.gmra.mxu0 %v1348
        %v4553 = vpop.f32.mrf.mxu0
        %v4554 = vadd.f32 %v4409, %v4553
        %v4555 = vpop.f32.mrf.mxu0
        %4556 = vmatprep.mubr.f32.mxu0 %v1353
        %4557 = vmatmul.mubr.f32.gmra.mxu0 %v1352
        %v4558 = vpop.f32.mrf.mxu0
        %v4559 = vadd.f32 %v4414, %v4558
        %v4560 = vpop.f32.mrf.mxu0
        %4561 = vmatprep.mubr.f32.mxu0 %v1357
        %4562 = vmatmul.mubr.f32.gmra.mxu0 %v1356
        %v4563 = vpop.f32.mrf.mxu0
        %v4564 = vadd.f32 %v4419, %v4563
        %v4565 = vpop.f32.mrf.mxu0
        %4566 = vmatprep.mubr.f32.mxu0 %v1361
        %4567 = vmatmul.mubr.f32.gmra.mxu0 %v1360
        %v4568 = vpop.f32.mrf.mxu0
        %v4569 = vadd.f32 %v4424, %v4568
        %v4570 = vpop.f32.mrf.mxu0
        %4571 = vmatprep.mubr.f32.mxu0 %v1365
        %4572 = vmatmul.mubr.f32.gmra.mxu0 %v1364
        %v4573 = vpop.f32.mrf.mxu0
        %v4574 = vadd.f32 %v4429, %v4573
        %v4575 = vpop.f32.mrf.mxu0
        %4576 = vmatprep.mubr.f32.mxu0 %v1369
        %4577 = vmatmul.mubr.f32.gmra.mxu0 %v1368
        %v4578 = vpop.f32.mrf.mxu0
        %v4579 = vadd.f32 %v4434, %v4578
        %v4580 = vpop.f32.mrf.mxu0
        %4581 = vmatprep.mubr.f32.mxu0 %v1373
        %4582 = vmatmul.mubr.f32.gmra.mxu0 %v1372
        %v4583 = vpop.f32.mrf.mxu0
        %v4584 = vadd.f32 %v4439, %v4583
        %v4585 = vpop.f32.mrf.mxu0
        %4586 = vmatprep.mubr.f32.mxu0 %v1377
        %4587 = vmatmul.mubr.f32.gmra.mxu0 %v1376
        %v4588 = vpop.f32.mrf.mxu0
        %v4589 = vadd.f32 %v4444, %v4588
        %v4590 = vpop.f32.mrf.mxu0
        %4591 = vdwg.mxu0
        %v4592 = vmul.f32 %v4222, %v4514
        %v4593 = vmul.f32 %v4223, %v4519
        %v4594 = vmul.f32 %v4224, %v4524
        %v4595 = vmul.f32 %v4225, %v4529
        %v4596 = vmul.f32 %v4226, %v4534
        %v4597 = vmul.f32 %v4227, %v4539
        %v4598 = vmul.f32 %v4228, %v4544
        %v4599 = vmul.f32 %v4229, %v4549
        %v4600 = vmul.f32 %v4230, %v4554
        %v4601 = vmul.f32 %v4231, %v4559
        %v4602 = vmul.f32 %v4232, %v4564
        %v4603 = vmul.f32 %v4233, %v4569
        %v4604 = vmul.f32 %v4234, %v4574
        %v4605 = vmul.f32 %v4235, %v4579
        %v4606 = vmul.f32 %v4236, %v4584
        %v4607 = vmul.f32 %v4237, %v4589
        %v4608 = vld [vmem:[#allocation11] sm:$0x1]
        %v4610 = vsel %vm4061, %v4608, 0
        %v4613 = vsel %vm4061, %v4592, 0
        %v4616 = vsel %vm4061, %v4593, 0
        %v4619 = vsel %vm4061, %v4594, 0
        %v4622 = vsel %vm4061, %v4595, 0
        %v4625 = vsel %vm4061, %v4596, 0
        %v4628 = vsel %vm4061, %v4597, 0
        %v4631 = vsel %vm4061, %v4598, 0
        %v4634 = vsel %vm4061, %v4599, 0
        %v4637 = vsel %vm4061, %v4600, 0
        %v4640 = vsel %vm4061, %v4601, 0
        %v4643 = vsel %vm4061, %v4602, 0
        %v4646 = vsel %vm4061, %v4603, 0
        %v4649 = vsel %vm4061, %v4604, 0
        %v4652 = vsel %vm4061, %v4605, 0
        %v4655 = vsel %vm4061, %v4606, 0
        %v4658 = vsel %vm4061, %v4607, 0
        %4660 = vmatprep.subr.mxu0 0.0
        %4661 = vmatpush1.xpose.msra.mxu0 %v4658
        %4662 = vmatprep.subr.mxu0 0.0
        %4663 = vmatpush1.xpose.msra.mxu0 %v4655
        %4664 = vmatprep.subr.mxu0 0.0
        %4665 = vmatpush1.xpose.msra.mxu0 %v4652
        %4666 = vmatprep.subr.mxu0 0.0
        %4667 = vmatpush1.xpose.msra.mxu0 %v4649
        %4668 = vmatprep.subr.mxu0 0.0
        %4669 = vmatpush1.xpose.msra.mxu0 %v4646
        %4670 = vmatprep.subr.mxu0 0.0
        %4671 = vmatpush1.xpose.msra.mxu0 %v4643
        %4672 = vmatprep.subr.mxu0 0.0
        %4673 = vmatpush1.xpose.msra.mxu0 %v4640
        %4674 = vmatprep.subr.mxu0 0.0
        %4675 = vmatpush1.xpose.msra.mxu0 %v4637
        %4676 = vmatprep.subr.mxu0 0.0
        %4677 = vmatpush1.xpose.msra.mxu0 %v4634
        %4678 = vmatprep.subr.mxu0 0.0
        %4679 = vmatpush1.xpose.msra.mxu0 %v4631
        %4680 = vmatprep.subr.mxu0 0.0
        %4681 = vmatpush1.xpose.msra.mxu0 %v4628
        %4682 = vmatprep.subr.mxu0 0.0
        %4683 = vmatpush1.xpose.msra.mxu0 %v4625
        %4684 = vmatprep.subr.mxu0 0.0
        %4685 = vmatpush1.xpose.msra.mxu0 %v4622
        %4686 = vmatprep.subr.mxu0 0.0
        %4687 = vmatpush1.xpose.msra.mxu0 %v4619
        %4688 = vmatprep.subr.mxu0 0.0
        %4689 = vmatpush1.xpose.msra.mxu0 %v4616
        %4690 = vmatprep.subr.mxu0 0.0
        %4691 = vmatpush1.xpose.msra.mxu0 %v4613
        %4692 = vmatprep.subr.mxu0 0.0
        %4693 = vmatpush2.xpose.msra.mxu0 0.0
        %4694 = vmatprep.subr.mxu0 0.0
        %4695 = vmatpush2.xpose.msra.mxu0 0.0
        %4696 = vmatprep.subr.mxu0 0.0
        %4697 = vmatpush2.xpose.msra.mxu0 0.0
        %4698 = vmatprep.subr.mxu0 0.0
        %4699 = vmatpush2.xpose.msra.mxu0 0.0
        %4700 = vmatprep.subr.mxu0 0.0
        %4701 = vmatpush2.xpose.msra.mxu0 0.0
        %4702 = vmatprep.subr.mxu0 0.0
        %4703 = vmatpush2.xpose.msra.mxu0 0.0
        %4704 = vmatprep.subr.mxu0 0.0
        %4705 = vmatpush2.xpose.msra.mxu0 0.0
        %4706 = vmatprep.subr.mxu0 0.0
        %4707 = vmatpush2.xpose.msra.mxu0 0.0
        %4708 = vmatprep.subr.mxu0 0.0
        %4709 = vmatpush2.xpose.msra.mxu0 0.0
        %4710 = vmatprep.subr.mxu0 0.0
        %4711 = vmatpush2.xpose.msra.mxu0 0.0
        %4712 = vmatprep.subr.mxu0 0.0
        %4713 = vmatpush2.xpose.msra.mxu0 0.0
        %4714 = vmatprep.subr.mxu0 0.0
        %4715 = vmatpush2.xpose.msra.mxu0 0.0
        %4716 = vmatprep.subr.mxu0 0.0
        %4717 = vmatpush2.xpose.msra.mxu0 0.0
        %4718 = vmatprep.subr.mxu0 0.0
        %4719 = vmatpush2.xpose.msra.mxu0 0.0
        %4720 = vmatprep.subr.mxu0 0.0
        %4721 = vmatpush2.xpose.msra.mxu0 0.0
        %4722 = vmatprep.subr.mxu0 0.0
        %4723 = vmatpush2.xpose.msra.mxu0 0.0
        %4724 = vmatprep.mubr.f32.mxu0 0.0
        %4725 = vmatmul.mubr.f32.gmra.mxu0 %v4610
        %v4726 = vpop.f32.mrf.mxu0
        %v4727 = vadd.f32 0.0, %v4726
        %v4728 = vpop.f32.mrf.mxu0
        %4729 = vdwg.mxu0
        %v4730 = vld [vmem:[%s359] sm:$0x1]
        %v4731 = vadd.f32 %v4730, %v4727
        %v4732 = vxor.u32 %v4731, 2147483648
        %v4733 = vmul.f32 %v4732, 1.442695
        %v4734 = vpow.pop %v4733
        %v4735 = vadd.f32 %v4734, 1.0
        %v4736 = vrcp.pop %v4735
        %v4737 = vmul.f32 1.0, %v4736
        %4738 = vst [vmem:[%s410] sm:$0x1] %v4737
        %s4739 = sand.u32 %s216, 1
        %s4740 = scalar_lea.sflag [#allocation4], %s4739
        %s4741 = sand.u32 %s216, 1
        %s4742 = scalar_lea.vmem [#allocation13], %s4741
        // Predicated region
        $region77: #{tpu_custom_call.1} parent=51 // pred_check
          %p4743 = pneg %p226
        $region78: #{tpu_custom_call.1} parent=51 // pred_check_branch
          %4745 = sbr.rel (%p4743) target = $region80
        $region79: #{tpu_custom_call.1} parent=51 // pred_region
          %s4747 = ssub.s32 16, 16
          %4748 = vsyncadd %s4740, %s4747
          %s4749 = smul.addr %s30, 16
          %s4750 = scalar_lea.hbm %s8, %s4749
          %s4752 = sshll.u32 %s4742, 4
          %s4753 = int_to_ptr.vmem [resolvable:$true] %s4752
          %4755 = dma.vmem_to_hbm [thread:$0]  %s4753, 16, %s4750, %s4740
        $region80: #{tpu_custom_call.1} parent=51 // pred_fallthru
          _
      $region52: #{tpu_custom_call.1} parent=5 // pred_fallthru
        _
      %p4756 = scmp.le.s32.totalorder 2, %s25
      // Predicated region
      $region81: #{tpu_custom_call.1} parent=5 // pred_check
        %p4757 = pneg %p4756
      $region82: #{tpu_custom_call.1} parent=5 // pred_check_branch
        %4759 = sbr.rel (%p4757) target = $region84
      $region83: #{tpu_custom_call.1} parent=5 // pred_region
        %s4760 = ssub.s32 %s25, 2
        // Predicated region
        $region85: #{tpu_custom_call.1} parent=83 // pred_check
          %p4761 = pneg %p232
        $region86: #{tpu_custom_call.1} parent=83 // pred_check_branch
          %4763 = sbr.rel (%p4761) target = $region88
        $region87: #{tpu_custom_call.1} parent=83 // pred_region
          %s4764 = sand.u32 %s217, 1
          %s4765 = scalar_lea.sflag [#allocation4], %s4764
          %s4766 = sand.u32 %s217, 1
          %s4767 = scalar_lea.vmem [#allocation13], %s4766
          %4768 = dma.done %s4765, 16
        $region88: #{tpu_custom_call.1} parent=83 // pred_fallthru
          _
      $region84: #{tpu_custom_call.1} parent=5 // pred_fallthru
        _
    $region6: #{tpu_custom_call.1} parent=1 // loop_footer
      %s29 = sadd.s32 1, %s25
    $region7: #{tpu_custom_call.1} parent=1 // loop_footer_branch
      %24 = sbr.rel target = $region3
    $region8: #{tpu_custom_call.1} parent=1 // loop_exit
      _
    %4769 = vsyncpa [#allocation3], 1
    %s4770 = scalar_lea.sflag [#allocation3], 1
    %4771 = vsyncpa %s4770, 1
    %4772 = vsyncpa [#allocation6], 1
    %s4773 = scalar_lea.sflag [#allocation6], 1
    %4774 = vsyncpa %s4773, 1
    %4775 = vsyncpa [#allocation9], 1
    %4776 = vsyncpa [#allocation12], 1
    %4777 = vsyncpa [#allocation4], 1
    %s4778 = scalar_lea.sflag [#allocation4], 1
    %4779 = vsyncpa %s4778, 1

</llo_original>
